<compile_context>
chip_gen: v7x
topology: tpu7x:2x2x1
jax: 0.10.0
libtpu: 0.0.40
codegen_flags: <defaults>
</compile_context>

<pallas_src>
import functools

import jax
import jax.numpy as jnp
from jax import lax
from jax.experimental import pallas as pl
from jax.experimental.pallas import tpu as pltpu


# ----------------------------------------------------------------------------
# Fused kernel: atrous conv (im2col + one MXU matmul) + train-mode BN + ReLU,
# all in a single grid step.
# ----------------------------------------------------------------------------
def _fused_aspp_kernel(x_ref, w_ref, g_ref, bt_ref, o_ref, *,
                       kh_size, kw_size, dilation, ho, wo, eps):
    # x_ref  : (N, Hp, Wp, Cin)    zero-padded input (f32)
    # w_ref  : (KH*KW*Cin, Cpad)   weights, Cout zero-padded to 128 lanes (bf16)
    # g_ref  : (1, Cpad)           BN gamma (padded lanes are 0)
    # bt_ref : (1, Cpad)           BN beta  (padded lanes are 0)
    # o_ref  : (M=N*Ho*Wo, Cpad)   normalized + ReLU'd output (f32)
    n = x_ref.shape[0]
    cin = x_ref.shape[3]
    m = n * ho * wo

    # im2col: gather the KH*KW dilated taps.  Each tap is a full (N,Ho,Wo,Cin)
    # slab; concatenating along the channel axis keeps the K index ordered as
    # (kh*KW + kw)*Cin + ci, matching the weight matrix layout.
    taps = []
    for kh in range(kh_size):
        r0 = kh * dilation
        for kw in range(kw_size):
            c0 = kw * dilation
            taps.append(x_ref[:, r0:r0 + ho, c0:c0 + wo, :])   # (N, Ho, Wo, Cin)
    im2col = jnp.concatenate(taps, axis=3)                     # (N, Ho, Wo, K)
    im2col = im2col.reshape(m, kh_size * kw_size * cin)        # (M, K)

    # One MXU contraction: bf16 operands, f32 accumulation.
    acc = jnp.dot(im2col.astype(jnp.bfloat16), w_ref[...],
                  preferred_element_type=jnp.float32)          # (M, Cpad)

    # Train-mode BatchNorm2d statistics over the whole batch (single grid
    # step -> no cross-step accumulation needed).  Centered variance avoids
    # E[y^2]-E[y]^2 cancellation.  The conv bias cancels exactly here:
    # (acc + b) - mean(acc + b) == acc - mean(acc), so it never enters.
    inv_m = 1.0 / m
    mean = jnp.sum(acc, axis=0, keepdims=True) * inv_m         # (1, Cpad)
    diff = acc - mean
    var = jnp.sum(diff * diff, axis=0, keepdims=True) * inv_m  # biased (train BN)
    scale = g_ref[...] * lax.rsqrt(var + eps)                  # (1, Cpad)

    # Normalize + ReLU, stored as one lane-dense (M, 128) slab.
    o_ref[...] = jnp.maximum(diff * scale + bt_ref[...], 0.0)


def _layout_padded_bytes(shape, dtype):
    """Rough VMEM footprint of an array after (8, 128) tiling."""
    shape = tuple(shape)
    if len(shape) < 2:
        shape = (1,) * (2 - len(shape)) + shape
    lead = 1
    for d in shape[:-2]:
        lead *= int(d)
    sub = -(-int(shape[-2]) // 8) * 8
    lane = -(-int(shape[-1]) // 128) * 128
    return lead * sub * lane * jnp.dtype(dtype).itemsize


# ----------------------------------------------------------------------------
# Wrapper: layout conversion, zero padding, channel padding (glue only).
# ----------------------------------------------------------------------------
def aspp_forward(x_nchw, w_oihw, bias, gamma, beta, *, padding, dilation,
                 eps=1e-5):
    # `bias` is accepted for API fidelity but cancels exactly under
    # train-mode BatchNorm (it shifts y and its batch mean identically).
    del bias
    n, cin, h, w = x_nchw.shape
    cout, _, kh, kw = w_oihw.shape
    ho = h + 2 * padding - dilation * (kh - 1)
    wo = w + 2 * padding - dilation * (kw - 1)
    assert ho > 0 and wo > 0
    m = n * ho * wo

    lane = 128
    cpad = ((cout + lane - 1) // lane) * lane    # lane-dense output channels

    # NCHW -> NHWC + zero spatial padding (matches Conv2d zero padding).
    x_nhwc = jnp.transpose(x_nchw, (0, 2, 3, 1)).astype(jnp.float32)
    x_pad = jnp.pad(x_nhwc, ((0, 0), (padding, padding),
                             (padding, padding), (0, 0)))
    hp, wp = x_pad.shape[1], x_pad.shape[2]

    # OIHW -> (KH*KW*Cin, Cout) with K index = (kh*KW + kw)*Cin + ci,
    # Cout padded to a full lane width, stored bf16 for the MXU.
    w_mat = jnp.transpose(w_oihw, (2, 3, 1, 0)).reshape(kh * kw * cin, cout)
    w_mat = jnp.pad(w_mat, ((0, 0), (0, cpad - cout))).astype(jnp.bfloat16)

    def pad_c(v):
        return jnp.pad(v.astype(jnp.float32), (0, cpad - cout)).reshape(1, cpad)

    gamma_p, beta_p = pad_c(gamma), pad_c(beta)

    # Proportional scoped-VMEM budget: operands (x2 for double buffering),
    # the output (x2), plus ~2x output-sized in-kernel intermediates
    # (im2col / acc), then 2x headroom, clamped to [4 MiB, 64 MiB].
    operand_bytes = (_layout_padded_bytes(x_pad.shape, jnp.float32)
                     + _layout_padded_bytes(w_mat.shape, jnp.bfloat16)
                     + 2 * _layout_padded_bytes((1, cpad), jnp.float32))
    out_bytes = _layout_padded_bytes((m, cpad), jnp.float32)
    budget = 2 * operand_bytes + 2 * out_bytes + 2 * out_bytes
    vmem_limit = int(min(max(2 * budget, 4 * 1024 * 1024), 64 * 1024 * 1024))

    kernel = functools.partial(
        _fused_aspp_kernel, kh_size=kh, kw_size=kw, dilation=dilation,
        ho=ho, wo=wo, eps=eps)

    out_flat = pl.pallas_call(
        kernel,
        out_shape=jax.ShapeDtypeStruct((m, cpad), jnp.float32),
        grid=(1,),                                 # overhead-bound: one step
        in_specs=[
            pl.BlockSpec((n, hp, wp, cin), lambda i: (0, 0, 0, 0)),
            pl.BlockSpec((kh * kw * cin, cpad), lambda i: (0, 0)),
            pl.BlockSpec((1, cpad), lambda i: (0, 0)),
            pl.BlockSpec((1, cpad), lambda i: (0, 0)),
        ],
        out_specs=pl.BlockSpec((m, cpad), lambda i: (0, 0)),
        compiler_params=pltpu.CompilerParams(
            dimension_semantics=("arbitrary",),
            vmem_limit_bytes=vmem_limit,
        ),
    )(x_pad, w_mat, gamma_p, beta_p)

    out_nhwc = out_flat.reshape(n, ho, wo, cpad)[..., :cout]   # drop pad lanes
    return jnp.transpose(out_nhwc, (0, 3, 1, 2))               # NHWC -> NCHW


# ----------------------------------------------------------------------------
# Pure-JAX f32 reference (lax conv + train-mode BN + ReLU).
# ----------------------------------------------------------------------------
def aspp_reference(x_nchw, w_oihw, bias, gamma, beta, *, padding, dilation,
                   eps=1e-5):
    y = lax.conv_general_dilated(
        x_nchw, w_oihw, window_strides=(1, 1),
        padding=[(padding, padding), (padding, padding)],
        rhs_dilation=(dilation, dilation),
        dimension_numbers=("NCHW", "OIHW", "NCHW"))
    y = y + bias.reshape(1, -1, 1, 1)
    mean = jnp.mean(y, axis=(0, 2, 3), keepdims=True)
    var = jnp.mean((y - mean) ** 2, axis=(0, 2, 3), keepdims=True)
    yn = (y - mean) * lax.rsqrt(var + eps)
    yn = yn * gamma.reshape(1, -1, 1, 1) + beta.reshape(1, -1, 1, 1)
    return jnp.maximum(yn, 0.0)


if __name__ == "__main__":
    # Small shapes consistent with _aspp_module(in=4, out=8, k=3, pad=2, dil=2).
    N, C_IN, H, W = 2, 4, 16, 16
    C_OUT, K, PAD, DIL = 8, 3, 2, 2

    key = jax.random.PRNGKey(0)
    kx, kw_, kb, kg, kbt = jax.random.split(key, 5)

    x = jax.random.normal(kx, (N, C_IN, H, W), jnp.float32)
    weight = jax.random.normal(kw_, (C_OUT, C_IN, K, K), jnp.float32) * 0.1
    bias = jax.random.normal(kb, (C_OUT,), jnp.float32) * 0.1
    gamma = 1.0 + 0.1 * jax.random.normal(kg, (C_OUT,), jnp.float32)
    beta = 0.1 * jax.random.normal(kbt, (C_OUT,), jnp.float32)

    out = aspp_forward(x, weight, bias, gamma, beta, padding=PAD, dilation=DIL)
    out = jax.block_until_ready(out)

    ref = aspp_reference(x, weight, bias, gamma, beta, padding=PAD, dilation=DIL)
    assert out.shape == ref.shape == (N, C_OUT, H, W)
    # bf16 MXU operands (f32 accumulation) -> loosened tolerance vs f32 ref.
    max_err = float(jnp.max(jnp.abs(out - ref)))
    assert max_err < 2e-2, f"mismatch vs reference: {max_err}"

    print("KERNEL_OK")
</pallas_src>

<mosaic_0001>
module attributes {stable_mosaic.version = 11 : i64} {
  func.func @_fused_aspp_kernel(%arg0: i32, %arg1: memref<2x20x20x4xf32, #tpu.memory_space<vmem>>, %arg2: memref<36x128xbf16, #tpu.memory_space<vmem>>, %arg3: memref<1x128xf32, #tpu.memory_space<vmem>>, %arg4: memref<1x128xf32, #tpu.memory_space<vmem>>, %arg5: memref<512x128xf32, #tpu.memory_space<vmem>>) attributes {dimension_semantics = [#tpu.dimension_semantics<arbitrary>], iteration_bounds = array<i64: 1>, scalar_prefetch = 0 : i64, scratch_operands = 0 : i64, tpu.core_type = #tpu.core_type<tc>, window_params = [{pipeline_mode = #tpu.pipeline_mode<synchronous>, transform_indices = @transform_0, window_bounds = array<i64: 2, 20, 20, 4>}, {pipeline_mode = #tpu.pipeline_mode<synchronous>, transform_indices = @transform_1, window_bounds = array<i64: 36, 128>}, {pipeline_mode = #tpu.pipeline_mode<synchronous>, transform_indices = @transform_2, window_bounds = array<i64: 1, 128>}, {pipeline_mode = #tpu.pipeline_mode<synchronous>, transform_indices = @transform_3, window_bounds = array<i64: 1, 128>}, {pipeline_mode = #tpu.pipeline_mode<synchronous>, transform_indices = @transform_4, window_bounds = array<i64: 512, 128>}]} {
    %c0 = arith.constant 0 : index
    %c0_0 = arith.constant 0 : index
    %c0_1 = arith.constant 0 : index
    %c0_2 = arith.constant 0 : index
    %0 = vector.load %arg1[%c0, %c0_0, %c0_1, %c0_2] : memref<2x20x20x4xf32, #tpu.memory_space<vmem>>, vector<2x16x16x4xf32>
    %c0_3 = arith.constant 0 : index
    %c0_4 = arith.constant 0 : index
    %c2 = arith.constant 2 : index
    %c0_5 = arith.constant 0 : index
    %1 = vector.load %arg1[%c0_3, %c0_4, %c2, %c0_5] : memref<2x20x20x4xf32, #tpu.memory_space<vmem>>, vector<2x16x16x4xf32>
    %c0_6 = arith.constant 0 : index
    %c0_7 = arith.constant 0 : index
    %c4 = arith.constant 4 : index
    %c0_8 = arith.constant 0 : index
    %2 = vector.load %arg1[%c0_6, %c0_7, %c4, %c0_8] : memref<2x20x20x4xf32, #tpu.memory_space<vmem>>, vector<2x16x16x4xf32>
    %c0_9 = arith.constant 0 : index
    %c2_10 = arith.constant 2 : index
    %c0_11 = arith.constant 0 : index
    %c0_12 = arith.constant 0 : index
    %3 = vector.load %arg1[%c0_9, %c2_10, %c0_11, %c0_12] : memref<2x20x20x4xf32, #tpu.memory_space<vmem>>, vector<2x16x16x4xf32>
    %c0_13 = arith.constant 0 : index
    %c2_14 = arith.constant 2 : index
    %c2_15 = arith.constant 2 : index
    %c0_16 = arith.constant 0 : index
    %4 = vector.load %arg1[%c0_13, %c2_14, %c2_15, %c0_16] : memref<2x20x20x4xf32, #tpu.memory_space<vmem>>, vector<2x16x16x4xf32>
    %c0_17 = arith.constant 0 : index
    %c2_18 = arith.constant 2 : index
    %c4_19 = arith.constant 4 : index
    %c0_20 = arith.constant 0 : index
    %5 = vector.load %arg1[%c0_17, %c2_18, %c4_19, %c0_20] : memref<2x20x20x4xf32, #tpu.memory_space<vmem>>, vector<2x16x16x4xf32>
    %c0_21 = arith.constant 0 : index
    %c4_22 = arith.constant 4 : index
    %c0_23 = arith.constant 0 : index
    %c0_24 = arith.constant 0 : index
    %6 = vector.load %arg1[%c0_21, %c4_22, %c0_23, %c0_24] : memref<2x20x20x4xf32, #tpu.memory_space<vmem>>, vector<2x16x16x4xf32>
    %c0_25 = arith.constant 0 : index
    %c4_26 = arith.constant 4 : index
    %c2_27 = arith.constant 2 : index
    %c0_28 = arith.constant 0 : index
    %7 = vector.load %arg1[%c0_25, %c4_26, %c2_27, %c0_28] : memref<2x20x20x4xf32, #tpu.memory_space<vmem>>, vector<2x16x16x4xf32>
    %c0_29 = arith.constant 0 : index
    %c4_30 = arith.constant 4 : index
    %c4_31 = arith.constant 4 : index
    %c0_32 = arith.constant 0 : index
    %8 = vector.load %arg1[%c0_29, %c4_30, %c4_31, %c0_32] : memref<2x20x20x4xf32, #tpu.memory_space<vmem>>, vector<2x16x16x4xf32>
    %9 = tpu.concatenate %0, %1, %2, %3, %4, %5, %6, %7, %8 in 3 : vector<2x16x16x4xf32>, vector<2x16x16x4xf32>, vector<2x16x16x4xf32>, vector<2x16x16x4xf32>, vector<2x16x16x4xf32>, vector<2x16x16x4xf32>, vector<2x16x16x4xf32>, vector<2x16x16x4xf32>, vector<2x16x16x4xf32> -> vector<2x16x16x36xf32>
    %10 = vector.shape_cast %9 : vector<2x16x16x36xf32> to vector<512x36xf32>
    %11 = arith.truncf %10 : vector<512x36xf32> to vector<512x36xbf16>
    %c0_33 = arith.constant 0 : index
    %c0_34 = arith.constant 0 : index
    %12 = vector.load %arg2[%c0_33, %c0_34] : memref<36x128xbf16, #tpu.memory_space<vmem>>, vector<36x128xbf16>
    %cst = arith.constant dense<0.000000e+00> : vector<512x128xf32>
    %13 = tpu.matmul %11, %12, %cst {dimension_numbers = #tpu.dot_dimension_numbers<[1], [0], [0], [1], [0, 0, 1, 1], [], []>} : vector<512x36xbf16>, vector<36x128xbf16>, vector<512x128xf32> -> vector<512x128xf32>
    %cst_35 = arith.constant dense<0.000000e+00> : vector<128xf32>
    %14 = vector.multi_reduction <add>, %13, %cst_35 [0] : vector<512x128xf32> to vector<128xf32>
    %15 = vector.shape_cast %14 : vector<128xf32> to vector<1x128xf32>
    %cst_36 = arith.constant 0.001953125 : f32
    %16 = vector.broadcast %cst_36 : f32 to vector<1x128xf32>
    %17 = arith.mulf %15, %16 : vector<1x128xf32>
    %18 = vector.broadcast %17 : vector<1x128xf32> to vector<512x128xf32>
    %19 = arith.subf %13, %18 : vector<512x128xf32>
    %20 = arith.mulf %19, %19 : vector<512x128xf32>
    %cst_37 = arith.constant dense<0.000000e+00> : vector<128xf32>
    %21 = vector.multi_reduction <add>, %20, %cst_37 [0] : vector<512x128xf32> to vector<128xf32>
    %22 = vector.shape_cast %21 : vector<128xf32> to vector<1x128xf32>
    %cst_38 = arith.constant 0.001953125 : f32
    %23 = vector.broadcast %cst_38 : f32 to vector<1x128xf32>
    %24 = arith.mulf %22, %23 : vector<1x128xf32>
    %c0_39 = arith.constant 0 : index
    %c0_40 = arith.constant 0 : index
    %25 = vector.load %arg3[%c0_39, %c0_40] : memref<1x128xf32, #tpu.memory_space<vmem>>, vector<1x128xf32>
    %cst_41 = arith.constant 9.99999974E-6 : f32
    %26 = vector.broadcast %cst_41 : f32 to vector<1x128xf32>
    %27 = arith.addf %24, %26 : vector<1x128xf32>
    %28 = math.rsqrt %27 : vector<1x128xf32>
    %29 = arith.mulf %25, %28 : vector<1x128xf32>
    %30 = vector.broadcast %29 : vector<1x128xf32> to vector<512x128xf32>
    %31 = arith.mulf %19, %30 : vector<512x128xf32>
    %c0_42 = arith.constant 0 : index
    %c0_43 = arith.constant 0 : index
    %32 = vector.load %arg4[%c0_42, %c0_43] : memref<1x128xf32, #tpu.memory_space<vmem>>, vector<1x128xf32>
    %33 = vector.broadcast %32 : vector<1x128xf32> to vector<512x128xf32>
    %34 = arith.addf %31, %33 : vector<512x128xf32>
    %cst_44 = arith.constant 0.000000e+00 : f32
    %35 = vector.broadcast %cst_44 : f32 to vector<512x128xf32>
    %36 = arith.maximumf %34, %35 : vector<512x128xf32>
    %c0_45 = arith.constant 0 : index
    %c0_46 = arith.constant 0 : index
    %37 = vector.load %arg5[%c0_45, %c0_46] : memref<512x128xf32, #tpu.memory_space<vmem>>, vector<512x128xf32>
    tpu.vector_store %arg5[%c0_45, %c0_46], %36 {strides = array<i32>} : memref<512x128xf32, #tpu.memory_space<vmem>>, vector<512x128xf32>,
    return
  }
  func.func @transform_0(%arg0: i32) -> (i32, i32, i32, i32) {
    %c0_i32 = arith.constant 0 : i32
    %c0_i32_0 = arith.constant 0 : i32
    %c0_i32_1 = arith.constant 0 : i32
    %c0_i32_2 = arith.constant 0 : i32
    %c0_i32_3 = arith.constant 0 : i32
    return %c0_i32, %c0_i32_0, %c0_i32_1, %c0_i32_2 : i32, i32, i32, i32
  }
  func.func @transform_1(%arg0: i32) -> (i32, i32) {
    %c0_i32 = arith.constant 0 : i32
    %c0_i32_0 = arith.constant 0 : i32
    %c0_i32_1 = arith.constant 0 : i32
    return %c0_i32, %c0_i32_0 : i32, i32
  }
  func.func @transform_2(%arg0: i32) -> (i32, i32) {
    %c0_i32 = arith.constant 0 : i32
    %c0_i32_0 = arith.constant 0 : i32
    %c0_i32_1 = arith.constant 0 : i32
    return %c0_i32, %c0_i32_0 : i32, i32
  }
  func.func @transform_3(%arg0: i32) -> (i32, i32) {
    %c0_i32 = arith.constant 0 : i32
    %c0_i32_0 = arith.constant 0 : i32
    %c0_i32_1 = arith.constant 0 : i32
    return %c0_i32, %c0_i32_0 : i32, i32
  }
  func.func @transform_4(%arg0: i32) -> (i32, i32) {
    %c0_i32 = arith.constant 0 : i32
    %c0_i32_0 = arith.constant 0 : i32
    %c0_i32_1 = arith.constant 0 : i32
    return %c0_i32, %c0_i32_0 : i32, i32
  }
}

</mosaic_0001>

<llo_original>
// kernel: tpu_custom_call.1
$region0: #{tpu_custom_call.1}
  #allocation0 [shape = 'u32[]', space=smem, size = 0x4, offset = 0x4, fixed_abs, tag = 'smem constant byte address 0x4 - core index']
  #allocation1 [shape = 'u32[144,128]{1,0:T(1,128)}', space=vmem, size = 0x12000, scoped, tag = 'internal scratch']
  %s0 = inlined_call_operand.vmem [shape: f32[2,20,20,4], index: 0, kind: input, shape index: {}]
  %s1 = inlined_call_operand.vmem [shape: bf16[36,128], index: 1, kind: input, shape index: {}]
  %s2 = inlined_call_operand.vmem [shape: f32[1,128], index: 2, kind: input, shape index: {}]
  %s3 = inlined_call_operand.vmem [shape: f32[1,128], index: 3, kind: input, shape index: {}]
  %s4 = inlined_call_operand.hbm [shape: f32[512,128], index: 4, kind: output, shape index: {}]
  %s5 = sld [smem:[#allocation0]]
  $region26: #{tpu_custom_call.1} parent=0
    _
  %s7 = ssub.s32 1, %s5
  %s8 = scalar_select 0, %s7, %s5
  $region1: #{tpu_custom_call.1} parent=0
    #allocation2 [shape = 'u8[262144]{0}', space=vmem, size = 0x40000, scoped, tag = 'output window, operand 0, single buffered']
    #allocation3 [shape = 's32[1]{0}', space=sflag, size = 0x4, scoped, tag = 'scoped memory for tpu_custom_call.1']
    %9 = vsyncpa [#allocation3], 0
    // Predicated region
    $region2: #{tpu_custom_call.1} parent=1 // pred_check
      _
    $region3: #{tpu_custom_call.1} parent=1 // pred_check_branch
      %11 = sbr.rel (0) target = $region5
    $region4: #{tpu_custom_call.1} parent=1 // pred_region
      _
    $region5: #{tpu_custom_call.1} parent=1 // pred_fallthru
      _
    // Predicated region
    $region6: #{tpu_custom_call.1} parent=1 // pred_check
      _
    $region7: #{tpu_custom_call.1} parent=1 // pred_check_branch
      %13 = sbr.rel (0) target = $region9
    $region8: #{tpu_custom_call.1} parent=1 // pred_region
      _
    $region9: #{tpu_custom_call.1} parent=1 // pred_fallthru
      _
    // Predicated region
    $region10: #{tpu_custom_call.1} parent=1 // pred_check
      _
    $region11: #{tpu_custom_call.1} parent=1 // pred_check_branch
      %15 = sbr.rel (0) target = $region13
    $region12: #{tpu_custom_call.1} parent=1 // pred_region
      _
    $region13: #{tpu_custom_call.1} parent=1 // pred_fallthru
      _
    // Predicated region
    $region14: #{tpu_custom_call.1} parent=1 // pred_check
      _
    $region15: #{tpu_custom_call.1} parent=1 // pred_check_branch
      %17 = sbr.rel (0) target = $region17
    $region16: #{tpu_custom_call.1} parent=1 // pred_region
      _
    $region17: #{tpu_custom_call.1} parent=1 // pred_fallthru
      _
    %v19 = vld [vmem:[%s0] sm:$0xff]
    %v20 = vld [vmem:[%s0 + $0x8] sm:$0xff]
    %v21 = vld [vmem:[%s0 + $0x18] sm:$0xff]
    %v22 = vld [vmem:[%s0 + $0x20] sm:$0xff]
    %v23 = vld [vmem:[%s0 + $0x30] sm:$0xff]
    %v24 = vld [vmem:[%s0 + $0x38] sm:$0xff]
    %v25 = vld [vmem:[%s0 + $0x48] sm:$0xff]
    %v26 = vld [vmem:[%s0 + $0x50] sm:$0xff]
    %v27 = vld [vmem:[%s0 + $0x60] sm:$0xff]
    %v28 = vld [vmem:[%s0 + $0x68] sm:$0xff]
    %v29 = vld [vmem:[%s0 + $0x78] sm:$0xff]
    %v30 = vld [vmem:[%s0 + $0x80] sm:$0xff]
    %v31 = vld [vmem:[%s0 + $0x90] sm:$0xff]
    %v32 = vld [vmem:[%s0 + $0x98] sm:$0xff]
    %v33 = vld [vmem:[%s0 + $0xa8] sm:$0xff]
    %v34 = vld [vmem:[%s0 + $0xb0] sm:$0xff]
    %v35 = vld [vmem:[%s0 + $0xc0] sm:$0xff]
    %v36 = vld [vmem:[%s0 + $0xc8] sm:$0xff]
    %v37 = vld [vmem:[%s0 + $0xd8] sm:$0xff]
    %v38 = vld [vmem:[%s0 + $0xe0] sm:$0xff]
    %v39 = vld [vmem:[%s0 + $0xf0] sm:$0xff]
    %v40 = vld [vmem:[%s0 + $0xf8] sm:$0xff]
    %v41 = vld [vmem:[%s0 + $0x108] sm:$0xff]
    %v42 = vld [vmem:[%s0 + $0x110] sm:$0xff]
    %v43 = vld [vmem:[%s0 + $0x120] sm:$0xff]
    %v44 = vld [vmem:[%s0 + $0x128] sm:$0xff]
    %v45 = vld [vmem:[%s0 + $0x138] sm:$0xff]
    %v46 = vld [vmem:[%s0 + $0x140] sm:$0xff]
    %v47 = vld [vmem:[%s0 + $0x150] sm:$0xff]
    %v48 = vld [vmem:[%s0 + $0x158] sm:$0xff]
    %v49 = vld [vmem:[%s0 + $0x168] sm:$0xff]
    %v50 = vld [vmem:[%s0 + $0x170] sm:$0xff]
    %v51 = vld [vmem:[%s0 + $0x1e0] sm:$0xff]
    %v52 = vld [vmem:[%s0 + $0x1e8] sm:$0xff]
    %v53 = vld [vmem:[%s0 + $0x1f8] sm:$0xff]
    %v54 = vld [vmem:[%s0 + $0x200] sm:$0xff]
    %v55 = vld [vmem:[%s0 + $0x210] sm:$0xff]
    %v56 = vld [vmem:[%s0 + $0x218] sm:$0xff]
    %v57 = vld [vmem:[%s0 + $0x228] sm:$0xff]
    %v58 = vld [vmem:[%s0 + $0x230] sm:$0xff]
    %v59 = vld [vmem:[%s0 + $0x240] sm:$0xff]
    %v60 = vld [vmem:[%s0 + $0x248] sm:$0xff]
    %v61 = vld [vmem:[%s0 + $0x258] sm:$0xff]
    %v62 = vld [vmem:[%s0 + $0x260] sm:$0xff]
    %v63 = vld [vmem:[%s0 + $0x270] sm:$0xff]
    %v64 = vld [vmem:[%s0 + $0x278] sm:$0xff]
    %v65 = vld [vmem:[%s0 + $0x288] sm:$0xff]
    %v66 = vld [vmem:[%s0 + $0x290] sm:$0xff]
    %v67 = vld [vmem:[%s0 + $0x2a0] sm:$0xff]
    %v68 = vld [vmem:[%s0 + $0x2a8] sm:$0xff]
    %v69 = vld [vmem:[%s0 + $0x2b8] sm:$0xff]
    %v70 = vld [vmem:[%s0 + $0x2c0] sm:$0xff]
    %v71 = vld [vmem:[%s0 + $0x2d0] sm:$0xff]
    %v72 = vld [vmem:[%s0 + $0x2d8] sm:$0xff]
    %v73 = vld [vmem:[%s0 + $0x2e8] sm:$0xff]
    %v74 = vld [vmem:[%s0 + $0x2f0] sm:$0xff]
    %v75 = vld [vmem:[%s0 + $0x300] sm:$0xff]
    %v76 = vld [vmem:[%s0 + $0x308] sm:$0xff]
    %v77 = vld [vmem:[%s0 + $0x318] sm:$0xff]
    %v78 = vld [vmem:[%s0 + $0x320] sm:$0xff]
    %v79 = vld [vmem:[%s0 + $0x330] sm:$0xff]
    %v80 = vld [vmem:[%s0 + $0x338] sm:$0xff]
    %v81 = vld [vmem:[%s0 + $0x348] sm:$0xff]
    %v82 = vld [vmem:[%s0 + $0x350] sm:$0xff]
    %v83 = vld [vmem:[%s0 + $0x2] sm:$0xff]
    %v84 = vld [vmem:[%s0 + $0xa] sm:$0xff]
    %v85 = vld [vmem:[%s0 + $0x1a] sm:$0xff]
    %v86 = vld [vmem:[%s0 + $0x22] sm:$0xff]
    %v87 = vld [vmem:[%s0 + $0x32] sm:$0xff]
    %v88 = vld [vmem:[%s0 + $0x3a] sm:$0xff]
    %v89 = vld [vmem:[%s0 + $0x4a] sm:$0xff]
    %v90 = vld [vmem:[%s0 + $0x52] sm:$0xff]
    %v91 = vld [vmem:[%s0 + $0x62] sm:$0xff]
    %v92 = vld [vmem:[%s0 + $0x6a] sm:$0xff]
    %v93 = vld [vmem:[%s0 + $0x7a] sm:$0xff]
    %v94 = vld [vmem:[%s0 + $0x82] sm:$0xff]
    %v95 = vld [vmem:[%s0 + $0x92] sm:$0xff]
    %v96 = vld [vmem:[%s0 + $0x9a] sm:$0xff]
    %v97 = vld [vmem:[%s0 + $0xaa] sm:$0xff]
    %v98 = vld [vmem:[%s0 + $0xb2] sm:$0xff]
    %v99 = vld [vmem:[%s0 + $0xc2] sm:$0xff]
    %v100 = vld [vmem:[%s0 + $0xca] sm:$0xff]
    %v101 = vld [vmem:[%s0 + $0xda] sm:$0xff]
    %v102 = vld [vmem:[%s0 + $0xe2] sm:$0xff]
    %v103 = vld [vmem:[%s0 + $0xf2] sm:$0xff]
    %v104 = vld [vmem:[%s0 + $0xfa] sm:$0xff]
    %v105 = vld [vmem:[%s0 + $0x10a] sm:$0xff]
    %v106 = vld [vmem:[%s0 + $0x112] sm:$0xff]
    %v107 = vld [vmem:[%s0 + $0x122] sm:$0xff]
    %v108 = vld [vmem:[%s0 + $0x12a] sm:$0xff]
    %v109 = vld [vmem:[%s0 + $0x13a] sm:$0xff]
    %v110 = vld [vmem:[%s0 + $0x142] sm:$0xff]
    %v111 = vld [vmem:[%s0 + $0x152] sm:$0xff]
    %v112 = vld [vmem:[%s0 + $0x15a] sm:$0xff]
    %v113 = vld [vmem:[%s0 + $0x16a] sm:$0xff]
    %v114 = vld [vmem:[%s0 + $0x172] sm:$0xff]
    %v115 = vld [vmem:[%s0 + $0x1e2] sm:$0xff]
    %v116 = vld [vmem:[%s0 + $0x1ea] sm:$0xff]
    %v117 = vld [vmem:[%s0 + $0x1fa] sm:$0xff]
    %v118 = vld [vmem:[%s0 + $0x202] sm:$0xff]
    %v119 = vld [vmem:[%s0 + $0x212] sm:$0xff]
    %v120 = vld [vmem:[%s0 + $0x21a] sm:$0xff]
    %v121 = vld [vmem:[%s0 + $0x22a] sm:$0xff]
    %v122 = vld [vmem:[%s0 + $0x232] sm:$0xff]
    %v123 = vld [vmem:[%s0 + $0x242] sm:$0xff]
    %v124 = vld [vmem:[%s0 + $0x24a] sm:$0xff]
    %v125 = vld [vmem:[%s0 + $0x25a] sm:$0xff]
    %v126 = vld [vmem:[%s0 + $0x262] sm:$0xff]
    %v127 = vld [vmem:[%s0 + $0x272] sm:$0xff]
    %v128 = vld [vmem:[%s0 + $0x27a] sm:$0xff]
    %v129 = vld [vmem:[%s0 + $0x28a] sm:$0xff]
    %v130 = vld [vmem:[%s0 + $0x292] sm:$0xff]
    %v131 = vld [vmem:[%s0 + $0x2a2] sm:$0xff]
    %v132 = vld [vmem:[%s0 + $0x2aa] sm:$0xff]
    %v133 = vld [vmem:[%s0 + $0x2ba] sm:$0xff]
    %v134 = vld [vmem:[%s0 + $0x2c2] sm:$0xff]
    %v135 = vld [vmem:[%s0 + $0x2d2] sm:$0xff]
    %v136 = vld [vmem:[%s0 + $0x2da] sm:$0xff]
    %v137 = vld [vmem:[%s0 + $0x2ea] sm:$0xff]
    %v138 = vld [vmem:[%s0 + $0x2f2] sm:$0xff]
    %v139 = vld [vmem:[%s0 + $0x302] sm:$0xff]
    %v140 = vld [vmem:[%s0 + $0x30a] sm:$0xff]
    %v141 = vld [vmem:[%s0 + $0x31a] sm:$0xff]
    %v142 = vld [vmem:[%s0 + $0x322] sm:$0xff]
    %v143 = vld [vmem:[%s0 + $0x332] sm:$0xff]
    %v144 = vld [vmem:[%s0 + $0x33a] sm:$0xff]
    %v145 = vld [vmem:[%s0 + $0x34a] sm:$0xff]
    %v146 = vld [vmem:[%s0 + $0x352] sm:$0xff]
    %v147 = vld [vmem:[%s0 + $0x4] sm:$0xff]
    %v148 = vld [vmem:[%s0 + $0xc] sm:$0xff]
    %v149 = vld [vmem:[%s0 + $0x1c] sm:$0xff]
    %v150 = vld [vmem:[%s0 + $0x24] sm:$0xff]
    %v151 = vld [vmem:[%s0 + $0x34] sm:$0xff]
    %v152 = vld [vmem:[%s0 + $0x3c] sm:$0xff]
    %v153 = vld [vmem:[%s0 + $0x4c] sm:$0xff]
    %v154 = vld [vmem:[%s0 + $0x54] sm:$0xff]
    %v155 = vld [vmem:[%s0 + $0x64] sm:$0xff]
    %v156 = vld [vmem:[%s0 + $0x6c] sm:$0xff]
    %v157 = vld [vmem:[%s0 + $0x7c] sm:$0xff]
    %v158 = vld [vmem:[%s0 + $0x84] sm:$0xff]
    %v159 = vld [vmem:[%s0 + $0x94] sm:$0xff]
    %v160 = vld [vmem:[%s0 + $0x9c] sm:$0xff]
    %v161 = vld [vmem:[%s0 + $0xac] sm:$0xff]
    %v162 = vld [vmem:[%s0 + $0xb4] sm:$0xff]
    %v163 = vld [vmem:[%s0 + $0xc4] sm:$0xff]
    %v164 = vld [vmem:[%s0 + $0xcc] sm:$0xff]
    %v165 = vld [vmem:[%s0 + $0xdc] sm:$0xff]
    %v166 = vld [vmem:[%s0 + $0xe4] sm:$0xff]
    %v167 = vld [vmem:[%s0 + $0xf4] sm:$0xff]
    %v168 = vld [vmem:[%s0 + $0xfc] sm:$0xff]
    %v169 = vld [vmem:[%s0 + $0x10c] sm:$0xff]
    %v170 = vld [vmem:[%s0 + $0x114] sm:$0xff]
    %v171 = vld [vmem:[%s0 + $0x124] sm:$0xff]
    %v172 = vld [vmem:[%s0 + $0x12c] sm:$0xff]
    %v173 = vld [vmem:[%s0 + $0x13c] sm:$0xff]
    %v174 = vld [vmem:[%s0 + $0x144] sm:$0xff]
    %v175 = vld [vmem:[%s0 + $0x154] sm:$0xff]
    %v176 = vld [vmem:[%s0 + $0x15c] sm:$0xff]
    %v177 = vld [vmem:[%s0 + $0x16c] sm:$0xff]
    %v178 = vld [vmem:[%s0 + $0x174] sm:$0xff]
    %v179 = vld [vmem:[%s0 + $0x1e4] sm:$0xff]
    %v180 = vld [vmem:[%s0 + $0x1ec] sm:$0xff]
    %v181 = vld [vmem:[%s0 + $0x1fc] sm:$0xff]
    %v182 = vld [vmem:[%s0 + $0x204] sm:$0xff]
    %v183 = vld [vmem:[%s0 + $0x214] sm:$0xff]
    %v184 = vld [vmem:[%s0 + $0x21c] sm:$0xff]
    %v185 = vld [vmem:[%s0 + $0x22c] sm:$0xff]
    %v186 = vld [vmem:[%s0 + $0x234] sm:$0xff]
    %v187 = vld [vmem:[%s0 + $0x244] sm:$0xff]
    %v188 = vld [vmem:[%s0 + $0x24c] sm:$0xff]
    %v189 = vld [vmem:[%s0 + $0x25c] sm:$0xff]
    %v190 = vld [vmem:[%s0 + $0x264] sm:$0xff]
    %v191 = vld [vmem:[%s0 + $0x274] sm:$0xff]
    %v192 = vld [vmem:[%s0 + $0x27c] sm:$0xff]
    %v193 = vld [vmem:[%s0 + $0x28c] sm:$0xff]
    %v194 = vld [vmem:[%s0 + $0x294] sm:$0xff]
    %v195 = vld [vmem:[%s0 + $0x2a4] sm:$0xff]
    %v196 = vld [vmem:[%s0 + $0x2ac] sm:$0xff]
    %v197 = vld [vmem:[%s0 + $0x2bc] sm:$0xff]
    %v198 = vld [vmem:[%s0 + $0x2c4] sm:$0xff]
    %v199 = vld [vmem:[%s0 + $0x2d4] sm:$0xff]
    %v200 = vld [vmem:[%s0 + $0x2dc] sm:$0xff]
    %v201 = vld [vmem:[%s0 + $0x2ec] sm:$0xff]
    %v202 = vld [vmem:[%s0 + $0x2f4] sm:$0xff]
    %v203 = vld [vmem:[%s0 + $0x304] sm:$0xff]
    %v204 = vld [vmem:[%s0 + $0x30c] sm:$0xff]
    %v205 = vld [vmem:[%s0 + $0x31c] sm:$0xff]
    %v206 = vld [vmem:[%s0 + $0x324] sm:$0xff]
    %v207 = vld [vmem:[%s0 + $0x334] sm:$0xff]
    %v208 = vld [vmem:[%s0 + $0x33c] sm:$0xff]
    %v209 = vld [vmem:[%s0 + $0x34c] sm:$0xff]
    %v210 = vld [vmem:[%s0 + $0x354] sm:$0xff]
    %s211 = scalar_lea.vmem %s0, 48
    %v212 = vld [vmem:[%s211] sm:$0xff]
    %v213 = vld [vmem:[%s211 + $0x8] sm:$0xff]
    %v214 = vld [vmem:[%s211 + $0x18] sm:$0xff]
    %v215 = vld [vmem:[%s211 + $0x20] sm:$0xff]
    %v216 = vld [vmem:[%s211 + $0x30] sm:$0xff]
    %v217 = vld [vmem:[%s211 + $0x38] sm:$0xff]
    %v218 = vld [vmem:[%s211 + $0x48] sm:$0xff]
    %v219 = vld [vmem:[%s211 + $0x50] sm:$0xff]
    %v220 = vld [vmem:[%s211 + $0x60] sm:$0xff]
    %v221 = vld [vmem:[%s211 + $0x68] sm:$0xff]
    %v222 = vld [vmem:[%s211 + $0x78] sm:$0xff]
    %v223 = vld [vmem:[%s211 + $0x80] sm:$0xff]
    %v224 = vld [vmem:[%s211 + $0x90] sm:$0xff]
    %v225 = vld [vmem:[%s211 + $0x98] sm:$0xff]
    %v226 = vld [vmem:[%s211 + $0xa8] sm:$0xff]
    %v227 = vld [vmem:[%s211 + $0xb0] sm:$0xff]
    %v228 = vld [vmem:[%s211 + $0xc0] sm:$0xff]
    %v229 = vld [vmem:[%s211 + $0xc8] sm:$0xff]
    %v230 = vld [vmem:[%s211 + $0xd8] sm:$0xff]
    %v231 = vld [vmem:[%s211 + $0xe0] sm:$0xff]
    %v232 = vld [vmem:[%s211 + $0xf0] sm:$0xff]
    %v233 = vld [vmem:[%s211 + $0xf8] sm:$0xff]
    %v234 = vld [vmem:[%s211 + $0x108] sm:$0xff]
    %v235 = vld [vmem:[%s211 + $0x110] sm:$0xff]
    %v236 = vld [vmem:[%s211 + $0x120] sm:$0xff]
    %v237 = vld [vmem:[%s211 + $0x128] sm:$0xff]
    %v238 = vld [vmem:[%s211 + $0x138] sm:$0xff]
    %v239 = vld [vmem:[%s211 + $0x140] sm:$0xff]
    %v240 = vld [vmem:[%s211 + $0x150] sm:$0xff]
    %v241 = vld [vmem:[%s211 + $0x158] sm:$0xff]
    %v242 = vld [vmem:[%s211 + $0x168] sm:$0xff]
    %v243 = vld [vmem:[%s211 + $0x170] sm:$0xff]
    %v244 = vld [vmem:[%s211 + $0x1e0] sm:$0xff]
    %v245 = vld [vmem:[%s211 + $0x1e8] sm:$0xff]
    %v246 = vld [vmem:[%s211 + $0x1f8] sm:$0xff]
    %v247 = vld [vmem:[%s211 + $0x200] sm:$0xff]
    %v248 = vld [vmem:[%s211 + $0x210] sm:$0xff]
    %v249 = vld [vmem:[%s211 + $0x218] sm:$0xff]
    %v250 = vld [vmem:[%s211 + $0x228] sm:$0xff]
    %v251 = vld [vmem:[%s211 + $0x230] sm:$0xff]
    %v252 = vld [vmem:[%s211 + $0x240] sm:$0xff]
    %v253 = vld [vmem:[%s211 + $0x248] sm:$0xff]
    %v254 = vld [vmem:[%s211 + $0x258] sm:$0xff]
    %v255 = vld [vmem:[%s211 + $0x260] sm:$0xff]
    %v256 = vld [vmem:[%s211 + $0x270] sm:$0xff]
    %v257 = vld [vmem:[%s211 + $0x278] sm:$0xff]
    %v258 = vld [vmem:[%s211 + $0x288] sm:$0xff]
    %v259 = vld [vmem:[%s211 + $0x290] sm:$0xff]
    %v260 = vld [vmem:[%s211 + $0x2a0] sm:$0xff]
    %v261 = vld [vmem:[%s211 + $0x2a8] sm:$0xff]
    %v262 = vld [vmem:[%s211 + $0x2b8] sm:$0xff]
    %v263 = vld [vmem:[%s211 + $0x2c0] sm:$0xff]
    %v264 = vld [vmem:[%s211 + $0x2d0] sm:$0xff]
    %v265 = vld [vmem:[%s211 + $0x2d8] sm:$0xff]
    %v266 = vld [vmem:[%s211 + $0x2e8] sm:$0xff]
    %v267 = vld [vmem:[%s211 + $0x2f0] sm:$0xff]
    %v268 = vld [vmem:[%s211 + $0x300] sm:$0xff]
    %v269 = vld [vmem:[%s211 + $0x308] sm:$0xff]
    %v270 = vld [vmem:[%s211 + $0x318] sm:$0xff]
    %v271 = vld [vmem:[%s211 + $0x320] sm:$0xff]
    %v272 = vld [vmem:[%s211 + $0x330] sm:$0xff]
    %v273 = vld [vmem:[%s211 + $0x338] sm:$0xff]
    %v274 = vld [vmem:[%s211 + $0x348] sm:$0xff]
    %v275 = vld [vmem:[%s211 + $0x350] sm:$0xff]
    %v276 = vld [vmem:[%s211 + $0x2] sm:$0xff]
    %v277 = vld [vmem:[%s211 + $0xa] sm:$0xff]
    %v278 = vld [vmem:[%s211 + $0x1a] sm:$0xff]
    %v279 = vld [vmem:[%s211 + $0x22] sm:$0xff]
    %v280 = vld [vmem:[%s211 + $0x32] sm:$0xff]
    %v281 = vld [vmem:[%s211 + $0x3a] sm:$0xff]
    %v282 = vld [vmem:[%s211 + $0x4a] sm:$0xff]
    %v283 = vld [vmem:[%s211 + $0x52] sm:$0xff]
    %v284 = vld [vmem:[%s211 + $0x62] sm:$0xff]
    %v285 = vld [vmem:[%s211 + $0x6a] sm:$0xff]
    %v286 = vld [vmem:[%s211 + $0x7a] sm:$0xff]
    %v287 = vld [vmem:[%s211 + $0x82] sm:$0xff]
    %v288 = vld [vmem:[%s211 + $0x92] sm:$0xff]
    %v289 = vld [vmem:[%s211 + $0x9a] sm:$0xff]
    %v290 = vld [vmem:[%s211 + $0xaa] sm:$0xff]
    %v291 = vld [vmem:[%s211 + $0xb2] sm:$0xff]
    %v292 = vld [vmem:[%s211 + $0xc2] sm:$0xff]
    %v293 = vld [vmem:[%s211 + $0xca] sm:$0xff]
    %v294 = vld [vmem:[%s211 + $0xda] sm:$0xff]
    %v295 = vld [vmem:[%s211 + $0xe2] sm:$0xff]
    %v296 = vld [vmem:[%s211 + $0xf2] sm:$0xff]
    %v297 = vld [vmem:[%s211 + $0xfa] sm:$0xff]
    %v298 = vld [vmem:[%s211 + $0x10a] sm:$0xff]
    %v299 = vld [vmem:[%s211 + $0x112] sm:$0xff]
    %v300 = vld [vmem:[%s211 + $0x122] sm:$0xff]
    %v301 = vld [vmem:[%s211 + $0x12a] sm:$0xff]
    %v302 = vld [vmem:[%s211 + $0x13a] sm:$0xff]
    %v303 = vld [vmem:[%s211 + $0x142] sm:$0xff]
    %v304 = vld [vmem:[%s211 + $0x152] sm:$0xff]
    %v305 = vld [vmem:[%s211 + $0x15a] sm:$0xff]
    %v306 = vld [vmem:[%s211 + $0x16a] sm:$0xff]
    %v307 = vld [vmem:[%s211 + $0x172] sm:$0xff]
    %v308 = vld [vmem:[%s211 + $0x1e2] sm:$0xff]
    %v309 = vld [vmem:[%s211 + $0x1ea] sm:$0xff]
    %v310 = vld [vmem:[%s211 + $0x1fa] sm:$0xff]
    %v311 = vld [vmem:[%s211 + $0x202] sm:$0xff]
    %v312 = vld [vmem:[%s211 + $0x212] sm:$0xff]
    %v313 = vld [vmem:[%s211 + $0x21a] sm:$0xff]
    %v314 = vld [vmem:[%s211 + $0x22a] sm:$0xff]
    %v315 = vld [vmem:[%s211 + $0x232] sm:$0xff]
    %v316 = vld [vmem:[%s211 + $0x242] sm:$0xff]
    %v317 = vld [vmem:[%s211 + $0x24a] sm:$0xff]
    %v318 = vld [vmem:[%s211 + $0x25a] sm:$0xff]
    %v319 = vld [vmem:[%s211 + $0x262] sm:$0xff]
    %v320 = vld [vmem:[%s211 + $0x272] sm:$0xff]
    %v321 = vld [vmem:[%s211 + $0x27a] sm:$0xff]
    %v322 = vld [vmem:[%s211 + $0x28a] sm:$0xff]
    %v323 = vld [vmem:[%s211 + $0x292] sm:$0xff]
    %v324 = vld [vmem:[%s211 + $0x2a2] sm:$0xff]
    %v325 = vld [vmem:[%s211 + $0x2aa] sm:$0xff]
    %v326 = vld [vmem:[%s211 + $0x2ba] sm:$0xff]
    %v327 = vld [vmem:[%s211 + $0x2c2] sm:$0xff]
    %v328 = vld [vmem:[%s211 + $0x2d2] sm:$0xff]
    %v329 = vld [vmem:[%s211 + $0x2da] sm:$0xff]
    %v330 = vld [vmem:[%s211 + $0x2ea] sm:$0xff]
    %v331 = vld [vmem:[%s211 + $0x2f2] sm:$0xff]
    %v332 = vld [vmem:[%s211 + $0x302] sm:$0xff]
    %v333 = vld [vmem:[%s211 + $0x30a] sm:$0xff]
    %v334 = vld [vmem:[%s211 + $0x31a] sm:$0xff]
    %v335 = vld [vmem:[%s211 + $0x322] sm:$0xff]
    %v336 = vld [vmem:[%s211 + $0x332] sm:$0xff]
    %v337 = vld [vmem:[%s211 + $0x33a] sm:$0xff]
    %v338 = vld [vmem:[%s211 + $0x34a] sm:$0xff]
    %v339 = vld [vmem:[%s211 + $0x352] sm:$0xff]
    %v340 = vld [vmem:[%s211 + $0x4] sm:$0xff]
    %v341 = vld [vmem:[%s211 + $0xc] sm:$0xff]
    %v342 = vld [vmem:[%s211 + $0x1c] sm:$0xff]
    %v343 = vld [vmem:[%s211 + $0x24] sm:$0xff]
    %v344 = vld [vmem:[%s211 + $0x34] sm:$0xff]
    %v345 = vld [vmem:[%s211 + $0x3c] sm:$0xff]
    %v346 = vld [vmem:[%s211 + $0x4c] sm:$0xff]
    %v347 = vld [vmem:[%s211 + $0x54] sm:$0xff]
    %v348 = vld [vmem:[%s211 + $0x64] sm:$0xff]
    %v349 = vld [vmem:[%s211 + $0x6c] sm:$0xff]
    %v350 = vld [vmem:[%s211 + $0x7c] sm:$0xff]
    %v351 = vld [vmem:[%s211 + $0x84] sm:$0xff]
    %v352 = vld [vmem:[%s211 + $0x94] sm:$0xff]
    %v353 = vld [vmem:[%s211 + $0x9c] sm:$0xff]
    %v354 = vld [vmem:[%s211 + $0xac] sm:$0xff]
    %v355 = vld [vmem:[%s211 + $0xb4] sm:$0xff]
    %v356 = vld [vmem:[%s211 + $0xc4] sm:$0xff]
    %v357 = vld [vmem:[%s211 + $0xcc] sm:$0xff]
    %v358 = vld [vmem:[%s211 + $0xdc] sm:$0xff]
    %v359 = vld [vmem:[%s211 + $0xe4] sm:$0xff]
    %v360 = vld [vmem:[%s211 + $0xf4] sm:$0xff]
    %v361 = vld [vmem:[%s211 + $0xfc] sm:$0xff]
    %v362 = vld [vmem:[%s211 + $0x10c] sm:$0xff]
    %v363 = vld [vmem:[%s211 + $0x114] sm:$0xff]
    %v364 = vld [vmem:[%s211 + $0x124] sm:$0xff]
    %v365 = vld [vmem:[%s211 + $0x12c] sm:$0xff]
    %v366 = vld [vmem:[%s211 + $0x13c] sm:$0xff]
    %v367 = vld [vmem:[%s211 + $0x144] sm:$0xff]
    %v368 = vld [vmem:[%s211 + $0x154] sm:$0xff]
    %v369 = vld [vmem:[%s211 + $0x15c] sm:$0xff]
    %v370 = vld [vmem:[%s211 + $0x16c] sm:$0xff]
    %v371 = vld [vmem:[%s211 + $0x174] sm:$0xff]
    %v372 = vld [vmem:[%s211 + $0x1e4] sm:$0xff]
    %v373 = vld [vmem:[%s211 + $0x1ec] sm:$0xff]
    %v374 = vld [vmem:[%s211 + $0x1fc] sm:$0xff]
    %v375 = vld [vmem:[%s211 + $0x204] sm:$0xff]
    %v376 = vld [vmem:[%s211 + $0x214] sm:$0xff]
    %v377 = vld [vmem:[%s211 + $0x21c] sm:$0xff]
    %v378 = vld [vmem:[%s211 + $0x22c] sm:$0xff]
    %v379 = vld [vmem:[%s211 + $0x234] sm:$0xff]
    %v380 = vld [vmem:[%s211 + $0x244] sm:$0xff]
    %v381 = vld [vmem:[%s211 + $0x24c] sm:$0xff]
    %v382 = vld [vmem:[%s211 + $0x25c] sm:$0xff]
    %v383 = vld [vmem:[%s211 + $0x264] sm:$0xff]
    %v384 = vld [vmem:[%s211 + $0x274] sm:$0xff]
    %v385 = vld [vmem:[%s211 + $0x27c] sm:$0xff]
    %v386 = vld [vmem:[%s211 + $0x28c] sm:$0xff]
    %v387 = vld [vmem:[%s211 + $0x294] sm:$0xff]
    %v388 = vld [vmem:[%s211 + $0x2a4] sm:$0xff]
    %v389 = vld [vmem:[%s211 + $0x2ac] sm:$0xff]
    %v390 = vld [vmem:[%s211 + $0x2bc] sm:$0xff]
    %v391 = vld [vmem:[%s211 + $0x2c4] sm:$0xff]
    %v392 = vld [vmem:[%s211 + $0x2d4] sm:$0xff]
    %v393 = vld [vmem:[%s211 + $0x2dc] sm:$0xff]
    %v394 = vld [vmem:[%s211 + $0x2ec] sm:$0xff]
    %v395 = vld [vmem:[%s211 + $0x2f4] sm:$0xff]
    %v396 = vld [vmem:[%s211 + $0x304] sm:$0xff]
    %v397 = vld [vmem:[%s211 + $0x30c] sm:$0xff]
    %v398 = vld [vmem:[%s211 + $0x31c] sm:$0xff]
    %v399 = vld [vmem:[%s211 + $0x324] sm:$0xff]
    %v400 = vld [vmem:[%s211 + $0x334] sm:$0xff]
    %v401 = vld [vmem:[%s211 + $0x33c] sm:$0xff]
    %v402 = vld [vmem:[%s211 + $0x34c] sm:$0xff]
    %v403 = vld [vmem:[%s211 + $0x354] sm:$0xff]
    %s404 = scalar_lea.vmem %s0, 96
    %v405 = vld [vmem:[%s404] sm:$0xff]
    %v406 = vld [vmem:[%s404 + $0x8] sm:$0xff]
    %v407 = vld [vmem:[%s404 + $0x18] sm:$0xff]
    %v408 = vld [vmem:[%s404 + $0x20] sm:$0xff]
    %v409 = vld [vmem:[%s404 + $0x30] sm:$0xff]
    %v410 = vld [vmem:[%s404 + $0x38] sm:$0xff]
    %v411 = vld [vmem:[%s404 + $0x48] sm:$0xff]
    %v412 = vld [vmem:[%s404 + $0x50] sm:$0xff]
    %v413 = vld [vmem:[%s404 + $0x60] sm:$0xff]
    %v414 = vld [vmem:[%s404 + $0x68] sm:$0xff]
    %v415 = vld [vmem:[%s404 + $0x78] sm:$0xff]
    %v416 = vld [vmem:[%s404 + $0x80] sm:$0xff]
    %v417 = vld [vmem:[%s404 + $0x90] sm:$0xff]
    %v418 = vld [vmem:[%s404 + $0x98] sm:$0xff]
    %v419 = vld [vmem:[%s404 + $0xa8] sm:$0xff]
    %v420 = vld [vmem:[%s404 + $0xb0] sm:$0xff]
    %v421 = vld [vmem:[%s404 + $0xc0] sm:$0xff]
    %v422 = vld [vmem:[%s404 + $0xc8] sm:$0xff]
    %v423 = vld [vmem:[%s404 + $0xd8] sm:$0xff]
    %v424 = vld [vmem:[%s404 + $0xe0] sm:$0xff]
    %v425 = vld [vmem:[%s404 + $0xf0] sm:$0xff]
    %v426 = vld [vmem:[%s404 + $0xf8] sm:$0xff]
    %v427 = vld [vmem:[%s404 + $0x108] sm:$0xff]
    %v428 = vld [vmem:[%s404 + $0x110] sm:$0xff]
    %v429 = vld [vmem:[%s404 + $0x120] sm:$0xff]
    %v430 = vld [vmem:[%s404 + $0x128] sm:$0xff]
    %v431 = vld [vmem:[%s404 + $0x138] sm:$0xff]
    %v432 = vld [vmem:[%s404 + $0x140] sm:$0xff]
    %v433 = vld [vmem:[%s404 + $0x150] sm:$0xff]
    %v434 = vld [vmem:[%s404 + $0x158] sm:$0xff]
    %v435 = vld [vmem:[%s404 + $0x168] sm:$0xff]
    %v436 = vld [vmem:[%s404 + $0x170] sm:$0xff]
    %v437 = vld [vmem:[%s404 + $0x1e0] sm:$0xff]
    %v438 = vld [vmem:[%s404 + $0x1e8] sm:$0xff]
    %v439 = vld [vmem:[%s404 + $0x1f8] sm:$0xff]
    %v440 = vld [vmem:[%s404 + $0x200] sm:$0xff]
    %v441 = vld [vmem:[%s404 + $0x210] sm:$0xff]
    %v442 = vld [vmem:[%s404 + $0x218] sm:$0xff]
    %v443 = vld [vmem:[%s404 + $0x228] sm:$0xff]
    %v444 = vld [vmem:[%s404 + $0x230] sm:$0xff]
    %v445 = vld [vmem:[%s404 + $0x240] sm:$0xff]
    %v446 = vld [vmem:[%s404 + $0x248] sm:$0xff]
    %v447 = vld [vmem:[%s404 + $0x258] sm:$0xff]
    %v448 = vld [vmem:[%s404 + $0x260] sm:$0xff]
    %v449 = vld [vmem:[%s404 + $0x270] sm:$0xff]
    %v450 = vld [vmem:[%s404 + $0x278] sm:$0xff]
    %v451 = vld [vmem:[%s404 + $0x288] sm:$0xff]
    %v452 = vld [vmem:[%s404 + $0x290] sm:$0xff]
    %v453 = vld [vmem:[%s404 + $0x2a0] sm:$0xff]
    %v454 = vld [vmem:[%s404 + $0x2a8] sm:$0xff]
    %v455 = vld [vmem:[%s404 + $0x2b8] sm:$0xff]
    %v456 = vld [vmem:[%s404 + $0x2c0] sm:$0xff]
    %v457 = vld [vmem:[%s404 + $0x2d0] sm:$0xff]
    %v458 = vld [vmem:[%s404 + $0x2d8] sm:$0xff]
    %v459 = vld [vmem:[%s404 + $0x2e8] sm:$0xff]
    %v460 = vld [vmem:[%s404 + $0x2f0] sm:$0xff]
    %v461 = vld [vmem:[%s404 + $0x300] sm:$0xff]
    %v462 = vld [vmem:[%s404 + $0x308] sm:$0xff]
    %v463 = vld [vmem:[%s404 + $0x318] sm:$0xff]
    %v464 = vld [vmem:[%s404 + $0x320] sm:$0xff]
    %v465 = vld [vmem:[%s404 + $0x330] sm:$0xff]
    %v466 = vld [vmem:[%s404 + $0x338] sm:$0xff]
    %v467 = vld [vmem:[%s404 + $0x348] sm:$0xff]
    %v468 = vld [vmem:[%s404 + $0x350] sm:$0xff]
    %v469 = vld [vmem:[%s404 + $0x2] sm:$0xff]
    %v470 = vld [vmem:[%s404 + $0xa] sm:$0xff]
    %v471 = vld [vmem:[%s404 + $0x1a] sm:$0xff]
    %v472 = vld [vmem:[%s404 + $0x22] sm:$0xff]
    %v473 = vld [vmem:[%s404 + $0x32] sm:$0xff]
    %v474 = vld [vmem:[%s404 + $0x3a] sm:$0xff]
    %v475 = vld [vmem:[%s404 + $0x4a] sm:$0xff]
    %v476 = vld [vmem:[%s404 + $0x52] sm:$0xff]
    %v477 = vld [vmem:[%s404 + $0x62] sm:$0xff]
    %v478 = vld [vmem:[%s404 + $0x6a] sm:$0xff]
    %v479 = vld [vmem:[%s404 + $0x7a] sm:$0xff]
    %v480 = vld [vmem:[%s404 + $0x82] sm:$0xff]
    %v481 = vld [vmem:[%s404 + $0x92] sm:$0xff]
    %v482 = vld [vmem:[%s404 + $0x9a] sm:$0xff]
    %v483 = vld [vmem:[%s404 + $0xaa] sm:$0xff]
    %v484 = vld [vmem:[%s404 + $0xb2] sm:$0xff]
    %v485 = vld [vmem:[%s404 + $0xc2] sm:$0xff]
    %v486 = vld [vmem:[%s404 + $0xca] sm:$0xff]
    %v487 = vld [vmem:[%s404 + $0xda] sm:$0xff]
    %v488 = vld [vmem:[%s404 + $0xe2] sm:$0xff]
    %v489 = vld [vmem:[%s404 + $0xf2] sm:$0xff]
    %v490 = vld [vmem:[%s404 + $0xfa] sm:$0xff]
    %v491 = vld [vmem:[%s404 + $0x10a] sm:$0xff]
    %v492 = vld [vmem:[%s404 + $0x112] sm:$0xff]
    %v493 = vld [vmem:[%s404 + $0x122] sm:$0xff]
    %v494 = vld [vmem:[%s404 + $0x12a] sm:$0xff]
    %v495 = vld [vmem:[%s404 + $0x13a] sm:$0xff]
    %v496 = vld [vmem:[%s404 + $0x142] sm:$0xff]
    %v497 = vld [vmem:[%s404 + $0x152] sm:$0xff]
    %v498 = vld [vmem:[%s404 + $0x15a] sm:$0xff]
    %v499 = vld [vmem:[%s404 + $0x16a] sm:$0xff]
    %v500 = vld [vmem:[%s404 + $0x172] sm:$0xff]
    %v501 = vld [vmem:[%s404 + $0x1e2] sm:$0xff]
    %v502 = vld [vmem:[%s404 + $0x1ea] sm:$0xff]
    %v503 = vld [vmem:[%s404 + $0x1fa] sm:$0xff]
    %v504 = vld [vmem:[%s404 + $0x202] sm:$0xff]
    %v505 = vld [vmem:[%s404 + $0x212] sm:$0xff]
    %v506 = vld [vmem:[%s404 + $0x21a] sm:$0xff]
    %v507 = vld [vmem:[%s404 + $0x22a] sm:$0xff]
    %v508 = vld [vmem:[%s404 + $0x232] sm:$0xff]
    %v509 = vld [vmem:[%s404 + $0x242] sm:$0xff]
    %v510 = vld [vmem:[%s404 + $0x24a] sm:$0xff]
    %v511 = vld [vmem:[%s404 + $0x25a] sm:$0xff]
    %v512 = vld [vmem:[%s404 + $0x262] sm:$0xff]
    %v513 = vld [vmem:[%s404 + $0x272] sm:$0xff]
    %v514 = vld [vmem:[%s404 + $0x27a] sm:$0xff]
    %v515 = vld [vmem:[%s404 + $0x28a] sm:$0xff]
    %v516 = vld [vmem:[%s404 + $0x292] sm:$0xff]
    %v517 = vld [vmem:[%s404 + $0x2a2] sm:$0xff]
    %v518 = vld [vmem:[%s404 + $0x2aa] sm:$0xff]
    %v519 = vld [vmem:[%s404 + $0x2ba] sm:$0xff]
    %v520 = vld [vmem:[%s404 + $0x2c2] sm:$0xff]
    %v521 = vld [vmem:[%s404 + $0x2d2] sm:$0xff]
    %v522 = vld [vmem:[%s404 + $0x2da] sm:$0xff]
    %v523 = vld [vmem:[%s404 + $0x2ea] sm:$0xff]
    %v524 = vld [vmem:[%s404 + $0x2f2] sm:$0xff]
    %v525 = vld [vmem:[%s404 + $0x302] sm:$0xff]
    %v526 = vld [vmem:[%s404 + $0x30a] sm:$0xff]
    %v527 = vld [vmem:[%s404 + $0x31a] sm:$0xff]
    %v528 = vld [vmem:[%s404 + $0x322] sm:$0xff]
    %v529 = vld [vmem:[%s404 + $0x332] sm:$0xff]
    %v530 = vld [vmem:[%s404 + $0x33a] sm:$0xff]
    %v531 = vld [vmem:[%s404 + $0x34a] sm:$0xff]
    %v532 = vld [vmem:[%s404 + $0x352] sm:$0xff]
    %v533 = vld [vmem:[%s404 + $0x4] sm:$0xff]
    %v534 = vld [vmem:[%s404 + $0xc] sm:$0xff]
    %v535 = vld [vmem:[%s404 + $0x1c] sm:$0xff]
    %v536 = vld [vmem:[%s404 + $0x24] sm:$0xff]
    %v537 = vld [vmem:[%s404 + $0x34] sm:$0xff]
    %v538 = vld [vmem:[%s404 + $0x3c] sm:$0xff]
    %v539 = vld [vmem:[%s404 + $0x4c] sm:$0xff]
    %v540 = vld [vmem:[%s404 + $0x54] sm:$0xff]
    %v541 = vld [vmem:[%s404 + $0x64] sm:$0xff]
    %v542 = vld [vmem:[%s404 + $0x6c] sm:$0xff]
    %v543 = vld [vmem:[%s404 + $0x7c] sm:$0xff]
    %v544 = vld [vmem:[%s404 + $0x84] sm:$0xff]
    %v545 = vld [vmem:[%s404 + $0x94] sm:$0xff]
    %v546 = vld [vmem:[%s404 + $0x9c] sm:$0xff]
    %v547 = vld [vmem:[%s404 + $0xac] sm:$0xff]
    %v548 = vld [vmem:[%s404 + $0xb4] sm:$0xff]
    %v549 = vld [vmem:[%s404 + $0xc4] sm:$0xff]
    %v550 = vld [vmem:[%s404 + $0xcc] sm:$0xff]
    %v551 = vld [vmem:[%s404 + $0xdc] sm:$0xff]
    %v552 = vld [vmem:[%s404 + $0xe4] sm:$0xff]
    %v553 = vld [vmem:[%s404 + $0xf4] sm:$0xff]
    %v554 = vld [vmem:[%s404 + $0xfc] sm:$0xff]
    %v555 = vld [vmem:[%s404 + $0x10c] sm:$0xff]
    %v556 = vld [vmem:[%s404 + $0x114] sm:$0xff]
    %v557 = vld [vmem:[%s404 + $0x124] sm:$0xff]
    %v558 = vld [vmem:[%s404 + $0x12c] sm:$0xff]
    %v559 = vld [vmem:[%s404 + $0x13c] sm:$0xff]
    %v560 = vld [vmem:[%s404 + $0x144] sm:$0xff]
    %v561 = vld [vmem:[%s404 + $0x154] sm:$0xff]
    %v562 = vld [vmem:[%s404 + $0x15c] sm:$0xff]
    %v563 = vld [vmem:[%s404 + $0x16c] sm:$0xff]
    %v564 = vld [vmem:[%s404 + $0x174] sm:$0xff]
    %v565 = vld [vmem:[%s404 + $0x1e4] sm:$0xff]
    %v566 = vld [vmem:[%s404 + $0x1ec] sm:$0xff]
    %v567 = vld [vmem:[%s404 + $0x1fc] sm:$0xff]
    %v568 = vld [vmem:[%s404 + $0x204] sm:$0xff]
    %v569 = vld [vmem:[%s404 + $0x214] sm:$0xff]
    %v570 = vld [vmem:[%s404 + $0x21c] sm:$0xff]
    %v571 = vld [vmem:[%s404 + $0x22c] sm:$0xff]
    %v572 = vld [vmem:[%s404 + $0x234] sm:$0xff]
    %v573 = vld [vmem:[%s404 + $0x244] sm:$0xff]
    %v574 = vld [vmem:[%s404 + $0x24c] sm:$0xff]
    %v575 = vld [vmem:[%s404 + $0x25c] sm:$0xff]
    %v576 = vld [vmem:[%s404 + $0x264] sm:$0xff]
    %v577 = vld [vmem:[%s404 + $0x274] sm:$0xff]
    %v578 = vld [vmem:[%s404 + $0x27c] sm:$0xff]
    %v579 = vld [vmem:[%s404 + $0x28c] sm:$0xff]
    %v580 = vld [vmem:[%s404 + $0x294] sm:$0xff]
    %v581 = vld [vmem:[%s404 + $0x2a4] sm:$0xff]
    %v582 = vld [vmem:[%s404 + $0x2ac] sm:$0xff]
    %v583 = vld [vmem:[%s404 + $0x2bc] sm:$0xff]
    %v584 = vld [vmem:[%s404 + $0x2c4] sm:$0xff]
    %v585 = vld [vmem:[%s404 + $0x2d4] sm:$0xff]
    %v586 = vld [vmem:[%s404 + $0x2dc] sm:$0xff]
    %v587 = vld [vmem:[%s404 + $0x2ec] sm:$0xff]
    %v588 = vld [vmem:[%s404 + $0x2f4] sm:$0xff]
    %v589 = vld [vmem:[%s404 + $0x304] sm:$0xff]
    %v590 = vld [vmem:[%s404 + $0x30c] sm:$0xff]
    %v591 = vld [vmem:[%s404 + $0x31c] sm:$0xff]
    %v592 = vld [vmem:[%s404 + $0x324] sm:$0xff]
    %v593 = vld [vmem:[%s404 + $0x334] sm:$0xff]
    %v594 = vld [vmem:[%s404 + $0x33c] sm:$0xff]
    %v595 = vld [vmem:[%s404 + $0x34c] sm:$0xff]
    %v596 = vld [vmem:[%s404 + $0x354] sm:$0xff]
    %661 = vrot.lane.b32.xlu0 %v83, 4
    %v662 = vpop.permute.xlu0 %661
    %663 = vrot.lane.b32.xlu0 %v84, 4
    %v664 = vpop.permute.xlu0 %663
    %665 = vrot.lane.b32.xlu0 %v85, 4
    %v666 = vpop.permute.xlu0 %665
    %667 = vrot.lane.b32.xlu0 %v86, 4
    %v668 = vpop.permute.xlu0 %667
    %669 = vrot.lane.b32.xlu0 %v87, 4
    %v670 = vpop.permute.xlu0 %669
    %671 = vrot.lane.b32.xlu0 %v88, 4
    %v672 = vpop.permute.xlu0 %671
    %673 = vrot.lane.b32.xlu0 %v89, 4
    %v674 = vpop.permute.xlu0 %673
    %675 = vrot.lane.b32.xlu0 %v90, 4
    %v676 = vpop.permute.xlu0 %675
    %677 = vrot.lane.b32.xlu0 %v91, 4
    %v678 = vpop.permute.xlu0 %677
    %679 = vrot.lane.b32.xlu0 %v92, 4
    %v680 = vpop.permute.xlu0 %679
    %681 = vrot.lane.b32.xlu0 %v93, 4
    %v682 = vpop.permute.xlu0 %681
    %683 = vrot.lane.b32.xlu0 %v94, 4
    %v684 = vpop.permute.xlu0 %683
    %685 = vrot.lane.b32.xlu0 %v95, 4
    %v686 = vpop.permute.xlu0 %685
    %687 = vrot.lane.b32.xlu0 %v96, 4
    %v688 = vpop.permute.xlu0 %687
    %689 = vrot.lane.b32.xlu0 %v97, 4
    %v690 = vpop.permute.xlu0 %689
    %691 = vrot.lane.b32.xlu0 %v98, 4
    %v692 = vpop.permute.xlu0 %691
    %693 = vrot.lane.b32.xlu0 %v99, 4
    %v694 = vpop.permute.xlu0 %693
    %695 = vrot.lane.b32.xlu0 %v100, 4
    %v696 = vpop.permute.xlu0 %695
    %697 = vrot.lane.b32.xlu0 %v101, 4
    %v698 = vpop.permute.xlu0 %697
    %699 = vrot.lane.b32.xlu0 %v102, 4
    %v700 = vpop.permute.xlu0 %699
    %701 = vrot.lane.b32.xlu0 %v103, 4
    %v702 = vpop.permute.xlu0 %701
    %703 = vrot.lane.b32.xlu0 %v104, 4
    %v704 = vpop.permute.xlu0 %703
    %705 = vrot.lane.b32.xlu0 %v105, 4
    %v706 = vpop.permute.xlu0 %705
    %707 = vrot.lane.b32.xlu0 %v106, 4
    %v708 = vpop.permute.xlu0 %707
    %709 = vrot.lane.b32.xlu0 %v107, 4
    %v710 = vpop.permute.xlu0 %709
    %711 = vrot.lane.b32.xlu0 %v108, 4
    %v712 = vpop.permute.xlu0 %711
    %713 = vrot.lane.b32.xlu0 %v109, 4
    %v714 = vpop.permute.xlu0 %713
    %715 = vrot.lane.b32.xlu0 %v110, 4
    %v716 = vpop.permute.xlu0 %715
    %717 = vrot.lane.b32.xlu0 %v111, 4
    %v718 = vpop.permute.xlu0 %717
    %719 = vrot.lane.b32.xlu0 %v112, 4
    %v720 = vpop.permute.xlu0 %719
    %721 = vrot.lane.b32.xlu0 %v113, 4
    %v722 = vpop.permute.xlu0 %721
    %723 = vrot.lane.b32.xlu0 %v114, 4
    %v724 = vpop.permute.xlu0 %723
    %725 = vrot.lane.b32.xlu0 %v115, 4
    %v726 = vpop.permute.xlu0 %725
    %727 = vrot.lane.b32.xlu0 %v116, 4
    %v728 = vpop.permute.xlu0 %727
    %729 = vrot.lane.b32.xlu0 %v117, 4
    %v730 = vpop.permute.xlu0 %729
    %731 = vrot.lane.b32.xlu0 %v118, 4
    %v732 = vpop.permute.xlu0 %731
    %733 = vrot.lane.b32.xlu0 %v119, 4
    %v734 = vpop.permute.xlu0 %733
    %735 = vrot.lane.b32.xlu0 %v120, 4
    %v736 = vpop.permute.xlu0 %735
    %737 = vrot.lane.b32.xlu0 %v121, 4
    %v738 = vpop.permute.xlu0 %737
    %739 = vrot.lane.b32.xlu0 %v122, 4
    %v740 = vpop.permute.xlu0 %739
    %741 = vrot.lane.b32.xlu0 %v123, 4
    %v742 = vpop.permute.xlu0 %741
    %743 = vrot.lane.b32.xlu0 %v124, 4
    %v744 = vpop.permute.xlu0 %743
    %745 = vrot.lane.b32.xlu0 %v125, 4
    %v746 = vpop.permute.xlu0 %745
    %747 = vrot.lane.b32.xlu0 %v126, 4
    %v748 = vpop.permute.xlu0 %747
    %749 = vrot.lane.b32.xlu0 %v127, 4
    %v750 = vpop.permute.xlu0 %749
    %751 = vrot.lane.b32.xlu0 %v128, 4
    %v752 = vpop.permute.xlu0 %751
    %753 = vrot.lane.b32.xlu0 %v129, 4
    %v754 = vpop.permute.xlu0 %753
    %755 = vrot.lane.b32.xlu0 %v130, 4
    %v756 = vpop.permute.xlu0 %755
    %757 = vrot.lane.b32.xlu0 %v131, 4
    %v758 = vpop.permute.xlu0 %757
    %759 = vrot.lane.b32.xlu0 %v132, 4
    %v760 = vpop.permute.xlu0 %759
    %761 = vrot.lane.b32.xlu0 %v133, 4
    %v762 = vpop.permute.xlu0 %761
    %763 = vrot.lane.b32.xlu0 %v134, 4
    %v764 = vpop.permute.xlu0 %763
    %765 = vrot.lane.b32.xlu0 %v135, 4
    %v766 = vpop.permute.xlu0 %765
    %767 = vrot.lane.b32.xlu0 %v136, 4
    %v768 = vpop.permute.xlu0 %767
    %769 = vrot.lane.b32.xlu0 %v137, 4
    %v770 = vpop.permute.xlu0 %769
    %771 = vrot.lane.b32.xlu0 %v138, 4
    %v772 = vpop.permute.xlu0 %771
    %773 = vrot.lane.b32.xlu0 %v139, 4
    %v774 = vpop.permute.xlu0 %773
    %775 = vrot.lane.b32.xlu0 %v140, 4
    %v776 = vpop.permute.xlu0 %775
    %777 = vrot.lane.b32.xlu0 %v141, 4
    %v778 = vpop.permute.xlu0 %777
    %779 = vrot.lane.b32.xlu0 %v142, 4
    %v780 = vpop.permute.xlu0 %779
    %781 = vrot.lane.b32.xlu0 %v143, 4
    %v782 = vpop.permute.xlu0 %781
    %783 = vrot.lane.b32.xlu0 %v144, 4
    %v784 = vpop.permute.xlu0 %783
    %785 = vrot.lane.b32.xlu0 %v145, 4
    %v786 = vpop.permute.xlu0 %785
    %787 = vrot.lane.b32.xlu0 %v146, 4
    %v788 = vpop.permute.xlu0 %787
    %917 = vrot.lane.b32.xlu0 %v147, 8
    %v918 = vpop.permute.xlu0 %917
    %919 = vrot.lane.b32.xlu0 %v148, 8
    %v920 = vpop.permute.xlu0 %919
    %921 = vrot.lane.b32.xlu0 %v149, 8
    %v922 = vpop.permute.xlu0 %921
    %923 = vrot.lane.b32.xlu0 %v150, 8
    %v924 = vpop.permute.xlu0 %923
    %925 = vrot.lane.b32.xlu0 %v151, 8
    %v926 = vpop.permute.xlu0 %925
    %927 = vrot.lane.b32.xlu0 %v152, 8
    %v928 = vpop.permute.xlu0 %927
    %929 = vrot.lane.b32.xlu0 %v153, 8
    %v930 = vpop.permute.xlu0 %929
    %931 = vrot.lane.b32.xlu0 %v154, 8
    %v932 = vpop.permute.xlu0 %931
    %933 = vrot.lane.b32.xlu0 %v155, 8
    %v934 = vpop.permute.xlu0 %933
    %935 = vrot.lane.b32.xlu0 %v156, 8
    %v936 = vpop.permute.xlu0 %935
    %937 = vrot.lane.b32.xlu0 %v157, 8
    %v938 = vpop.permute.xlu0 %937
    %939 = vrot.lane.b32.xlu0 %v158, 8
    %v940 = vpop.permute.xlu0 %939
    %941 = vrot.lane.b32.xlu0 %v159, 8
    %v942 = vpop.permute.xlu0 %941
    %943 = vrot.lane.b32.xlu0 %v160, 8
    %v944 = vpop.permute.xlu0 %943
    %945 = vrot.lane.b32.xlu0 %v161, 8
    %v946 = vpop.permute.xlu0 %945
    %947 = vrot.lane.b32.xlu0 %v162, 8
    %v948 = vpop.permute.xlu0 %947
    %949 = vrot.lane.b32.xlu0 %v163, 8
    %v950 = vpop.permute.xlu0 %949
    %951 = vrot.lane.b32.xlu0 %v164, 8
    %v952 = vpop.permute.xlu0 %951
    %953 = vrot.lane.b32.xlu0 %v165, 8
    %v954 = vpop.permute.xlu0 %953
    %955 = vrot.lane.b32.xlu0 %v166, 8
    %v956 = vpop.permute.xlu0 %955
    %957 = vrot.lane.b32.xlu0 %v167, 8
    %v958 = vpop.permute.xlu0 %957
    %959 = vrot.lane.b32.xlu0 %v168, 8
    %v960 = vpop.permute.xlu0 %959
    %961 = vrot.lane.b32.xlu0 %v169, 8
    %v962 = vpop.permute.xlu0 %961
    %963 = vrot.lane.b32.xlu0 %v170, 8
    %v964 = vpop.permute.xlu0 %963
    %965 = vrot.lane.b32.xlu0 %v171, 8
    %v966 = vpop.permute.xlu0 %965
    %967 = vrot.lane.b32.xlu0 %v172, 8
    %v968 = vpop.permute.xlu0 %967
    %969 = vrot.lane.b32.xlu0 %v173, 8
    %v970 = vpop.permute.xlu0 %969
    %971 = vrot.lane.b32.xlu0 %v174, 8
    %v972 = vpop.permute.xlu0 %971
    %973 = vrot.lane.b32.xlu0 %v175, 8
    %v974 = vpop.permute.xlu0 %973
    %975 = vrot.lane.b32.xlu0 %v176, 8
    %v976 = vpop.permute.xlu0 %975
    %977 = vrot.lane.b32.xlu0 %v177, 8
    %v978 = vpop.permute.xlu0 %977
    %979 = vrot.lane.b32.xlu0 %v178, 8
    %v980 = vpop.permute.xlu0 %979
    %981 = vrot.lane.b32.xlu0 %v179, 8
    %v982 = vpop.permute.xlu0 %981
    %983 = vrot.lane.b32.xlu0 %v180, 8
    %v984 = vpop.permute.xlu0 %983
    %985 = vrot.lane.b32.xlu0 %v181, 8
    %v986 = vpop.permute.xlu0 %985
    %987 = vrot.lane.b32.xlu0 %v182, 8
    %v988 = vpop.permute.xlu0 %987
    %989 = vrot.lane.b32.xlu0 %v183, 8
    %v990 = vpop.permute.xlu0 %989
    %991 = vrot.lane.b32.xlu0 %v184, 8
    %v992 = vpop.permute.xlu0 %991
    %993 = vrot.lane.b32.xlu0 %v185, 8
    %v994 = vpop.permute.xlu0 %993
    %995 = vrot.lane.b32.xlu0 %v186, 8
    %v996 = vpop.permute.xlu0 %995
    %997 = vrot.lane.b32.xlu0 %v187, 8
    %v998 = vpop.permute.xlu0 %997
    %999 = vrot.lane.b32.xlu0 %v188, 8
    %v1000 = vpop.permute.xlu0 %999
    %1001 = vrot.lane.b32.xlu0 %v189, 8
    %v1002 = vpop.permute.xlu0 %1001
    %1003 = vrot.lane.b32.xlu0 %v190, 8
    %v1004 = vpop.permute.xlu0 %1003
    %1005 = vrot.lane.b32.xlu0 %v191, 8
    %v1006 = vpop.permute.xlu0 %1005
    %1007 = vrot.lane.b32.xlu0 %v192, 8
    %v1008 = vpop.permute.xlu0 %1007
    %1009 = vrot.lane.b32.xlu0 %v193, 8
    %v1010 = vpop.permute.xlu0 %1009
    %1011 = vrot.lane.b32.xlu0 %v194, 8
    %v1012 = vpop.permute.xlu0 %1011
    %1013 = vrot.lane.b32.xlu0 %v195, 8
    %v1014 = vpop.permute.xlu0 %1013
    %1015 = vrot.lane.b32.xlu0 %v196, 8
    %v1016 = vpop.permute.xlu0 %1015
    %1017 = vrot.lane.b32.xlu0 %v197, 8
    %v1018 = vpop.permute.xlu0 %1017
    %1019 = vrot.lane.b32.xlu0 %v198, 8
    %v1020 = vpop.permute.xlu0 %1019
    %1021 = vrot.lane.b32.xlu0 %v199, 8
    %v1022 = vpop.permute.xlu0 %1021
    %1023 = vrot.lane.b32.xlu0 %v200, 8
    %v1024 = vpop.permute.xlu0 %1023
    %1025 = vrot.lane.b32.xlu0 %v201, 8
    %v1026 = vpop.permute.xlu0 %1025
    %1027 = vrot.lane.b32.xlu0 %v202, 8
    %v1028 = vpop.permute.xlu0 %1027
    %1029 = vrot.lane.b32.xlu0 %v203, 8
    %v1030 = vpop.permute.xlu0 %1029
    %1031 = vrot.lane.b32.xlu0 %v204, 8
    %v1032 = vpop.permute.xlu0 %1031
    %1033 = vrot.lane.b32.xlu0 %v205, 8
    %v1034 = vpop.permute.xlu0 %1033
    %1035 = vrot.lane.b32.xlu0 %v206, 8
    %v1036 = vpop.permute.xlu0 %1035
    %1037 = vrot.lane.b32.xlu0 %v207, 8
    %v1038 = vpop.permute.xlu0 %1037
    %1039 = vrot.lane.b32.xlu0 %v208, 8
    %v1040 = vpop.permute.xlu0 %1039
    %1041 = vrot.lane.b32.xlu0 %v209, 8
    %v1042 = vpop.permute.xlu0 %1041
    %1043 = vrot.lane.b32.xlu0 %v210, 8
    %v1044 = vpop.permute.xlu0 %1043
    %1173 = vrot.lane.b32.xlu0 %v212, 12
    %v1174 = vpop.permute.xlu0 %1173
    %1175 = vrot.lane.b32.xlu0 %v213, 12
    %v1176 = vpop.permute.xlu0 %1175
    %1177 = vrot.lane.b32.xlu0 %v214, 12
    %v1178 = vpop.permute.xlu0 %1177
    %1179 = vrot.lane.b32.xlu0 %v215, 12
    %v1180 = vpop.permute.xlu0 %1179
    %1181 = vrot.lane.b32.xlu0 %v216, 12
    %v1182 = vpop.permute.xlu0 %1181
    %1183 = vrot.lane.b32.xlu0 %v217, 12
    %v1184 = vpop.permute.xlu0 %1183
    %1185 = vrot.lane.b32.xlu0 %v218, 12
    %v1186 = vpop.permute.xlu0 %1185
    %1187 = vrot.lane.b32.xlu0 %v219, 12
    %v1188 = vpop.permute.xlu0 %1187
    %1189 = vrot.lane.b32.xlu0 %v220, 12
    %v1190 = vpop.permute.xlu0 %1189
    %1191 = vrot.lane.b32.xlu0 %v221, 12
    %v1192 = vpop.permute.xlu0 %1191
    %1193 = vrot.lane.b32.xlu0 %v222, 12
    %v1194 = vpop.permute.xlu0 %1193
    %1195 = vrot.lane.b32.xlu0 %v223, 12
    %v1196 = vpop.permute.xlu0 %1195
    %1197 = vrot.lane.b32.xlu0 %v224, 12
    %v1198 = vpop.permute.xlu0 %1197
    %1199 = vrot.lane.b32.xlu0 %v225, 12
    %v1200 = vpop.permute.xlu0 %1199
    %1201 = vrot.lane.b32.xlu0 %v226, 12
    %v1202 = vpop.permute.xlu0 %1201
    %1203 = vrot.lane.b32.xlu0 %v227, 12
    %v1204 = vpop.permute.xlu0 %1203
    %1205 = vrot.lane.b32.xlu0 %v228, 12
    %v1206 = vpop.permute.xlu0 %1205
    %1207 = vrot.lane.b32.xlu0 %v229, 12
    %v1208 = vpop.permute.xlu0 %1207
    %1209 = vrot.lane.b32.xlu0 %v230, 12
    %v1210 = vpop.permute.xlu0 %1209
    %1211 = vrot.lane.b32.xlu0 %v231, 12
    %v1212 = vpop.permute.xlu0 %1211
    %1213 = vrot.lane.b32.xlu0 %v232, 12
    %v1214 = vpop.permute.xlu0 %1213
    %1215 = vrot.lane.b32.xlu0 %v233, 12
    %v1216 = vpop.permute.xlu0 %1215
    %1217 = vrot.lane.b32.xlu0 %v234, 12
    %v1218 = vpop.permute.xlu0 %1217
    %1219 = vrot.lane.b32.xlu0 %v235, 12
    %v1220 = vpop.permute.xlu0 %1219
    %1221 = vrot.lane.b32.xlu0 %v236, 12
    %v1222 = vpop.permute.xlu0 %1221
    %1223 = vrot.lane.b32.xlu0 %v237, 12
    %v1224 = vpop.permute.xlu0 %1223
    %1225 = vrot.lane.b32.xlu0 %v238, 12
    %v1226 = vpop.permute.xlu0 %1225
    %1227 = vrot.lane.b32.xlu0 %v239, 12
    %v1228 = vpop.permute.xlu0 %1227
    %1229 = vrot.lane.b32.xlu0 %v240, 12
    %v1230 = vpop.permute.xlu0 %1229
    %1231 = vrot.lane.b32.xlu0 %v241, 12
    %v1232 = vpop.permute.xlu0 %1231
    %1233 = vrot.lane.b32.xlu0 %v242, 12
    %v1234 = vpop.permute.xlu0 %1233
    %1235 = vrot.lane.b32.xlu0 %v243, 12
    %v1236 = vpop.permute.xlu0 %1235
    %1237 = vrot.lane.b32.xlu0 %v244, 12
    %v1238 = vpop.permute.xlu0 %1237
    %1239 = vrot.lane.b32.xlu0 %v245, 12
    %v1240 = vpop.permute.xlu0 %1239
    %1241 = vrot.lane.b32.xlu0 %v246, 12
    %v1242 = vpop.permute.xlu0 %1241
    %1243 = vrot.lane.b32.xlu0 %v247, 12
    %v1244 = vpop.permute.xlu0 %1243
    %1245 = vrot.lane.b32.xlu0 %v248, 12
    %v1246 = vpop.permute.xlu0 %1245
    %1247 = vrot.lane.b32.xlu0 %v249, 12
    %v1248 = vpop.permute.xlu0 %1247
    %1249 = vrot.lane.b32.xlu0 %v250, 12
    %v1250 = vpop.permute.xlu0 %1249
    %1251 = vrot.lane.b32.xlu0 %v251, 12
    %v1252 = vpop.permute.xlu0 %1251
    %1253 = vrot.lane.b32.xlu0 %v252, 12
    %v1254 = vpop.permute.xlu0 %1253
    %1255 = vrot.lane.b32.xlu0 %v253, 12
    %v1256 = vpop.permute.xlu0 %1255
    %1257 = vrot.lane.b32.xlu0 %v254, 12
    %v1258 = vpop.permute.xlu0 %1257
    %1259 = vrot.lane.b32.xlu0 %v255, 12
    %v1260 = vpop.permute.xlu0 %1259
    %1261 = vrot.lane.b32.xlu0 %v256, 12
    %v1262 = vpop.permute.xlu0 %1261
    %1263 = vrot.lane.b32.xlu0 %v257, 12
    %v1264 = vpop.permute.xlu0 %1263
    %1265 = vrot.lane.b32.xlu0 %v258, 12
    %v1266 = vpop.permute.xlu0 %1265
    %1267 = vrot.lane.b32.xlu0 %v259, 12
    %v1268 = vpop.permute.xlu0 %1267
    %1269 = vrot.lane.b32.xlu0 %v260, 12
    %v1270 = vpop.permute.xlu0 %1269
    %1271 = vrot.lane.b32.xlu0 %v261, 12
    %v1272 = vpop.permute.xlu0 %1271
    %1273 = vrot.lane.b32.xlu0 %v262, 12
    %v1274 = vpop.permute.xlu0 %1273
    %1275 = vrot.lane.b32.xlu0 %v263, 12
    %v1276 = vpop.permute.xlu0 %1275
    %1277 = vrot.lane.b32.xlu0 %v264, 12
    %v1278 = vpop.permute.xlu0 %1277
    %1279 = vrot.lane.b32.xlu0 %v265, 12
    %v1280 = vpop.permute.xlu0 %1279
    %1281 = vrot.lane.b32.xlu0 %v266, 12
    %v1282 = vpop.permute.xlu0 %1281
    %1283 = vrot.lane.b32.xlu0 %v267, 12
    %v1284 = vpop.permute.xlu0 %1283
    %1285 = vrot.lane.b32.xlu0 %v268, 12
    %v1286 = vpop.permute.xlu0 %1285
    %1287 = vrot.lane.b32.xlu0 %v269, 12
    %v1288 = vpop.permute.xlu0 %1287
    %1289 = vrot.lane.b32.xlu0 %v270, 12
    %v1290 = vpop.permute.xlu0 %1289
    %1291 = vrot.lane.b32.xlu0 %v271, 12
    %v1292 = vpop.permute.xlu0 %1291
    %1293 = vrot.lane.b32.xlu0 %v272, 12
    %v1294 = vpop.permute.xlu0 %1293
    %1295 = vrot.lane.b32.xlu0 %v273, 12
    %v1296 = vpop.permute.xlu0 %1295
    %1297 = vrot.lane.b32.xlu0 %v274, 12
    %v1298 = vpop.permute.xlu0 %1297
    %1299 = vrot.lane.b32.xlu0 %v275, 12
    %v1300 = vpop.permute.xlu0 %1299
    %1429 = vrot.lane.b32.xlu0 %v276, 16
    %v1430 = vpop.permute.xlu0 %1429
    %1431 = vrot.lane.b32.xlu0 %v277, 16
    %v1432 = vpop.permute.xlu0 %1431
    %1433 = vrot.lane.b32.xlu0 %v278, 16
    %v1434 = vpop.permute.xlu0 %1433
    %1435 = vrot.lane.b32.xlu0 %v279, 16
    %v1436 = vpop.permute.xlu0 %1435
    %1437 = vrot.lane.b32.xlu0 %v280, 16
    %v1438 = vpop.permute.xlu0 %1437
    %1439 = vrot.lane.b32.xlu0 %v281, 16
    %v1440 = vpop.permute.xlu0 %1439
    %1441 = vrot.lane.b32.xlu0 %v282, 16
    %v1442 = vpop.permute.xlu0 %1441
    %1443 = vrot.lane.b32.xlu0 %v283, 16
    %v1444 = vpop.permute.xlu0 %1443
    %1445 = vrot.lane.b32.xlu0 %v284, 16
    %v1446 = vpop.permute.xlu0 %1445
    %1447 = vrot.lane.b32.xlu0 %v285, 16
    %v1448 = vpop.permute.xlu0 %1447
    %1449 = vrot.lane.b32.xlu0 %v286, 16
    %v1450 = vpop.permute.xlu0 %1449
    %1451 = vrot.lane.b32.xlu0 %v287, 16
    %v1452 = vpop.permute.xlu0 %1451
    %1453 = vrot.lane.b32.xlu0 %v288, 16
    %v1454 = vpop.permute.xlu0 %1453
    %1455 = vrot.lane.b32.xlu0 %v289, 16
    %v1456 = vpop.permute.xlu0 %1455
    %1457 = vrot.lane.b32.xlu0 %v290, 16
    %v1458 = vpop.permute.xlu0 %1457
    %1459 = vrot.lane.b32.xlu0 %v291, 16
    %v1460 = vpop.permute.xlu0 %1459
    %1461 = vrot.lane.b32.xlu0 %v292, 16
    %v1462 = vpop.permute.xlu0 %1461
    %1463 = vrot.lane.b32.xlu0 %v293, 16
    %v1464 = vpop.permute.xlu0 %1463
    %1465 = vrot.lane.b32.xlu0 %v294, 16
    %v1466 = vpop.permute.xlu0 %1465
    %1467 = vrot.lane.b32.xlu0 %v295, 16
    %v1468 = vpop.permute.xlu0 %1467
    %1469 = vrot.lane.b32.xlu0 %v296, 16
    %v1470 = vpop.permute.xlu0 %1469
    %1471 = vrot.lane.b32.xlu0 %v297, 16
    %v1472 = vpop.permute.xlu0 %1471
    %1473 = vrot.lane.b32.xlu0 %v298, 16
    %v1474 = vpop.permute.xlu0 %1473
    %1475 = vrot.lane.b32.xlu0 %v299, 16
    %v1476 = vpop.permute.xlu0 %1475
    %1477 = vrot.lane.b32.xlu0 %v300, 16
    %v1478 = vpop.permute.xlu0 %1477
    %1479 = vrot.lane.b32.xlu0 %v301, 16
    %v1480 = vpop.permute.xlu0 %1479
    %1481 = vrot.lane.b32.xlu0 %v302, 16
    %v1482 = vpop.permute.xlu0 %1481
    %1483 = vrot.lane.b32.xlu0 %v303, 16
    %v1484 = vpop.permute.xlu0 %1483
    %1485 = vrot.lane.b32.xlu0 %v304, 16
    %v1486 = vpop.permute.xlu0 %1485
    %1487 = vrot.lane.b32.xlu0 %v305, 16
    %v1488 = vpop.permute.xlu0 %1487
    %1489 = vrot.lane.b32.xlu0 %v306, 16
    %v1490 = vpop.permute.xlu0 %1489
    %1491 = vrot.lane.b32.xlu0 %v307, 16
    %v1492 = vpop.permute.xlu0 %1491
    %1493 = vrot.lane.b32.xlu0 %v308, 16
    %v1494 = vpop.permute.xlu0 %1493
    %1495 = vrot.lane.b32.xlu0 %v309, 16
    %v1496 = vpop.permute.xlu0 %1495
    %1497 = vrot.lane.b32.xlu0 %v310, 16
    %v1498 = vpop.permute.xlu0 %1497
    %1499 = vrot.lane.b32.xlu0 %v311, 16
    %v1500 = vpop.permute.xlu0 %1499
    %1501 = vrot.lane.b32.xlu0 %v312, 16
    %v1502 = vpop.permute.xlu0 %1501
    %1503 = vrot.lane.b32.xlu0 %v313, 16
    %v1504 = vpop.permute.xlu0 %1503
    %1505 = vrot.lane.b32.xlu0 %v314, 16
    %v1506 = vpop.permute.xlu0 %1505
    %1507 = vrot.lane.b32.xlu0 %v315, 16
    %v1508 = vpop.permute.xlu0 %1507
    %1509 = vrot.lane.b32.xlu0 %v316, 16
    %v1510 = vpop.permute.xlu0 %1509
    %1511 = vrot.lane.b32.xlu0 %v317, 16
    %v1512 = vpop.permute.xlu0 %1511
    %1513 = vrot.lane.b32.xlu0 %v318, 16
    %v1514 = vpop.permute.xlu0 %1513
    %1515 = vrot.lane.b32.xlu0 %v319, 16
    %v1516 = vpop.permute.xlu0 %1515
    %1517 = vrot.lane.b32.xlu0 %v320, 16
    %v1518 = vpop.permute.xlu0 %1517
    %1519 = vrot.lane.b32.xlu0 %v321, 16
    %v1520 = vpop.permute.xlu0 %1519
    %1521 = vrot.lane.b32.xlu0 %v322, 16
    %v1522 = vpop.permute.xlu0 %1521
    %1523 = vrot.lane.b32.xlu0 %v323, 16
    %v1524 = vpop.permute.xlu0 %1523
    %1525 = vrot.lane.b32.xlu0 %v324, 16
    %v1526 = vpop.permute.xlu0 %1525
    %1527 = vrot.lane.b32.xlu0 %v325, 16
    %v1528 = vpop.permute.xlu0 %1527
    %1529 = vrot.lane.b32.xlu0 %v326, 16
    %v1530 = vpop.permute.xlu0 %1529
    %1531 = vrot.lane.b32.xlu0 %v327, 16
    %v1532 = vpop.permute.xlu0 %1531
    %1533 = vrot.lane.b32.xlu0 %v328, 16
    %v1534 = vpop.permute.xlu0 %1533
    %1535 = vrot.lane.b32.xlu0 %v329, 16
    %v1536 = vpop.permute.xlu0 %1535
    %1537 = vrot.lane.b32.xlu0 %v330, 16
    %v1538 = vpop.permute.xlu0 %1537
    %1539 = vrot.lane.b32.xlu0 %v331, 16
    %v1540 = vpop.permute.xlu0 %1539
    %1541 = vrot.lane.b32.xlu0 %v332, 16
    %v1542 = vpop.permute.xlu0 %1541
    %1543 = vrot.lane.b32.xlu0 %v333, 16
    %v1544 = vpop.permute.xlu0 %1543
    %1545 = vrot.lane.b32.xlu0 %v334, 16
    %v1546 = vpop.permute.xlu0 %1545
    %1547 = vrot.lane.b32.xlu0 %v335, 16
    %v1548 = vpop.permute.xlu0 %1547
    %1549 = vrot.lane.b32.xlu0 %v336, 16
    %v1550 = vpop.permute.xlu0 %1549
    %1551 = vrot.lane.b32.xlu0 %v337, 16
    %v1552 = vpop.permute.xlu0 %1551
    %1553 = vrot.lane.b32.xlu0 %v338, 16
    %v1554 = vpop.permute.xlu0 %1553
    %1555 = vrot.lane.b32.xlu0 %v339, 16
    %v1556 = vpop.permute.xlu0 %1555
    %1685 = vrot.lane.b32.xlu0 %v340, 20
    %v1686 = vpop.permute.xlu0 %1685
    %1687 = vrot.lane.b32.xlu0 %v341, 20
    %v1688 = vpop.permute.xlu0 %1687
    %1689 = vrot.lane.b32.xlu0 %v342, 20
    %v1690 = vpop.permute.xlu0 %1689
    %1691 = vrot.lane.b32.xlu0 %v343, 20
    %v1692 = vpop.permute.xlu0 %1691
    %1693 = vrot.lane.b32.xlu0 %v344, 20
    %v1694 = vpop.permute.xlu0 %1693
    %1695 = vrot.lane.b32.xlu0 %v345, 20
    %v1696 = vpop.permute.xlu0 %1695
    %1697 = vrot.lane.b32.xlu0 %v346, 20
    %v1698 = vpop.permute.xlu0 %1697
    %1699 = vrot.lane.b32.xlu0 %v347, 20
    %v1700 = vpop.permute.xlu0 %1699
    %1701 = vrot.lane.b32.xlu0 %v348, 20
    %v1702 = vpop.permute.xlu0 %1701
    %1703 = vrot.lane.b32.xlu0 %v349, 20
    %v1704 = vpop.permute.xlu0 %1703
    %1705 = vrot.lane.b32.xlu0 %v350, 20
    %v1706 = vpop.permute.xlu0 %1705
    %1707 = vrot.lane.b32.xlu0 %v351, 20
    %v1708 = vpop.permute.xlu0 %1707
    %1709 = vrot.lane.b32.xlu0 %v352, 20
    %v1710 = vpop.permute.xlu0 %1709
    %1711 = vrot.lane.b32.xlu0 %v353, 20
    %v1712 = vpop.permute.xlu0 %1711
    %1713 = vrot.lane.b32.xlu0 %v354, 20
    %v1714 = vpop.permute.xlu0 %1713
    %1715 = vrot.lane.b32.xlu0 %v355, 20
    %v1716 = vpop.permute.xlu0 %1715
    %1717 = vrot.lane.b32.xlu0 %v356, 20
    %v1718 = vpop.permute.xlu0 %1717
    %1719 = vrot.lane.b32.xlu0 %v357, 20
    %v1720 = vpop.permute.xlu0 %1719
    %1721 = vrot.lane.b32.xlu0 %v358, 20
    %v1722 = vpop.permute.xlu0 %1721
    %1723 = vrot.lane.b32.xlu0 %v359, 20
    %v1724 = vpop.permute.xlu0 %1723
    %1725 = vrot.lane.b32.xlu0 %v360, 20
    %v1726 = vpop.permute.xlu0 %1725
    %1727 = vrot.lane.b32.xlu0 %v361, 20
    %v1728 = vpop.permute.xlu0 %1727
    %1729 = vrot.lane.b32.xlu0 %v362, 20
    %v1730 = vpop.permute.xlu0 %1729
    %1731 = vrot.lane.b32.xlu0 %v363, 20
    %v1732 = vpop.permute.xlu0 %1731
    %1733 = vrot.lane.b32.xlu0 %v364, 20
    %v1734 = vpop.permute.xlu0 %1733
    %1735 = vrot.lane.b32.xlu0 %v365, 20
    %v1736 = vpop.permute.xlu0 %1735
    %1737 = vrot.lane.b32.xlu0 %v366, 20
    %v1738 = vpop.permute.xlu0 %1737
    %1739 = vrot.lane.b32.xlu0 %v367, 20
    %v1740 = vpop.permute.xlu0 %1739
    %1741 = vrot.lane.b32.xlu0 %v368, 20
    %v1742 = vpop.permute.xlu0 %1741
    %1743 = vrot.lane.b32.xlu0 %v369, 20
    %v1744 = vpop.permute.xlu0 %1743
    %1745 = vrot.lane.b32.xlu0 %v370, 20
    %v1746 = vpop.permute.xlu0 %1745
    %1747 = vrot.lane.b32.xlu0 %v371, 20
    %v1748 = vpop.permute.xlu0 %1747
    %1749 = vrot.lane.b32.xlu0 %v372, 20
    %v1750 = vpop.permute.xlu0 %1749
    %1751 = vrot.lane.b32.xlu0 %v373, 20
    %v1752 = vpop.permute.xlu0 %1751
    %1753 = vrot.lane.b32.xlu0 %v374, 20
    %v1754 = vpop.permute.xlu0 %1753
    %1755 = vrot.lane.b32.xlu0 %v375, 20
    %v1756 = vpop.permute.xlu0 %1755
    %1757 = vrot.lane.b32.xlu0 %v376, 20
    %v1758 = vpop.permute.xlu0 %1757
    %1759 = vrot.lane.b32.xlu0 %v377, 20
    %v1760 = vpop.permute.xlu0 %1759
    %1761 = vrot.lane.b32.xlu0 %v378, 20
    %v1762 = vpop.permute.xlu0 %1761
    %1763 = vrot.lane.b32.xlu0 %v379, 20
    %v1764 = vpop.permute.xlu0 %1763
    %1765 = vrot.lane.b32.xlu0 %v380, 20
    %v1766 = vpop.permute.xlu0 %1765
    %1767 = vrot.lane.b32.xlu0 %v381, 20
    %v1768 = vpop.permute.xlu0 %1767
    %1769 = vrot.lane.b32.xlu0 %v382, 20
    %v1770 = vpop.permute.xlu0 %1769
    %1771 = vrot.lane.b32.xlu0 %v383, 20
    %v1772 = vpop.permute.xlu0 %1771
    %1773 = vrot.lane.b32.xlu0 %v384, 20
    %v1774 = vpop.permute.xlu0 %1773
    %1775 = vrot.lane.b32.xlu0 %v385, 20
    %v1776 = vpop.permute.xlu0 %1775
    %1777 = vrot.lane.b32.xlu0 %v386, 20
    %v1778 = vpop.permute.xlu0 %1777
    %1779 = vrot.lane.b32.xlu0 %v387, 20
    %v1780 = vpop.permute.xlu0 %1779
    %1781 = vrot.lane.b32.xlu0 %v388, 20
    %v1782 = vpop.permute.xlu0 %1781
    %1783 = vrot.lane.b32.xlu0 %v389, 20
    %v1784 = vpop.permute.xlu0 %1783
    %1785 = vrot.lane.b32.xlu0 %v390, 20
    %v1786 = vpop.permute.xlu0 %1785
    %1787 = vrot.lane.b32.xlu0 %v391, 20
    %v1788 = vpop.permute.xlu0 %1787
    %1789 = vrot.lane.b32.xlu0 %v392, 20
    %v1790 = vpop.permute.xlu0 %1789
    %1791 = vrot.lane.b32.xlu0 %v393, 20
    %v1792 = vpop.permute.xlu0 %1791
    %1793 = vrot.lane.b32.xlu0 %v394, 20
    %v1794 = vpop.permute.xlu0 %1793
    %1795 = vrot.lane.b32.xlu0 %v395, 20
    %v1796 = vpop.permute.xlu0 %1795
    %1797 = vrot.lane.b32.xlu0 %v396, 20
    %v1798 = vpop.permute.xlu0 %1797
    %1799 = vrot.lane.b32.xlu0 %v397, 20
    %v1800 = vpop.permute.xlu0 %1799
    %1801 = vrot.lane.b32.xlu0 %v398, 20
    %v1802 = vpop.permute.xlu0 %1801
    %1803 = vrot.lane.b32.xlu0 %v399, 20
    %v1804 = vpop.permute.xlu0 %1803
    %1805 = vrot.lane.b32.xlu0 %v400, 20
    %v1806 = vpop.permute.xlu0 %1805
    %1807 = vrot.lane.b32.xlu0 %v401, 20
    %v1808 = vpop.permute.xlu0 %1807
    %1809 = vrot.lane.b32.xlu0 %v402, 20
    %v1810 = vpop.permute.xlu0 %1809
    %1811 = vrot.lane.b32.xlu0 %v403, 20
    %v1812 = vpop.permute.xlu0 %1811
    %1941 = vrot.lane.b32.xlu0 %v405, 24
    %v1942 = vpop.permute.xlu0 %1941
    %1943 = vrot.lane.b32.xlu0 %v406, 24
    %v1944 = vpop.permute.xlu0 %1943
    %1945 = vrot.lane.b32.xlu0 %v407, 24
    %v1946 = vpop.permute.xlu0 %1945
    %1947 = vrot.lane.b32.xlu0 %v408, 24
    %v1948 = vpop.permute.xlu0 %1947
    %1949 = vrot.lane.b32.xlu0 %v409, 24
    %v1950 = vpop.permute.xlu0 %1949
    %1951 = vrot.lane.b32.xlu0 %v410, 24
    %v1952 = vpop.permute.xlu0 %1951
    %1953 = vrot.lane.b32.xlu0 %v411, 24
    %v1954 = vpop.permute.xlu0 %1953
    %1955 = vrot.lane.b32.xlu0 %v412, 24
    %v1956 = vpop.permute.xlu0 %1955
    %1957 = vrot.lane.b32.xlu0 %v413, 24
    %v1958 = vpop.permute.xlu0 %1957
    %1959 = vrot.lane.b32.xlu0 %v414, 24
    %v1960 = vpop.permute.xlu0 %1959
    %1961 = vrot.lane.b32.xlu0 %v415, 24
    %v1962 = vpop.permute.xlu0 %1961
    %1963 = vrot.lane.b32.xlu0 %v416, 24
    %v1964 = vpop.permute.xlu0 %1963
    %1965 = vrot.lane.b32.xlu0 %v417, 24
    %v1966 = vpop.permute.xlu0 %1965
    %1967 = vrot.lane.b32.xlu0 %v418, 24
    %v1968 = vpop.permute.xlu0 %1967
    %1969 = vrot.lane.b32.xlu0 %v419, 24
    %v1970 = vpop.permute.xlu0 %1969
    %1971 = vrot.lane.b32.xlu0 %v420, 24
    %v1972 = vpop.permute.xlu0 %1971
    %1973 = vrot.lane.b32.xlu0 %v421, 24
    %v1974 = vpop.permute.xlu0 %1973
    %1975 = vrot.lane.b32.xlu0 %v422, 24
    %v1976 = vpop.permute.xlu0 %1975
    %1977 = vrot.lane.b32.xlu0 %v423, 24
    %v1978 = vpop.permute.xlu0 %1977
    %1979 = vrot.lane.b32.xlu0 %v424, 24
    %v1980 = vpop.permute.xlu0 %1979
    %1981 = vrot.lane.b32.xlu0 %v425, 24
    %v1982 = vpop.permute.xlu0 %1981
    %1983 = vrot.lane.b32.xlu0 %v426, 24
    %v1984 = vpop.permute.xlu0 %1983
    %1985 = vrot.lane.b32.xlu0 %v427, 24
    %v1986 = vpop.permute.xlu0 %1985
    %1987 = vrot.lane.b32.xlu0 %v428, 24
    %v1988 = vpop.permute.xlu0 %1987
    %1989 = vrot.lane.b32.xlu0 %v429, 24
    %v1990 = vpop.permute.xlu0 %1989
    %1991 = vrot.lane.b32.xlu0 %v430, 24
    %v1992 = vpop.permute.xlu0 %1991
    %1993 = vrot.lane.b32.xlu0 %v431, 24
    %v1994 = vpop.permute.xlu0 %1993
    %1995 = vrot.lane.b32.xlu0 %v432, 24
    %v1996 = vpop.permute.xlu0 %1995
    %1997 = vrot.lane.b32.xlu0 %v433, 24
    %v1998 = vpop.permute.xlu0 %1997
    %1999 = vrot.lane.b32.xlu0 %v434, 24
    %v2000 = vpop.permute.xlu0 %1999
    %2001 = vrot.lane.b32.xlu0 %v435, 24
    %v2002 = vpop.permute.xlu0 %2001
    %2003 = vrot.lane.b32.xlu0 %v436, 24
    %v2004 = vpop.permute.xlu0 %2003
    %2005 = vrot.lane.b32.xlu0 %v437, 24
    %v2006 = vpop.permute.xlu0 %2005
    %2007 = vrot.lane.b32.xlu0 %v438, 24
    %v2008 = vpop.permute.xlu0 %2007
    %2009 = vrot.lane.b32.xlu0 %v439, 24
    %v2010 = vpop.permute.xlu0 %2009
    %2011 = vrot.lane.b32.xlu0 %v440, 24
    %v2012 = vpop.permute.xlu0 %2011
    %2013 = vrot.lane.b32.xlu0 %v441, 24
    %v2014 = vpop.permute.xlu0 %2013
    %2015 = vrot.lane.b32.xlu0 %v442, 24
    %v2016 = vpop.permute.xlu0 %2015
    %2017 = vrot.lane.b32.xlu0 %v443, 24
    %v2018 = vpop.permute.xlu0 %2017
    %2019 = vrot.lane.b32.xlu0 %v444, 24
    %v2020 = vpop.permute.xlu0 %2019
    %2021 = vrot.lane.b32.xlu0 %v445, 24
    %v2022 = vpop.permute.xlu0 %2021
    %2023 = vrot.lane.b32.xlu0 %v446, 24
    %v2024 = vpop.permute.xlu0 %2023
    %2025 = vrot.lane.b32.xlu0 %v447, 24
    %v2026 = vpop.permute.xlu0 %2025
    %2027 = vrot.lane.b32.xlu0 %v448, 24
    %v2028 = vpop.permute.xlu0 %2027
    %2029 = vrot.lane.b32.xlu0 %v449, 24
    %v2030 = vpop.permute.xlu0 %2029
    %2031 = vrot.lane.b32.xlu0 %v450, 24
    %v2032 = vpop.permute.xlu0 %2031
    %2033 = vrot.lane.b32.xlu0 %v451, 24
    %v2034 = vpop.permute.xlu0 %2033
    %2035 = vrot.lane.b32.xlu0 %v452, 24
    %v2036 = vpop.permute.xlu0 %2035
    %2037 = vrot.lane.b32.xlu0 %v453, 24
    %v2038 = vpop.permute.xlu0 %2037
    %2039 = vrot.lane.b32.xlu0 %v454, 24
    %v2040 = vpop.permute.xlu0 %2039
    %2041 = vrot.lane.b32.xlu0 %v455, 24
    %v2042 = vpop.permute.xlu0 %2041
    %2043 = vrot.lane.b32.xlu0 %v456, 24
    %v2044 = vpop.permute.xlu0 %2043
    %2045 = vrot.lane.b32.xlu0 %v457, 24
    %v2046 = vpop.permute.xlu0 %2045
    %2047 = vrot.lane.b32.xlu0 %v458, 24
    %v2048 = vpop.permute.xlu0 %2047
    %2049 = vrot.lane.b32.xlu0 %v459, 24
    %v2050 = vpop.permute.xlu0 %2049
    %2051 = vrot.lane.b32.xlu0 %v460, 24
    %v2052 = vpop.permute.xlu0 %2051
    %2053 = vrot.lane.b32.xlu0 %v461, 24
    %v2054 = vpop.permute.xlu0 %2053
    %2055 = vrot.lane.b32.xlu0 %v462, 24
    %v2056 = vpop.permute.xlu0 %2055
    %2057 = vrot.lane.b32.xlu0 %v463, 24
    %v2058 = vpop.permute.xlu0 %2057
    %2059 = vrot.lane.b32.xlu0 %v464, 24
    %v2060 = vpop.permute.xlu0 %2059
    %2061 = vrot.lane.b32.xlu0 %v465, 24
    %v2062 = vpop.permute.xlu0 %2061
    %2063 = vrot.lane.b32.xlu0 %v466, 24
    %v2064 = vpop.permute.xlu0 %2063
    %2065 = vrot.lane.b32.xlu0 %v467, 24
    %v2066 = vpop.permute.xlu0 %2065
    %2067 = vrot.lane.b32.xlu0 %v468, 24
    %v2068 = vpop.permute.xlu0 %2067
    %2197 = vrot.lane.b32.xlu0 %v469, 28
    %v2198 = vpop.permute.xlu0 %2197
    %2199 = vrot.lane.b32.xlu0 %v470, 28
    %v2200 = vpop.permute.xlu0 %2199
    %2201 = vrot.lane.b32.xlu0 %v471, 28
    %v2202 = vpop.permute.xlu0 %2201
    %2203 = vrot.lane.b32.xlu0 %v472, 28
    %v2204 = vpop.permute.xlu0 %2203
    %2205 = vrot.lane.b32.xlu0 %v473, 28
    %v2206 = vpop.permute.xlu0 %2205
    %2207 = vrot.lane.b32.xlu0 %v474, 28
    %v2208 = vpop.permute.xlu0 %2207
    %2209 = vrot.lane.b32.xlu0 %v475, 28
    %v2210 = vpop.permute.xlu0 %2209
    %2211 = vrot.lane.b32.xlu0 %v476, 28
    %v2212 = vpop.permute.xlu0 %2211
    %2213 = vrot.lane.b32.xlu0 %v477, 28
    %v2214 = vpop.permute.xlu0 %2213
    %2215 = vrot.lane.b32.xlu0 %v478, 28
    %v2216 = vpop.permute.xlu0 %2215
    %2217 = vrot.lane.b32.xlu0 %v479, 28
    %v2218 = vpop.permute.xlu0 %2217
    %2219 = vrot.lane.b32.xlu0 %v480, 28
    %v2220 = vpop.permute.xlu0 %2219
    %2221 = vrot.lane.b32.xlu0 %v481, 28
    %v2222 = vpop.permute.xlu0 %2221
    %2223 = vrot.lane.b32.xlu0 %v482, 28
    %v2224 = vpop.permute.xlu0 %2223
    %2225 = vrot.lane.b32.xlu0 %v483, 28
    %v2226 = vpop.permute.xlu0 %2225
    %2227 = vrot.lane.b32.xlu0 %v484, 28
    %v2228 = vpop.permute.xlu0 %2227
    %2229 = vrot.lane.b32.xlu0 %v485, 28
    %v2230 = vpop.permute.xlu0 %2229
    %2231 = vrot.lane.b32.xlu0 %v486, 28
    %v2232 = vpop.permute.xlu0 %2231
    %2233 = vrot.lane.b32.xlu0 %v487, 28
    %v2234 = vpop.permute.xlu0 %2233
    %2235 = vrot.lane.b32.xlu0 %v488, 28
    %v2236 = vpop.permute.xlu0 %2235
    %2237 = vrot.lane.b32.xlu0 %v489, 28
    %v2238 = vpop.permute.xlu0 %2237
    %2239 = vrot.lane.b32.xlu0 %v490, 28
    %v2240 = vpop.permute.xlu0 %2239
    %2241 = vrot.lane.b32.xlu0 %v491, 28
    %v2242 = vpop.permute.xlu0 %2241
    %2243 = vrot.lane.b32.xlu0 %v492, 28
    %v2244 = vpop.permute.xlu0 %2243
    %2245 = vrot.lane.b32.xlu0 %v493, 28
    %v2246 = vpop.permute.xlu0 %2245
    %2247 = vrot.lane.b32.xlu0 %v494, 28
    %v2248 = vpop.permute.xlu0 %2247
    %2249 = vrot.lane.b32.xlu0 %v495, 28
    %v2250 = vpop.permute.xlu0 %2249
    %2251 = vrot.lane.b32.xlu0 %v496, 28
    %v2252 = vpop.permute.xlu0 %2251
    %2253 = vrot.lane.b32.xlu0 %v497, 28
    %v2254 = vpop.permute.xlu0 %2253
    %2255 = vrot.lane.b32.xlu0 %v498, 28
    %v2256 = vpop.permute.xlu0 %2255
    %2257 = vrot.lane.b32.xlu0 %v499, 28
    %v2258 = vpop.permute.xlu0 %2257
    %2259 = vrot.lane.b32.xlu0 %v500, 28
    %v2260 = vpop.permute.xlu0 %2259
    %2261 = vrot.lane.b32.xlu0 %v501, 28
    %v2262 = vpop.permute.xlu0 %2261
    %2263 = vrot.lane.b32.xlu0 %v502, 28
    %v2264 = vpop.permute.xlu0 %2263
    %2265 = vrot.lane.b32.xlu0 %v503, 28
    %v2266 = vpop.permute.xlu0 %2265
    %2267 = vrot.lane.b32.xlu0 %v504, 28
    %v2268 = vpop.permute.xlu0 %2267
    %2269 = vrot.lane.b32.xlu0 %v505, 28
    %v2270 = vpop.permute.xlu0 %2269
    %2271 = vrot.lane.b32.xlu0 %v506, 28
    %v2272 = vpop.permute.xlu0 %2271
    %2273 = vrot.lane.b32.xlu0 %v507, 28
    %v2274 = vpop.permute.xlu0 %2273
    %2275 = vrot.lane.b32.xlu0 %v508, 28
    %v2276 = vpop.permute.xlu0 %2275
    %2277 = vrot.lane.b32.xlu0 %v509, 28
    %v2278 = vpop.permute.xlu0 %2277
    %2279 = vrot.lane.b32.xlu0 %v510, 28
    %v2280 = vpop.permute.xlu0 %2279
    %2281 = vrot.lane.b32.xlu0 %v511, 28
    %v2282 = vpop.permute.xlu0 %2281
    %2283 = vrot.lane.b32.xlu0 %v512, 28
    %v2284 = vpop.permute.xlu0 %2283
    %2285 = vrot.lane.b32.xlu0 %v513, 28
    %v2286 = vpop.permute.xlu0 %2285
    %2287 = vrot.lane.b32.xlu0 %v514, 28
    %v2288 = vpop.permute.xlu0 %2287
    %2289 = vrot.lane.b32.xlu0 %v515, 28
    %v2290 = vpop.permute.xlu0 %2289
    %2291 = vrot.lane.b32.xlu0 %v516, 28
    %v2292 = vpop.permute.xlu0 %2291
    %2293 = vrot.lane.b32.xlu0 %v517, 28
    %v2294 = vpop.permute.xlu0 %2293
    %2295 = vrot.lane.b32.xlu0 %v518, 28
    %v2296 = vpop.permute.xlu0 %2295
    %2297 = vrot.lane.b32.xlu0 %v519, 28
    %v2298 = vpop.permute.xlu0 %2297
    %2299 = vrot.lane.b32.xlu0 %v520, 28
    %v2300 = vpop.permute.xlu0 %2299
    %2301 = vrot.lane.b32.xlu0 %v521, 28
    %v2302 = vpop.permute.xlu0 %2301
    %2303 = vrot.lane.b32.xlu0 %v522, 28
    %v2304 = vpop.permute.xlu0 %2303
    %2305 = vrot.lane.b32.xlu0 %v523, 28
    %v2306 = vpop.permute.xlu0 %2305
    %2307 = vrot.lane.b32.xlu0 %v524, 28
    %v2308 = vpop.permute.xlu0 %2307
    %2309 = vrot.lane.b32.xlu0 %v525, 28
    %v2310 = vpop.permute.xlu0 %2309
    %2311 = vrot.lane.b32.xlu0 %v526, 28
    %v2312 = vpop.permute.xlu0 %2311
    %2313 = vrot.lane.b32.xlu0 %v527, 28
    %v2314 = vpop.permute.xlu0 %2313
    %2315 = vrot.lane.b32.xlu0 %v528, 28
    %v2316 = vpop.permute.xlu0 %2315
    %2317 = vrot.lane.b32.xlu0 %v529, 28
    %v2318 = vpop.permute.xlu0 %2317
    %2319 = vrot.lane.b32.xlu0 %v530, 28
    %v2320 = vpop.permute.xlu0 %2319
    %2321 = vrot.lane.b32.xlu0 %v531, 28
    %v2322 = vpop.permute.xlu0 %2321
    %2323 = vrot.lane.b32.xlu0 %v532, 28
    %v2324 = vpop.permute.xlu0 %2323
    %2453 = vrot.lane.b32.xlu0 %v533, 32
    %v2454 = vpop.permute.xlu0 %2453
    %2455 = vrot.lane.b32.xlu0 %v534, 32
    %v2456 = vpop.permute.xlu0 %2455
    %2457 = vrot.lane.b32.xlu0 %v535, 32
    %v2458 = vpop.permute.xlu0 %2457
    %2459 = vrot.lane.b32.xlu0 %v536, 32
    %v2460 = vpop.permute.xlu0 %2459
    %2461 = vrot.lane.b32.xlu0 %v537, 32
    %v2462 = vpop.permute.xlu0 %2461
    %2463 = vrot.lane.b32.xlu0 %v538, 32
    %v2464 = vpop.permute.xlu0 %2463
    %2465 = vrot.lane.b32.xlu0 %v539, 32
    %v2466 = vpop.permute.xlu0 %2465
    %2467 = vrot.lane.b32.xlu0 %v540, 32
    %v2468 = vpop.permute.xlu0 %2467
    %2469 = vrot.lane.b32.xlu0 %v541, 32
    %v2470 = vpop.permute.xlu0 %2469
    %2471 = vrot.lane.b32.xlu0 %v542, 32
    %v2472 = vpop.permute.xlu0 %2471
    %2473 = vrot.lane.b32.xlu0 %v543, 32
    %v2474 = vpop.permute.xlu0 %2473
    %2475 = vrot.lane.b32.xlu0 %v544, 32
    %v2476 = vpop.permute.xlu0 %2475
    %2477 = vrot.lane.b32.xlu0 %v545, 32
    %v2478 = vpop.permute.xlu0 %2477
    %2479 = vrot.lane.b32.xlu0 %v546, 32
    %v2480 = vpop.permute.xlu0 %2479
    %2481 = vrot.lane.b32.xlu0 %v547, 32
    %v2482 = vpop.permute.xlu0 %2481
    %2483 = vrot.lane.b32.xlu0 %v548, 32
    %v2484 = vpop.permute.xlu0 %2483
    %2485 = vrot.lane.b32.xlu0 %v549, 32
    %v2486 = vpop.permute.xlu0 %2485
    %2487 = vrot.lane.b32.xlu0 %v550, 32
    %v2488 = vpop.permute.xlu0 %2487
    %2489 = vrot.lane.b32.xlu0 %v551, 32
    %v2490 = vpop.permute.xlu0 %2489
    %2491 = vrot.lane.b32.xlu0 %v552, 32
    %v2492 = vpop.permute.xlu0 %2491
    %2493 = vrot.lane.b32.xlu0 %v553, 32
    %v2494 = vpop.permute.xlu0 %2493
    %2495 = vrot.lane.b32.xlu0 %v554, 32
    %v2496 = vpop.permute.xlu0 %2495
    %2497 = vrot.lane.b32.xlu0 %v555, 32
    %v2498 = vpop.permute.xlu0 %2497
    %2499 = vrot.lane.b32.xlu0 %v556, 32
    %v2500 = vpop.permute.xlu0 %2499
    %2501 = vrot.lane.b32.xlu0 %v557, 32
    %v2502 = vpop.permute.xlu0 %2501
    %2503 = vrot.lane.b32.xlu0 %v558, 32
    %v2504 = vpop.permute.xlu0 %2503
    %2505 = vrot.lane.b32.xlu0 %v559, 32
    %v2506 = vpop.permute.xlu0 %2505
    %2507 = vrot.lane.b32.xlu0 %v560, 32
    %v2508 = vpop.permute.xlu0 %2507
    %2509 = vrot.lane.b32.xlu0 %v561, 32
    %v2510 = vpop.permute.xlu0 %2509
    %2511 = vrot.lane.b32.xlu0 %v562, 32
    %v2512 = vpop.permute.xlu0 %2511
    %2513 = vrot.lane.b32.xlu0 %v563, 32
    %v2514 = vpop.permute.xlu0 %2513
    %2515 = vrot.lane.b32.xlu0 %v564, 32
    %v2516 = vpop.permute.xlu0 %2515
    %2517 = vrot.lane.b32.xlu0 %v565, 32
    %v2518 = vpop.permute.xlu0 %2517
    %2519 = vrot.lane.b32.xlu0 %v566, 32
    %v2520 = vpop.permute.xlu0 %2519
    %2521 = vrot.lane.b32.xlu0 %v567, 32
    %v2522 = vpop.permute.xlu0 %2521
    %2523 = vrot.lane.b32.xlu0 %v568, 32
    %v2524 = vpop.permute.xlu0 %2523
    %2525 = vrot.lane.b32.xlu0 %v569, 32
    %v2526 = vpop.permute.xlu0 %2525
    %2527 = vrot.lane.b32.xlu0 %v570, 32
    %v2528 = vpop.permute.xlu0 %2527
    %2529 = vrot.lane.b32.xlu0 %v571, 32
    %v2530 = vpop.permute.xlu0 %2529
    %2531 = vrot.lane.b32.xlu0 %v572, 32
    %v2532 = vpop.permute.xlu0 %2531
    %2533 = vrot.lane.b32.xlu0 %v573, 32
    %v2534 = vpop.permute.xlu0 %2533
    %2535 = vrot.lane.b32.xlu0 %v574, 32
    %v2536 = vpop.permute.xlu0 %2535
    %2537 = vrot.lane.b32.xlu0 %v575, 32
    %v2538 = vpop.permute.xlu0 %2537
    %2539 = vrot.lane.b32.xlu0 %v576, 32
    %v2540 = vpop.permute.xlu0 %2539
    %2541 = vrot.lane.b32.xlu0 %v577, 32
    %v2542 = vpop.permute.xlu0 %2541
    %2543 = vrot.lane.b32.xlu0 %v578, 32
    %v2544 = vpop.permute.xlu0 %2543
    %2545 = vrot.lane.b32.xlu0 %v579, 32
    %v2546 = vpop.permute.xlu0 %2545
    %2547 = vrot.lane.b32.xlu0 %v580, 32
    %v2548 = vpop.permute.xlu0 %2547
    %2549 = vrot.lane.b32.xlu0 %v581, 32
    %v2550 = vpop.permute.xlu0 %2549
    %2551 = vrot.lane.b32.xlu0 %v582, 32
    %v2552 = vpop.permute.xlu0 %2551
    %2553 = vrot.lane.b32.xlu0 %v583, 32
    %v2554 = vpop.permute.xlu0 %2553
    %2555 = vrot.lane.b32.xlu0 %v584, 32
    %v2556 = vpop.permute.xlu0 %2555
    %2557 = vrot.lane.b32.xlu0 %v585, 32
    %v2558 = vpop.permute.xlu0 %2557
    %2559 = vrot.lane.b32.xlu0 %v586, 32
    %v2560 = vpop.permute.xlu0 %2559
    %2561 = vrot.lane.b32.xlu0 %v587, 32
    %v2562 = vpop.permute.xlu0 %2561
    %2563 = vrot.lane.b32.xlu0 %v588, 32
    %v2564 = vpop.permute.xlu0 %2563
    %2565 = vrot.lane.b32.xlu0 %v589, 32
    %v2566 = vpop.permute.xlu0 %2565
    %2567 = vrot.lane.b32.xlu0 %v590, 32
    %v2568 = vpop.permute.xlu0 %2567
    %2569 = vrot.lane.b32.xlu0 %v591, 32
    %v2570 = vpop.permute.xlu0 %2569
    %2571 = vrot.lane.b32.xlu0 %v592, 32
    %v2572 = vpop.permute.xlu0 %2571
    %2573 = vrot.lane.b32.xlu0 %v593, 32
    %v2574 = vpop.permute.xlu0 %2573
    %2575 = vrot.lane.b32.xlu0 %v594, 32
    %v2576 = vpop.permute.xlu0 %2575
    %2577 = vrot.lane.b32.xlu0 %v595, 32
    %v2578 = vpop.permute.xlu0 %2577
    %2579 = vrot.lane.b32.xlu0 %v596, 32
    %v2580 = vpop.permute.xlu0 %2579
    %vm2645 = vcmask 31744
    %v2646 = vsel %vm2645, %v19, %v662
    %v2647 = vsel %vm2645, %v20, %v664
    %v2648 = vsel %vm2645, %v21, %v666
    %v2649 = vsel %vm2645, %v22, %v668
    %v2650 = vsel %vm2645, %v23, %v670
    %v2651 = vsel %vm2645, %v24, %v672
    %v2652 = vsel %vm2645, %v25, %v674
    %v2653 = vsel %vm2645, %v26, %v676
    %v2654 = vsel %vm2645, %v27, %v678
    %v2655 = vsel %vm2645, %v28, %v680
    %v2656 = vsel %vm2645, %v29, %v682
    %v2657 = vsel %vm2645, %v30, %v684
    %v2658 = vsel %vm2645, %v31, %v686
    %v2659 = vsel %vm2645, %v32, %v688
    %v2660 = vsel %vm2645, %v33, %v690
    %v2661 = vsel %vm2645, %v34, %v692
    %v2662 = vsel %vm2645, %v35, %v694
    %v2663 = vsel %vm2645, %v36, %v696
    %v2664 = vsel %vm2645, %v37, %v698
    %v2665 = vsel %vm2645, %v38, %v700
    %v2666 = vsel %vm2645, %v39, %v702
    %v2667 = vsel %vm2645, %v40, %v704
    %v2668 = vsel %vm2645, %v41, %v706
    %v2669 = vsel %vm2645, %v42, %v708
    %v2670 = vsel %vm2645, %v43, %v710
    %v2671 = vsel %vm2645, %v44, %v712
    %v2672 = vsel %vm2645, %v45, %v714
    %v2673 = vsel %vm2645, %v46, %v716
    %v2674 = vsel %vm2645, %v47, %v718
    %v2675 = vsel %vm2645, %v48, %v720
    %v2676 = vsel %vm2645, %v49, %v722
    %v2677 = vsel %vm2645, %v50, %v724
    %v2678 = vsel %vm2645, %v51, %v726
    %v2679 = vsel %vm2645, %v52, %v728
    %v2680 = vsel %vm2645, %v53, %v730
    %v2681 = vsel %vm2645, %v54, %v732
    %v2682 = vsel %vm2645, %v55, %v734
    %v2683 = vsel %vm2645, %v56, %v736
    %v2684 = vsel %vm2645, %v57, %v738
    %v2685 = vsel %vm2645, %v58, %v740
    %v2686 = vsel %vm2645, %v59, %v742
    %v2687 = vsel %vm2645, %v60, %v744
    %v2688 = vsel %vm2645, %v61, %v746
    %v2689 = vsel %vm2645, %v62, %v748
    %v2690 = vsel %vm2645, %v63, %v750
    %v2691 = vsel %vm2645, %v64, %v752
    %v2692 = vsel %vm2645, %v65, %v754
    %v2693 = vsel %vm2645, %v66, %v756
    %v2694 = vsel %vm2645, %v67, %v758
    %v2695 = vsel %vm2645, %v68, %v760
    %v2696 = vsel %vm2645, %v69, %v762
    %v2697 = vsel %vm2645, %v70, %v764
    %v2698 = vsel %vm2645, %v71, %v766
    %v2699 = vsel %vm2645, %v72, %v768
    %v2700 = vsel %vm2645, %v73, %v770
    %v2701 = vsel %vm2645, %v74, %v772
    %v2702 = vsel %vm2645, %v75, %v774
    %v2703 = vsel %vm2645, %v76, %v776
    %v2704 = vsel %vm2645, %v77, %v778
    %v2705 = vsel %vm2645, %v78, %v780
    %v2706 = vsel %vm2645, %v79, %v782
    %v2707 = vsel %vm2645, %v80, %v784
    %v2708 = vsel %vm2645, %v81, %v786
    %v2709 = vsel %vm2645, %v82, %v788
    %vm2710 = vcmask 64512
    %v2711 = vsel %vm2710, %v2646, %v918
    %v2712 = vsel %vm2710, %v2647, %v920
    %v2713 = vsel %vm2710, %v2648, %v922
    %v2714 = vsel %vm2710, %v2649, %v924
    %v2715 = vsel %vm2710, %v2650, %v926
    %v2716 = vsel %vm2710, %v2651, %v928
    %v2717 = vsel %vm2710, %v2652, %v930
    %v2718 = vsel %vm2710, %v2653, %v932
    %v2719 = vsel %vm2710, %v2654, %v934
    %v2720 = vsel %vm2710, %v2655, %v936
    %v2721 = vsel %vm2710, %v2656, %v938
    %v2722 = vsel %vm2710, %v2657, %v940
    %v2723 = vsel %vm2710, %v2658, %v942
    %v2724 = vsel %vm2710, %v2659, %v944
    %v2725 = vsel %vm2710, %v2660, %v946
    %v2726 = vsel %vm2710, %v2661, %v948
    %v2727 = vsel %vm2710, %v2662, %v950
    %v2728 = vsel %vm2710, %v2663, %v952
    %v2729 = vsel %vm2710, %v2664, %v954
    %v2730 = vsel %vm2710, %v2665, %v956
    %v2731 = vsel %vm2710, %v2666, %v958
    %v2732 = vsel %vm2710, %v2667, %v960
    %v2733 = vsel %vm2710, %v2668, %v962
    %v2734 = vsel %vm2710, %v2669, %v964
    %v2735 = vsel %vm2710, %v2670, %v966
    %v2736 = vsel %vm2710, %v2671, %v968
    %v2737 = vsel %vm2710, %v2672, %v970
    %v2738 = vsel %vm2710, %v2673, %v972
    %v2739 = vsel %vm2710, %v2674, %v974
    %v2740 = vsel %vm2710, %v2675, %v976
    %v2741 = vsel %vm2710, %v2676, %v978
    %v2742 = vsel %vm2710, %v2677, %v980
    %v2743 = vsel %vm2710, %v2678, %v982
    %v2744 = vsel %vm2710, %v2679, %v984
    %v2745 = vsel %vm2710, %v2680, %v986
    %v2746 = vsel %vm2710, %v2681, %v988
    %v2747 = vsel %vm2710, %v2682, %v990
    %v2748 = vsel %vm2710, %v2683, %v992
    %v2749 = vsel %vm2710, %v2684, %v994
    %v2750 = vsel %vm2710, %v2685, %v996
    %v2751 = vsel %vm2710, %v2686, %v998
    %v2752 = vsel %vm2710, %v2687, %v1000
    %v2753 = vsel %vm2710, %v2688, %v1002
    %v2754 = vsel %vm2710, %v2689, %v1004
    %v2755 = vsel %vm2710, %v2690, %v1006
    %v2756 = vsel %vm2710, %v2691, %v1008
    %v2757 = vsel %vm2710, %v2692, %v1010
    %v2758 = vsel %vm2710, %v2693, %v1012
    %v2759 = vsel %vm2710, %v2694, %v1014
    %v2760 = vsel %vm2710, %v2695, %v1016
    %v2761 = vsel %vm2710, %v2696, %v1018
    %v2762 = vsel %vm2710, %v2697, %v1020
    %v2763 = vsel %vm2710, %v2698, %v1022
    %v2764 = vsel %vm2710, %v2699, %v1024
    %v2765 = vsel %vm2710, %v2700, %v1026
    %v2766 = vsel %vm2710, %v2701, %v1028
    %v2767 = vsel %vm2710, %v2702, %v1030
    %v2768 = vsel %vm2710, %v2703, %v1032
    %v2769 = vsel %vm2710, %v2704, %v1034
    %v2770 = vsel %vm2710, %v2705, %v1036
    %v2771 = vsel %vm2710, %v2706, %v1038
    %v2772 = vsel %vm2710, %v2707, %v1040
    %v2773 = vsel %vm2710, %v2708, %v1042
    %v2774 = vsel %vm2710, %v2709, %v1044
    %vm2775 = vcmask 97280
    %v2776 = vsel %vm2775, %v2711, %v1174
    %v2777 = vsel %vm2775, %v2712, %v1176
    %v2778 = vsel %vm2775, %v2713, %v1178
    %v2779 = vsel %vm2775, %v2714, %v1180
    %v2780 = vsel %vm2775, %v2715, %v1182
    %v2781 = vsel %vm2775, %v2716, %v1184
    %v2782 = vsel %vm2775, %v2717, %v1186
    %v2783 = vsel %vm2775, %v2718, %v1188
    %v2784 = vsel %vm2775, %v2719, %v1190
    %v2785 = vsel %vm2775, %v2720, %v1192
    %v2786 = vsel %vm2775, %v2721, %v1194
    %v2787 = vsel %vm2775, %v2722, %v1196
    %v2788 = vsel %vm2775, %v2723, %v1198
    %v2789 = vsel %vm2775, %v2724, %v1200
    %v2790 = vsel %vm2775, %v2725, %v1202
    %v2791 = vsel %vm2775, %v2726, %v1204
    %v2792 = vsel %vm2775, %v2727, %v1206
    %v2793 = vsel %vm2775, %v2728, %v1208
    %v2794 = vsel %vm2775, %v2729, %v1210
    %v2795 = vsel %vm2775, %v2730, %v1212
    %v2796 = vsel %vm2775, %v2731, %v1214
    %v2797 = vsel %vm2775, %v2732, %v1216
    %v2798 = vsel %vm2775, %v2733, %v1218
    %v2799 = vsel %vm2775, %v2734, %v1220
    %v2800 = vsel %vm2775, %v2735, %v1222
    %v2801 = vsel %vm2775, %v2736, %v1224
    %v2802 = vsel %vm2775, %v2737, %v1226
    %v2803 = vsel %vm2775, %v2738, %v1228
    %v2804 = vsel %vm2775, %v2739, %v1230
    %v2805 = vsel %vm2775, %v2740, %v1232
    %v2806 = vsel %vm2775, %v2741, %v1234
    %v2807 = vsel %vm2775, %v2742, %v1236
    %v2808 = vsel %vm2775, %v2743, %v1238
    %v2809 = vsel %vm2775, %v2744, %v1240
    %v2810 = vsel %vm2775, %v2745, %v1242
    %v2811 = vsel %vm2775, %v2746, %v1244
    %v2812 = vsel %vm2775, %v2747, %v1246
    %v2813 = vsel %vm2775, %v2748, %v1248
    %v2814 = vsel %vm2775, %v2749, %v1250
    %v2815 = vsel %vm2775, %v2750, %v1252
    %v2816 = vsel %vm2775, %v2751, %v1254
    %v2817 = vsel %vm2775, %v2752, %v1256
    %v2818 = vsel %vm2775, %v2753, %v1258
    %v2819 = vsel %vm2775, %v2754, %v1260
    %v2820 = vsel %vm2775, %v2755, %v1262
    %v2821 = vsel %vm2775, %v2756, %v1264
    %v2822 = vsel %vm2775, %v2757, %v1266
    %v2823 = vsel %vm2775, %v2758, %v1268
    %v2824 = vsel %vm2775, %v2759, %v1270
    %v2825 = vsel %vm2775, %v2760, %v1272
    %v2826 = vsel %vm2775, %v2761, %v1274
    %v2827 = vsel %vm2775, %v2762, %v1276
    %v2828 = vsel %vm2775, %v2763, %v1278
    %v2829 = vsel %vm2775, %v2764, %v1280
    %v2830 = vsel %vm2775, %v2765, %v1282
    %v2831 = vsel %vm2775, %v2766, %v1284
    %v2832 = vsel %vm2775, %v2767, %v1286
    %v2833 = vsel %vm2775, %v2768, %v1288
    %v2834 = vsel %vm2775, %v2769, %v1290
    %v2835 = vsel %vm2775, %v2770, %v1292
    %v2836 = vsel %vm2775, %v2771, %v1294
    %v2837 = vsel %vm2775, %v2772, %v1296
    %v2838 = vsel %vm2775, %v2773, %v1298
    %v2839 = vsel %vm2775, %v2774, %v1300
    %vm2840 = vcmask 130048
    %v2841 = vsel %vm2840, %v2776, %v1430
    %v2842 = vsel %vm2840, %v2777, %v1432
    %v2843 = vsel %vm2840, %v2778, %v1434
    %v2844 = vsel %vm2840, %v2779, %v1436
    %v2845 = vsel %vm2840, %v2780, %v1438
    %v2846 = vsel %vm2840, %v2781, %v1440
    %v2847 = vsel %vm2840, %v2782, %v1442
    %v2848 = vsel %vm2840, %v2783, %v1444
    %v2849 = vsel %vm2840, %v2784, %v1446
    %v2850 = vsel %vm2840, %v2785, %v1448
    %v2851 = vsel %vm2840, %v2786, %v1450
    %v2852 = vsel %vm2840, %v2787, %v1452
    %v2853 = vsel %vm2840, %v2788, %v1454
    %v2854 = vsel %vm2840, %v2789, %v1456
    %v2855 = vsel %vm2840, %v2790, %v1458
    %v2856 = vsel %vm2840, %v2791, %v1460
    %v2857 = vsel %vm2840, %v2792, %v1462
    %v2858 = vsel %vm2840, %v2793, %v1464
    %v2859 = vsel %vm2840, %v2794, %v1466
    %v2860 = vsel %vm2840, %v2795, %v1468
    %v2861 = vsel %vm2840, %v2796, %v1470
    %v2862 = vsel %vm2840, %v2797, %v1472
    %v2863 = vsel %vm2840, %v2798, %v1474
    %v2864 = vsel %vm2840, %v2799, %v1476
    %v2865 = vsel %vm2840, %v2800, %v1478
    %v2866 = vsel %vm2840, %v2801, %v1480
    %v2867 = vsel %vm2840, %v2802, %v1482
    %v2868 = vsel %vm2840, %v2803, %v1484
    %v2869 = vsel %vm2840, %v2804, %v1486
    %v2870 = vsel %vm2840, %v2805, %v1488
    %v2871 = vsel %vm2840, %v2806, %v1490
    %v2872 = vsel %vm2840, %v2807, %v1492
    %v2873 = vsel %vm2840, %v2808, %v1494
    %v2874 = vsel %vm2840, %v2809, %v1496
    %v2875 = vsel %vm2840, %v2810, %v1498
    %v2876 = vsel %vm2840, %v2811, %v1500
    %v2877 = vsel %vm2840, %v2812, %v1502
    %v2878 = vsel %vm2840, %v2813, %v1504
    %v2879 = vsel %vm2840, %v2814, %v1506
    %v2880 = vsel %vm2840, %v2815, %v1508
    %v2881 = vsel %vm2840, %v2816, %v1510
    %v2882 = vsel %vm2840, %v2817, %v1512
    %v2883 = vsel %vm2840, %v2818, %v1514
    %v2884 = vsel %vm2840, %v2819, %v1516
    %v2885 = vsel %vm2840, %v2820, %v1518
    %v2886 = vsel %vm2840, %v2821, %v1520
    %v2887 = vsel %vm2840, %v2822, %v1522
    %v2888 = vsel %vm2840, %v2823, %v1524
    %v2889 = vsel %vm2840, %v2824, %v1526
    %v2890 = vsel %vm2840, %v2825, %v1528
    %v2891 = vsel %vm2840, %v2826, %v1530
    %v2892 = vsel %vm2840, %v2827, %v1532
    %v2893 = vsel %vm2840, %v2828, %v1534
    %v2894 = vsel %vm2840, %v2829, %v1536
    %v2895 = vsel %vm2840, %v2830, %v1538
    %v2896 = vsel %vm2840, %v2831, %v1540
    %v2897 = vsel %vm2840, %v2832, %v1542
    %v2898 = vsel %vm2840, %v2833, %v1544
    %v2899 = vsel %vm2840, %v2834, %v1546
    %v2900 = vsel %vm2840, %v2835, %v1548
    %v2901 = vsel %vm2840, %v2836, %v1550
    %v2902 = vsel %vm2840, %v2837, %v1552
    %v2903 = vsel %vm2840, %v2838, %v1554
    %v2904 = vsel %vm2840, %v2839, %v1556
    %vm2905 = vcmask 162816
    %v2906 = vsel %vm2905, %v2841, %v1686
    %v2907 = vsel %vm2905, %v2842, %v1688
    %v2908 = vsel %vm2905, %v2843, %v1690
    %v2909 = vsel %vm2905, %v2844, %v1692
    %v2910 = vsel %vm2905, %v2845, %v1694
    %v2911 = vsel %vm2905, %v2846, %v1696
    %v2912 = vsel %vm2905, %v2847, %v1698
    %v2913 = vsel %vm2905, %v2848, %v1700
    %v2914 = vsel %vm2905, %v2849, %v1702
    %v2915 = vsel %vm2905, %v2850, %v1704
    %v2916 = vsel %vm2905, %v2851, %v1706
    %v2917 = vsel %vm2905, %v2852, %v1708
    %v2918 = vsel %vm2905, %v2853, %v1710
    %v2919 = vsel %vm2905, %v2854, %v1712
    %v2920 = vsel %vm2905, %v2855, %v1714
    %v2921 = vsel %vm2905, %v2856, %v1716
    %v2922 = vsel %vm2905, %v2857, %v1718
    %v2923 = vsel %vm2905, %v2858, %v1720
    %v2924 = vsel %vm2905, %v2859, %v1722
    %v2925 = vsel %vm2905, %v2860, %v1724
    %v2926 = vsel %vm2905, %v2861, %v1726
    %v2927 = vsel %vm2905, %v2862, %v1728
    %v2928 = vsel %vm2905, %v2863, %v1730
    %v2929 = vsel %vm2905, %v2864, %v1732
    %v2930 = vsel %vm2905, %v2865, %v1734
    %v2931 = vsel %vm2905, %v2866, %v1736
    %v2932 = vsel %vm2905, %v2867, %v1738
    %v2933 = vsel %vm2905, %v2868, %v1740
    %v2934 = vsel %vm2905, %v2869, %v1742
    %v2935 = vsel %vm2905, %v2870, %v1744
    %v2936 = vsel %vm2905, %v2871, %v1746
    %v2937 = vsel %vm2905, %v2872, %v1748
    %v2938 = vsel %vm2905, %v2873, %v1750
    %v2939 = vsel %vm2905, %v2874, %v1752
    %v2940 = vsel %vm2905, %v2875, %v1754
    %v2941 = vsel %vm2905, %v2876, %v1756
    %v2942 = vsel %vm2905, %v2877, %v1758
    %v2943 = vsel %vm2905, %v2878, %v1760
    %v2944 = vsel %vm2905, %v2879, %v1762
    %v2945 = vsel %vm2905, %v2880, %v1764
    %v2946 = vsel %vm2905, %v2881, %v1766
    %v2947 = vsel %vm2905, %v2882, %v1768
    %v2948 = vsel %vm2905, %v2883, %v1770
    %v2949 = vsel %vm2905, %v2884, %v1772
    %v2950 = vsel %vm2905, %v2885, %v1774
    %v2951 = vsel %vm2905, %v2886, %v1776
    %v2952 = vsel %vm2905, %v2887, %v1778
    %v2953 = vsel %vm2905, %v2888, %v1780
    %v2954 = vsel %vm2905, %v2889, %v1782
    %v2955 = vsel %vm2905, %v2890, %v1784
    %v2956 = vsel %vm2905, %v2891, %v1786
    %v2957 = vsel %vm2905, %v2892, %v1788
    %v2958 = vsel %vm2905, %v2893, %v1790
    %v2959 = vsel %vm2905, %v2894, %v1792
    %v2960 = vsel %vm2905, %v2895, %v1794
    %v2961 = vsel %vm2905, %v2896, %v1796
    %v2962 = vsel %vm2905, %v2897, %v1798
    %v2963 = vsel %vm2905, %v2898, %v1800
    %v2964 = vsel %vm2905, %v2899, %v1802
    %v2965 = vsel %vm2905, %v2900, %v1804
    %v2966 = vsel %vm2905, %v2901, %v1806
    %v2967 = vsel %vm2905, %v2902, %v1808
    %v2968 = vsel %vm2905, %v2903, %v1810
    %v2969 = vsel %vm2905, %v2904, %v1812
    %vm2970 = vcmask 195584
    %v2971 = vsel %vm2970, %v2906, %v1942
    %v2972 = vsel %vm2970, %v2907, %v1944
    %v2973 = vsel %vm2970, %v2908, %v1946
    %v2974 = vsel %vm2970, %v2909, %v1948
    %v2975 = vsel %vm2970, %v2910, %v1950
    %v2976 = vsel %vm2970, %v2911, %v1952
    %v2977 = vsel %vm2970, %v2912, %v1954
    %v2978 = vsel %vm2970, %v2913, %v1956
    %v2979 = vsel %vm2970, %v2914, %v1958
    %v2980 = vsel %vm2970, %v2915, %v1960
    %v2981 = vsel %vm2970, %v2916, %v1962
    %v2982 = vsel %vm2970, %v2917, %v1964
    %v2983 = vsel %vm2970, %v2918, %v1966
    %v2984 = vsel %vm2970, %v2919, %v1968
    %v2985 = vsel %vm2970, %v2920, %v1970
    %v2986 = vsel %vm2970, %v2921, %v1972
    %v2987 = vsel %vm2970, %v2922, %v1974
    %v2988 = vsel %vm2970, %v2923, %v1976
    %v2989 = vsel %vm2970, %v2924, %v1978
    %v2990 = vsel %vm2970, %v2925, %v1980
    %v2991 = vsel %vm2970, %v2926, %v1982
    %v2992 = vsel %vm2970, %v2927, %v1984
    %v2993 = vsel %vm2970, %v2928, %v1986
    %v2994 = vsel %vm2970, %v2929, %v1988
    %v2995 = vsel %vm2970, %v2930, %v1990
    %v2996 = vsel %vm2970, %v2931, %v1992
    %v2997 = vsel %vm2970, %v2932, %v1994
    %v2998 = vsel %vm2970, %v2933, %v1996
    %v2999 = vsel %vm2970, %v2934, %v1998
    %v3000 = vsel %vm2970, %v2935, %v2000
    %v3001 = vsel %vm2970, %v2936, %v2002
    %v3002 = vsel %vm2970, %v2937, %v2004
    %v3003 = vsel %vm2970, %v2938, %v2006
    %v3004 = vsel %vm2970, %v2939, %v2008
    %v3005 = vsel %vm2970, %v2940, %v2010
    %v3006 = vsel %vm2970, %v2941, %v2012
    %v3007 = vsel %vm2970, %v2942, %v2014
    %v3008 = vsel %vm2970, %v2943, %v2016
    %v3009 = vsel %vm2970, %v2944, %v2018
    %v3010 = vsel %vm2970, %v2945, %v2020
    %v3011 = vsel %vm2970, %v2946, %v2022
    %v3012 = vsel %vm2970, %v2947, %v2024
    %v3013 = vsel %vm2970, %v2948, %v2026
    %v3014 = vsel %vm2970, %v2949, %v2028
    %v3015 = vsel %vm2970, %v2950, %v2030
    %v3016 = vsel %vm2970, %v2951, %v2032
    %v3017 = vsel %vm2970, %v2952, %v2034
    %v3018 = vsel %vm2970, %v2953, %v2036
    %v3019 = vsel %vm2970, %v2954, %v2038
    %v3020 = vsel %vm2970, %v2955, %v2040
    %v3021 = vsel %vm2970, %v2956, %v2042
    %v3022 = vsel %vm2970, %v2957, %v2044
    %v3023 = vsel %vm2970, %v2958, %v2046
    %v3024 = vsel %vm2970, %v2959, %v2048
    %v3025 = vsel %vm2970, %v2960, %v2050
    %v3026 = vsel %vm2970, %v2961, %v2052
    %v3027 = vsel %vm2970, %v2962, %v2054
    %v3028 = vsel %vm2970, %v2963, %v2056
    %v3029 = vsel %vm2970, %v2964, %v2058
    %v3030 = vsel %vm2970, %v2965, %v2060
    %v3031 = vsel %vm2970, %v2966, %v2062
    %v3032 = vsel %vm2970, %v2967, %v2064
    %v3033 = vsel %vm2970, %v2968, %v2066
    %v3034 = vsel %vm2970, %v2969, %v2068
    %vm3035 = vcmask 228352
    %v3036 = vsel %vm3035, %v2971, %v2198
    %v3037 = vsel %vm3035, %v2972, %v2200
    %v3038 = vsel %vm3035, %v2973, %v2202
    %v3039 = vsel %vm3035, %v2974, %v2204
    %v3040 = vsel %vm3035, %v2975, %v2206
    %v3041 = vsel %vm3035, %v2976, %v2208
    %v3042 = vsel %vm3035, %v2977, %v2210
    %v3043 = vsel %vm3035, %v2978, %v2212
    %v3044 = vsel %vm3035, %v2979, %v2214
    %v3045 = vsel %vm3035, %v2980, %v2216
    %v3046 = vsel %vm3035, %v2981, %v2218
    %v3047 = vsel %vm3035, %v2982, %v2220
    %v3048 = vsel %vm3035, %v2983, %v2222
    %v3049 = vsel %vm3035, %v2984, %v2224
    %v3050 = vsel %vm3035, %v2985, %v2226
    %v3051 = vsel %vm3035, %v2986, %v2228
    %v3052 = vsel %vm3035, %v2987, %v2230
    %v3053 = vsel %vm3035, %v2988, %v2232
    %v3054 = vsel %vm3035, %v2989, %v2234
    %v3055 = vsel %vm3035, %v2990, %v2236
    %v3056 = vsel %vm3035, %v2991, %v2238
    %v3057 = vsel %vm3035, %v2992, %v2240
    %v3058 = vsel %vm3035, %v2993, %v2242
    %v3059 = vsel %vm3035, %v2994, %v2244
    %v3060 = vsel %vm3035, %v2995, %v2246
    %v3061 = vsel %vm3035, %v2996, %v2248
    %v3062 = vsel %vm3035, %v2997, %v2250
    %v3063 = vsel %vm3035, %v2998, %v2252
    %v3064 = vsel %vm3035, %v2999, %v2254
    %v3065 = vsel %vm3035, %v3000, %v2256
    %v3066 = vsel %vm3035, %v3001, %v2258
    %v3067 = vsel %vm3035, %v3002, %v2260
    %v3068 = vsel %vm3035, %v3003, %v2262
    %v3069 = vsel %vm3035, %v3004, %v2264
    %v3070 = vsel %vm3035, %v3005, %v2266
    %v3071 = vsel %vm3035, %v3006, %v2268
    %v3072 = vsel %vm3035, %v3007, %v2270
    %v3073 = vsel %vm3035, %v3008, %v2272
    %v3074 = vsel %vm3035, %v3009, %v2274
    %v3075 = vsel %vm3035, %v3010, %v2276
    %v3076 = vsel %vm3035, %v3011, %v2278
    %v3077 = vsel %vm3035, %v3012, %v2280
    %v3078 = vsel %vm3035, %v3013, %v2282
    %v3079 = vsel %vm3035, %v3014, %v2284
    %v3080 = vsel %vm3035, %v3015, %v2286
    %v3081 = vsel %vm3035, %v3016, %v2288
    %v3082 = vsel %vm3035, %v3017, %v2290
    %v3083 = vsel %vm3035, %v3018, %v2292
    %v3084 = vsel %vm3035, %v3019, %v2294
    %v3085 = vsel %vm3035, %v3020, %v2296
    %v3086 = vsel %vm3035, %v3021, %v2298
    %v3087 = vsel %vm3035, %v3022, %v2300
    %v3088 = vsel %vm3035, %v3023, %v2302
    %v3089 = vsel %vm3035, %v3024, %v2304
    %v3090 = vsel %vm3035, %v3025, %v2306
    %v3091 = vsel %vm3035, %v3026, %v2308
    %v3092 = vsel %vm3035, %v3027, %v2310
    %v3093 = vsel %vm3035, %v3028, %v2312
    %v3094 = vsel %vm3035, %v3029, %v2314
    %v3095 = vsel %vm3035, %v3030, %v2316
    %v3096 = vsel %vm3035, %v3031, %v2318
    %v3097 = vsel %vm3035, %v3032, %v2320
    %v3098 = vsel %vm3035, %v3033, %v2322
    %v3099 = vsel %vm3035, %v3034, %v2324
    %vm3100 = vcmask 261120
    %v3101 = vsel %vm3100, %v3036, %v2454
    %v3102 = vsel %vm3100, %v3037, %v2456
    %v3103 = vsel %vm3100, %v3038, %v2458
    %v3104 = vsel %vm3100, %v3039, %v2460
    %v3105 = vsel %vm3100, %v3040, %v2462
    %v3106 = vsel %vm3100, %v3041, %v2464
    %v3107 = vsel %vm3100, %v3042, %v2466
    %v3108 = vsel %vm3100, %v3043, %v2468
    %v3109 = vsel %vm3100, %v3044, %v2470
    %v3110 = vsel %vm3100, %v3045, %v2472
    %v3111 = vsel %vm3100, %v3046, %v2474
    %v3112 = vsel %vm3100, %v3047, %v2476
    %v3113 = vsel %vm3100, %v3048, %v2478
    %v3114 = vsel %vm3100, %v3049, %v2480
    %v3115 = vsel %vm3100, %v3050, %v2482
    %v3116 = vsel %vm3100, %v3051, %v2484
    %v3117 = vsel %vm3100, %v3052, %v2486
    %v3118 = vsel %vm3100, %v3053, %v2488
    %v3119 = vsel %vm3100, %v3054, %v2490
    %v3120 = vsel %vm3100, %v3055, %v2492
    %v3121 = vsel %vm3100, %v3056, %v2494
    %v3122 = vsel %vm3100, %v3057, %v2496
    %v3123 = vsel %vm3100, %v3058, %v2498
    %v3124 = vsel %vm3100, %v3059, %v2500
    %v3125 = vsel %vm3100, %v3060, %v2502
    %v3126 = vsel %vm3100, %v3061, %v2504
    %v3127 = vsel %vm3100, %v3062, %v2506
    %v3128 = vsel %vm3100, %v3063, %v2508
    %v3129 = vsel %vm3100, %v3064, %v2510
    %v3130 = vsel %vm3100, %v3065, %v2512
    %v3131 = vsel %vm3100, %v3066, %v2514
    %v3132 = vsel %vm3100, %v3067, %v2516
    %v3133 = vsel %vm3100, %v3068, %v2518
    %v3134 = vsel %vm3100, %v3069, %v2520
    %v3135 = vsel %vm3100, %v3070, %v2522
    %v3136 = vsel %vm3100, %v3071, %v2524
    %v3137 = vsel %vm3100, %v3072, %v2526
    %v3138 = vsel %vm3100, %v3073, %v2528
    %v3139 = vsel %vm3100, %v3074, %v2530
    %v3140 = vsel %vm3100, %v3075, %v2532
    %v3141 = vsel %vm3100, %v3076, %v2534
    %v3142 = vsel %vm3100, %v3077, %v2536
    %v3143 = vsel %vm3100, %v3078, %v2538
    %v3144 = vsel %vm3100, %v3079, %v2540
    %v3145 = vsel %vm3100, %v3080, %v2542
    %v3146 = vsel %vm3100, %v3081, %v2544
    %v3147 = vsel %vm3100, %v3082, %v2546
    %v3148 = vsel %vm3100, %v3083, %v2548
    %v3149 = vsel %vm3100, %v3084, %v2550
    %v3150 = vsel %vm3100, %v3085, %v2552
    %v3151 = vsel %vm3100, %v3086, %v2554
    %v3152 = vsel %vm3100, %v3087, %v2556
    %v3153 = vsel %vm3100, %v3088, %v2558
    %v3154 = vsel %vm3100, %v3089, %v2560
    %v3155 = vsel %vm3100, %v3090, %v2562
    %v3156 = vsel %vm3100, %v3091, %v2564
    %v3157 = vsel %vm3100, %v3092, %v2566
    %v3158 = vsel %vm3100, %v3093, %v2568
    %v3159 = vsel %vm3100, %v3094, %v2570
    %v3160 = vsel %vm3100, %v3095, %v2572
    %v3161 = vsel %vm3100, %v3096, %v2574
    %v3162 = vsel %vm3100, %v3097, %v2576
    %v3163 = vsel %vm3100, %v3098, %v2578
    %v3164 = vsel %vm3100, %v3099, %v2580
    %v3165 = vpack.c.bf16 %v3102, %v3101
    %v3166 = vpack.c.bf16 %v3104, %v3103
    %v3167 = vpack.c.bf16 %v3106, %v3105
    %v3168 = vpack.c.bf16 %v3108, %v3107
    %v3169 = vpack.c.bf16 %v3110, %v3109
    %v3170 = vpack.c.bf16 %v3112, %v3111
    %v3171 = vpack.c.bf16 %v3114, %v3113
    %v3172 = vpack.c.bf16 %v3116, %v3115
    %v3173 = vpack.c.bf16 %v3118, %v3117
    %v3174 = vpack.c.bf16 %v3120, %v3119
    %v3175 = vpack.c.bf16 %v3122, %v3121
    %v3176 = vpack.c.bf16 %v3124, %v3123
    %v3177 = vpack.c.bf16 %v3126, %v3125
    %v3178 = vpack.c.bf16 %v3128, %v3127
    %v3179 = vpack.c.bf16 %v3130, %v3129
    %v3180 = vpack.c.bf16 %v3132, %v3131
    %v3181 = vpack.c.bf16 %v3134, %v3133
    %v3182 = vpack.c.bf16 %v3136, %v3135
    %v3183 = vpack.c.bf16 %v3138, %v3137
    %v3184 = vpack.c.bf16 %v3140, %v3139
    %v3185 = vpack.c.bf16 %v3142, %v3141
    %v3186 = vpack.c.bf16 %v3144, %v3143
    %v3187 = vpack.c.bf16 %v3146, %v3145
    %v3188 = vpack.c.bf16 %v3148, %v3147
    %v3189 = vpack.c.bf16 %v3150, %v3149
    %v3190 = vpack.c.bf16 %v3152, %v3151
    %v3191 = vpack.c.bf16 %v3154, %v3153
    %v3192 = vpack.c.bf16 %v3156, %v3155
    %v3193 = vpack.c.bf16 %v3158, %v3157
    %v3194 = vpack.c.bf16 %v3160, %v3159
    %v3195 = vpack.c.bf16 %v3162, %v3161
    %v3196 = vpack.c.bf16 %v3164, %v3163
    %v3197 = vld [vmem:[%s1] sm:$0xf]
    %v3198 = vld [vmem:[%s1 + $0x4] sm:$0xf]
    %v3199 = vld [vmem:[%s1 + $0x8] sm:$0xf]
    %v3200 = vld [vmem:[%s1 + $0xc] sm:$0xf]
    %v3201 = vld [vmem:[%s1 + $0x10] sm:$0x3]
    %v3207 = vunpack.c.l.b16 %v3197
    %v3208 = vunpack.c.l.b16 %v3198
    %v3209 = vunpack.c.l.b16 %v3199
    %v3210 = vunpack.c.l.b16 %v3200
    %v3211 = vunpack.c.l.b16 %v3201
    %v3212 = vpack.c.b16 %v3208, %v3207
    %v3213 = vpack.c.b16 %v3210, %v3209
    %v3214 = vpack.c.b16 %v3211, %v3211
    %vm3217 = vcmask 293888
    %v3219 = vsel %vm3217, %v3165, 0
    %v3222 = vsel %vm3217, %v3166, 0
    %v3225 = vsel %vm3217, %v3167, 0
    %v3228 = vsel %vm3217, %v3168, 0
    %v3231 = vsel %vm3217, %v3169, 0
    %v3234 = vsel %vm3217, %v3170, 0
    %v3237 = vsel %vm3217, %v3171, 0
    %v3240 = vsel %vm3217, %v3172, 0
    %v3243 = vsel %vm3217, %v3173, 0
    %v3246 = vsel %vm3217, %v3174, 0
    %v3249 = vsel %vm3217, %v3175, 0
    %v3252 = vsel %vm3217, %v3176, 0
    %v3255 = vsel %vm3217, %v3177, 0
    %v3258 = vsel %vm3217, %v3178, 0
    %v3261 = vsel %vm3217, %v3179, 0
    %v3264 = vsel %vm3217, %v3180, 0
    %v3267 = vsel %vm3217, %v3181, 0
    %v3270 = vsel %vm3217, %v3182, 0
    %v3273 = vsel %vm3217, %v3183, 0
    %v3276 = vsel %vm3217, %v3184, 0
    %v3279 = vsel %vm3217, %v3185, 0
    %v3282 = vsel %vm3217, %v3186, 0
    %v3285 = vsel %vm3217, %v3187, 0
    %v3288 = vsel %vm3217, %v3188, 0
    %v3291 = vsel %vm3217, %v3189, 0
    %v3294 = vsel %vm3217, %v3190, 0
    %v3297 = vsel %vm3217, %v3191, 0
    %v3300 = vsel %vm3217, %v3192, 0
    %v3303 = vsel %vm3217, %v3193, 0
    %v3306 = vsel %vm3217, %v3194, 0
    %v3309 = vsel %vm3217, %v3195, 0
    %v3312 = vsel %vm3217, %v3196, 0
    %vm3314 = vcmask 1041408
    %v3316 = vsel %vm3314, %v3214, 0
    %3318 = vmatprep.subr.bf16.mxu0 0
    %3319 = vmatpush1.bf16.msra.mxu0 %v3212
    %3320 = vmatprep.subr.bf16.mxu0 0
    %3321 = vmatpush1.bf16.msra.mxu0 %v3213
    %3322 = vmatprep.subr.bf16.mxu0 0
    %3323 = vmatpush1.bf16.msra.mxu0 %v3316
    %3324 = vmatprep.subr.bf16.mxu0 0
    %3325 = vmatpush1.bf16.msra.mxu0 0
    %3326 = vmatprep.subr.bf16.mxu0 0
    %3327 = vmatpush1.bf16.msra.mxu0 0
    %3328 = vmatprep.subr.bf16.mxu0 0
    %3329 = vmatpush1.bf16.msra.mxu0 0
    %3330 = vmatprep.subr.bf16.mxu0 0
    %3331 = vmatpush1.bf16.msra.mxu0 0
    %3332 = vmatprep.subr.bf16.mxu0 0
    %3333 = vmatpush1.bf16.msra.mxu0 0
    %3334 = vmatprep.subr.bf16.mxu0 0
    %3335 = vmatpush1.bf16.msra.mxu0 0
    %3336 = vmatprep.subr.bf16.mxu0 0
    %3337 = vmatpush1.bf16.msra.mxu0 0
    %3338 = vmatprep.subr.bf16.mxu0 0
    %3339 = vmatpush1.bf16.msra.mxu0 0
    %3340 = vmatprep.subr.bf16.mxu0 0
    %3341 = vmatpush1.bf16.msra.mxu0 0
    %3342 = vmatprep.subr.bf16.mxu0 0
    %3343 = vmatpush1.bf16.msra.mxu0 0
    %3344 = vmatprep.subr.bf16.mxu0 0
    %3345 = vmatpush1.bf16.msra.mxu0 0
    %3346 = vmatprep.subr.bf16.mxu0 0
    %3347 = vmatpush1.bf16.msra.mxu0 0
    %3348 = vmatprep.subr.bf16.mxu0 0
    %3349 = vmatpush1.bf16.msra.mxu0 0
    %3350 = vmatprep.mubr.bf16.mxu0 0
    %3351 = vmatmul.mubr.bf16.gmra.mrb[0].mxu0 %v3219
    %v3352 = vpop.f32.mrb[0].mxu0
    %v3353 = vadd.f32 0.0, %v3352
    %v3354 = vpop.f32.mrb[0].mxu0
    %v3355 = vpop.f32.mrb[0].mxu0
    %v3356 = vadd.f32 0.0, %v3355
    %v3357 = vpop.f32.mrb[0].mxu0
    %3358 = vmatprep.mubr.bf16.mxu0 0
    %3359 = vmatmul.mubr.bf16.gmra.mrb[0].mxu0 %v3222
    %v3360 = vpop.f32.mrb[0].mxu0
    %v3361 = vadd.f32 0.0, %v3360
    %v3362 = vpop.f32.mrb[0].mxu0
    %v3363 = vpop.f32.mrb[0].mxu0
    %v3364 = vadd.f32 0.0, %v3363
    %v3365 = vpop.f32.mrb[0].mxu0
    %3366 = vmatprep.mubr.bf16.mxu0 0
    %3367 = vmatmul.mubr.bf16.gmra.mrb[0].mxu0 %v3225
    %v3368 = vpop.f32.mrb[0].mxu0
    %v3369 = vadd.f32 0.0, %v3368
    %v3370 = vpop.f32.mrb[0].mxu0
    %v3371 = vpop.f32.mrb[0].mxu0
    %v3372 = vadd.f32 0.0, %v3371
    %v3373 = vpop.f32.mrb[0].mxu0
    %3374 = vmatprep.mubr.bf16.mxu0 0
    %3375 = vmatmul.mubr.bf16.gmra.mrb[0].mxu0 %v3228
    %v3376 = vpop.f32.mrb[0].mxu0
    %v3377 = vadd.f32 0.0, %v3376
    %v3378 = vpop.f32.mrb[0].mxu0
    %v3379 = vpop.f32.mrb[0].mxu0
    %v3380 = vadd.f32 0.0, %v3379
    %v3381 = vpop.f32.mrb[0].mxu0
    %3382 = vmatprep.mubr.bf16.mxu0 0
    %3383 = vmatmul.mubr.bf16.gmra.mrb[0].mxu0 %v3231
    %v3384 = vpop.f32.mrb[0].mxu0
    %v3385 = vadd.f32 0.0, %v3384
    %v3386 = vpop.f32.mrb[0].mxu0
    %v3387 = vpop.f32.mrb[0].mxu0
    %v3388 = vadd.f32 0.0, %v3387
    %v3389 = vpop.f32.mrb[0].mxu0
    %3390 = vmatprep.mubr.bf16.mxu0 0
    %3391 = vmatmul.mubr.bf16.gmra.mrb[0].mxu0 %v3234
    %v3392 = vpop.f32.mrb[0].mxu0
    %v3393 = vadd.f32 0.0, %v3392
    %v3394 = vpop.f32.mrb[0].mxu0
    %v3395 = vpop.f32.mrb[0].mxu0
    %v3396 = vadd.f32 0.0, %v3395
    %v3397 = vpop.f32.mrb[0].mxu0
    %3398 = vmatprep.mubr.bf16.mxu0 0
    %3399 = vmatmul.mubr.bf16.gmra.mrb[0].mxu0 %v3237
    %v3400 = vpop.f32.mrb[0].mxu0
    %v3401 = vadd.f32 0.0, %v3400
    %v3402 = vpop.f32.mrb[0].mxu0
    %v3403 = vpop.f32.mrb[0].mxu0
    %v3404 = vadd.f32 0.0, %v3403
    %v3405 = vpop.f32.mrb[0].mxu0
    %3406 = vmatprep.mubr.bf16.mxu0 0
    %3407 = vmatmul.mubr.bf16.gmra.mrb[0].mxu0 %v3240
    %v3408 = vpop.f32.mrb[0].mxu0
    %v3409 = vadd.f32 0.0, %v3408
    %v3410 = vpop.f32.mrb[0].mxu0
    %v3411 = vpop.f32.mrb[0].mxu0
    %v3412 = vadd.f32 0.0, %v3411
    %v3413 = vpop.f32.mrb[0].mxu0
    %3414 = vmatprep.mubr.bf16.mxu0 0
    %3415 = vmatmul.mubr.bf16.gmra.mrb[0].mxu0 %v3243
    %v3416 = vpop.f32.mrb[0].mxu0
    %v3417 = vadd.f32 0.0, %v3416
    %v3418 = vpop.f32.mrb[0].mxu0
    %v3419 = vpop.f32.mrb[0].mxu0
    %v3420 = vadd.f32 0.0, %v3419
    %v3421 = vpop.f32.mrb[0].mxu0
    %3422 = vmatprep.mubr.bf16.mxu0 0
    %3423 = vmatmul.mubr.bf16.gmra.mrb[0].mxu0 %v3246
    %v3424 = vpop.f32.mrb[0].mxu0
    %v3425 = vadd.f32 0.0, %v3424
    %v3426 = vpop.f32.mrb[0].mxu0
    %v3427 = vpop.f32.mrb[0].mxu0
    %v3428 = vadd.f32 0.0, %v3427
    %v3429 = vpop.f32.mrb[0].mxu0
    %3430 = vmatprep.mubr.bf16.mxu0 0
    %3431 = vmatmul.mubr.bf16.gmra.mrb[0].mxu0 %v3249
    %v3432 = vpop.f32.mrb[0].mxu0
    %v3433 = vadd.f32 0.0, %v3432
    %v3434 = vpop.f32.mrb[0].mxu0
    %v3435 = vpop.f32.mrb[0].mxu0
    %v3436 = vadd.f32 0.0, %v3435
    %v3437 = vpop.f32.mrb[0].mxu0
    %3438 = vmatprep.mubr.bf16.mxu0 0
    %3439 = vmatmul.mubr.bf16.gmra.mrb[0].mxu0 %v3252
    %v3440 = vpop.f32.mrb[0].mxu0
    %v3441 = vadd.f32 0.0, %v3440
    %v3442 = vpop.f32.mrb[0].mxu0
    %v3443 = vpop.f32.mrb[0].mxu0
    %v3444 = vadd.f32 0.0, %v3443
    %v3445 = vpop.f32.mrb[0].mxu0
    %3446 = vmatprep.mubr.bf16.mxu0 0
    %3447 = vmatmul.mubr.bf16.gmra.mrb[0].mxu0 %v3255
    %v3448 = vpop.f32.mrb[0].mxu0
    %v3449 = vadd.f32 0.0, %v3448
    %v3450 = vpop.f32.mrb[0].mxu0
    %v3451 = vpop.f32.mrb[0].mxu0
    %v3452 = vadd.f32 0.0, %v3451
    %v3453 = vpop.f32.mrb[0].mxu0
    %3454 = vmatprep.mubr.bf16.mxu0 0
    %3455 = vmatmul.mubr.bf16.gmra.mrb[0].mxu0 %v3258
    %v3456 = vpop.f32.mrb[0].mxu0
    %v3457 = vadd.f32 0.0, %v3456
    %v3458 = vpop.f32.mrb[0].mxu0
    %v3459 = vpop.f32.mrb[0].mxu0
    %v3460 = vadd.f32 0.0, %v3459
    %v3461 = vpop.f32.mrb[0].mxu0
    %3462 = vmatprep.mubr.bf16.mxu0 0
    %3463 = vmatmul.mubr.bf16.gmra.mrb[0].mxu0 %v3261
    %v3464 = vpop.f32.mrb[0].mxu0
    %v3465 = vadd.f32 0.0, %v3464
    %v3466 = vpop.f32.mrb[0].mxu0
    %v3467 = vpop.f32.mrb[0].mxu0
    %v3468 = vadd.f32 0.0, %v3467
    %v3469 = vpop.f32.mrb[0].mxu0
    %3470 = vmatprep.mubr.bf16.mxu0 0
    %3471 = vmatmul.mubr.bf16.gmra.mrb[0].mxu0 %v3264
    %v3472 = vpop.f32.mrb[0].mxu0
    %v3473 = vadd.f32 0.0, %v3472
    %v3474 = vpop.f32.mrb[0].mxu0
    %v3475 = vpop.f32.mrb[0].mxu0
    %v3476 = vadd.f32 0.0, %v3475
    %v3477 = vpop.f32.mrb[0].mxu0
    %3478 = vmatprep.mubr.bf16.mxu0 0
    %3479 = vmatmul.mubr.bf16.gmra.mrb[0].mxu0 %v3267
    %v3480 = vpop.f32.mrb[0].mxu0
    %v3481 = vadd.f32 0.0, %v3480
    %v3482 = vpop.f32.mrb[0].mxu0
    %v3483 = vpop.f32.mrb[0].mxu0
    %v3484 = vadd.f32 0.0, %v3483
    %v3485 = vpop.f32.mrb[0].mxu0
    %3486 = vmatprep.mubr.bf16.mxu0 0
    %3487 = vmatmul.mubr.bf16.gmra.mrb[0].mxu0 %v3270
    %v3488 = vpop.f32.mrb[0].mxu0
    %v3489 = vadd.f32 0.0, %v3488
    %v3490 = vpop.f32.mrb[0].mxu0
    %v3491 = vpop.f32.mrb[0].mxu0
    %v3492 = vadd.f32 0.0, %v3491
    %v3493 = vpop.f32.mrb[0].mxu0
    %3494 = vmatprep.mubr.bf16.mxu0 0
    %3495 = vmatmul.mubr.bf16.gmra.mrb[0].mxu0 %v3273
    %v3496 = vpop.f32.mrb[0].mxu0
    %v3497 = vadd.f32 0.0, %v3496
    %v3498 = vpop.f32.mrb[0].mxu0
    %v3499 = vpop.f32.mrb[0].mxu0
    %v3500 = vadd.f32 0.0, %v3499
    %v3501 = vpop.f32.mrb[0].mxu0
    %3502 = vmatprep.mubr.bf16.mxu0 0
    %3503 = vmatmul.mubr.bf16.gmra.mrb[0].mxu0 %v3276
    %v3504 = vpop.f32.mrb[0].mxu0
    %v3505 = vadd.f32 0.0, %v3504
    %v3506 = vpop.f32.mrb[0].mxu0
    %v3507 = vpop.f32.mrb[0].mxu0
    %v3508 = vadd.f32 0.0, %v3507
    %v3509 = vpop.f32.mrb[0].mxu0
    %3510 = vmatprep.mubr.bf16.mxu0 0
    %3511 = vmatmul.mubr.bf16.gmra.mrb[0].mxu0 %v3279
    %v3512 = vpop.f32.mrb[0].mxu0
    %v3513 = vadd.f32 0.0, %v3512
    %v3514 = vpop.f32.mrb[0].mxu0
    %v3515 = vpop.f32.mrb[0].mxu0
    %v3516 = vadd.f32 0.0, %v3515
    %v3517 = vpop.f32.mrb[0].mxu0
    %3518 = vmatprep.mubr.bf16.mxu0 0
    %3519 = vmatmul.mubr.bf16.gmra.mrb[0].mxu0 %v3282
    %v3520 = vpop.f32.mrb[0].mxu0
    %v3521 = vadd.f32 0.0, %v3520
    %v3522 = vpop.f32.mrb[0].mxu0
    %v3523 = vpop.f32.mrb[0].mxu0
    %v3524 = vadd.f32 0.0, %v3523
    %v3525 = vpop.f32.mrb[0].mxu0
    %3526 = vmatprep.mubr.bf16.mxu0 0
    %3527 = vmatmul.mubr.bf16.gmra.mrb[0].mxu0 %v3285
    %v3528 = vpop.f32.mrb[0].mxu0
    %v3529 = vadd.f32 0.0, %v3528
    %v3530 = vpop.f32.mrb[0].mxu0
    %v3531 = vpop.f32.mrb[0].mxu0
    %v3532 = vadd.f32 0.0, %v3531
    %v3533 = vpop.f32.mrb[0].mxu0
    %3534 = vmatprep.mubr.bf16.mxu0 0
    %3535 = vmatmul.mubr.bf16.gmra.mrb[0].mxu0 %v3288
    %v3536 = vpop.f32.mrb[0].mxu0
    %v3537 = vadd.f32 0.0, %v3536
    %v3538 = vpop.f32.mrb[0].mxu0
    %v3539 = vpop.f32.mrb[0].mxu0
    %v3540 = vadd.f32 0.0, %v3539
    %v3541 = vpop.f32.mrb[0].mxu0
    %3542 = vmatprep.mubr.bf16.mxu0 0
    %3543 = vmatmul.mubr.bf16.gmra.mrb[0].mxu0 %v3291
    %v3544 = vpop.f32.mrb[0].mxu0
    %v3545 = vadd.f32 0.0, %v3544
    %v3546 = vpop.f32.mrb[0].mxu0
    %v3547 = vpop.f32.mrb[0].mxu0
    %v3548 = vadd.f32 0.0, %v3547
    %v3549 = vpop.f32.mrb[0].mxu0
    %3550 = vmatprep.mubr.bf16.mxu0 0
    %3551 = vmatmul.mubr.bf16.gmra.mrb[0].mxu0 %v3294
    %v3552 = vpop.f32.mrb[0].mxu0
    %v3553 = vadd.f32 0.0, %v3552
    %v3554 = vpop.f32.mrb[0].mxu0
    %v3555 = vpop.f32.mrb[0].mxu0
    %v3556 = vadd.f32 0.0, %v3555
    %v3557 = vpop.f32.mrb[0].mxu0
    %3558 = vmatprep.mubr.bf16.mxu0 0
    %3559 = vmatmul.mubr.bf16.gmra.mrb[0].mxu0 %v3297
    %v3560 = vpop.f32.mrb[0].mxu0
    %v3561 = vadd.f32 0.0, %v3560
    %v3562 = vpop.f32.mrb[0].mxu0
    %v3563 = vpop.f32.mrb[0].mxu0
    %v3564 = vadd.f32 0.0, %v3563
    %v3565 = vpop.f32.mrb[0].mxu0
    %3566 = vmatprep.mubr.bf16.mxu0 0
    %3567 = vmatmul.mubr.bf16.gmra.mrb[0].mxu0 %v3300
    %v3568 = vpop.f32.mrb[0].mxu0
    %v3569 = vadd.f32 0.0, %v3568
    %v3570 = vpop.f32.mrb[0].mxu0
    %v3571 = vpop.f32.mrb[0].mxu0
    %v3572 = vadd.f32 0.0, %v3571
    %v3573 = vpop.f32.mrb[0].mxu0
    %3574 = vmatprep.mubr.bf16.mxu0 0
    %3575 = vmatmul.mubr.bf16.gmra.mrb[0].mxu0 %v3303
    %v3576 = vpop.f32.mrb[0].mxu0
    %v3577 = vadd.f32 0.0, %v3576
    %v3578 = vpop.f32.mrb[0].mxu0
    %v3579 = vpop.f32.mrb[0].mxu0
    %v3580 = vadd.f32 0.0, %v3579
    %v3581 = vpop.f32.mrb[0].mxu0
    %3582 = vmatprep.mubr.bf16.mxu0 0
    %3583 = vmatmul.mubr.bf16.gmra.mrb[0].mxu0 %v3306
    %v3584 = vpop.f32.mrb[0].mxu0
    %v3585 = vadd.f32 0.0, %v3584
    %v3586 = vpop.f32.mrb[0].mxu0
    %v3587 = vpop.f32.mrb[0].mxu0
    %v3588 = vadd.f32 0.0, %v3587
    %v3589 = vpop.f32.mrb[0].mxu0
    %3590 = vmatprep.mubr.bf16.mxu0 0
    %3591 = vmatmul.mubr.bf16.gmra.mrb[0].mxu0 %v3309
    %v3592 = vpop.f32.mrb[0].mxu0
    %v3593 = vadd.f32 0.0, %v3592
    %v3594 = vpop.f32.mrb[0].mxu0
    %v3595 = vpop.f32.mrb[0].mxu0
    %v3596 = vadd.f32 0.0, %v3595
    %v3597 = vpop.f32.mrb[0].mxu0
    %3598 = vmatprep.mubr.bf16.mxu0 0
    %3599 = vmatmul.mubr.bf16.gmra.mrb[0].mxu0 %v3312
    %v3600 = vpop.f32.mrb[0].mxu0
    %v3601 = vadd.f32 0.0, %v3600
    %v3602 = vpop.f32.mrb[0].mxu0
    %v3603 = vpop.f32.mrb[0].mxu0
    %v3604 = vadd.f32 0.0, %v3603
    %v3605 = vpop.f32.mrb[0].mxu0
    %3606 = vdwg.mxu0
    %v3607 = vadd.f32 %v3353, %v3356
    %v3608 = vadd.f32 %v3607, %v3361
    %v3609 = vadd.f32 %v3608, %v3364
    %v3610 = vadd.f32 %v3609, %v3369
    %v3611 = vadd.f32 %v3610, %v3372
    %v3612 = vadd.f32 %v3611, %v3377
    %v3613 = vadd.f32 %v3612, %v3380
    %v3614 = vadd.f32 %v3613, %v3385
    %v3615 = vadd.f32 %v3614, %v3388
    %v3616 = vadd.f32 %v3615, %v3393
    %v3617 = vadd.f32 %v3616, %v3396
    %v3618 = vadd.f32 %v3617, %v3401
    %v3619 = vadd.f32 %v3618, %v3404
    %v3620 = vadd.f32 %v3619, %v3409
    %v3621 = vadd.f32 %v3620, %v3412
    %v3622 = vadd.f32 %v3621, %v3417
    %v3623 = vadd.f32 %v3622, %v3420
    %v3624 = vadd.f32 %v3623, %v3425
    %v3625 = vadd.f32 %v3624, %v3428
    %v3626 = vadd.f32 %v3625, %v3433
    %v3627 = vadd.f32 %v3626, %v3436
    %v3628 = vadd.f32 %v3627, %v3441
    %v3629 = vadd.f32 %v3628, %v3444
    %v3630 = vadd.f32 %v3629, %v3449
    %v3631 = vadd.f32 %v3630, %v3452
    %v3632 = vadd.f32 %v3631, %v3457
    %v3633 = vadd.f32 %v3632, %v3460
    %v3634 = vadd.f32 %v3633, %v3465
    %v3635 = vadd.f32 %v3634, %v3468
    %v3636 = vadd.f32 %v3635, %v3473
    %v3637 = vadd.f32 %v3636, %v3476
    %v3638 = vadd.f32 %v3637, %v3481
    %v3639 = vadd.f32 %v3638, %v3484
    %v3640 = vadd.f32 %v3639, %v3489
    %v3641 = vadd.f32 %v3640, %v3492
    %v3642 = vadd.f32 %v3641, %v3497
    %v3643 = vadd.f32 %v3642, %v3500
    %v3644 = vadd.f32 %v3643, %v3505
    %v3645 = vadd.f32 %v3644, %v3508
    %v3646 = vadd.f32 %v3645, %v3513
    %v3647 = vadd.f32 %v3646, %v3516
    %v3648 = vadd.f32 %v3647, %v3521
    %v3649 = vadd.f32 %v3648, %v3524
    %v3650 = vadd.f32 %v3649, %v3529
    %v3651 = vadd.f32 %v3650, %v3532
    %v3652 = vadd.f32 %v3651, %v3537
    %v3653 = vadd.f32 %v3652, %v3540
    %v3654 = vadd.f32 %v3653, %v3545
    %v3655 = vadd.f32 %v3654, %v3548
    %v3656 = vadd.f32 %v3655, %v3553
    %v3657 = vadd.f32 %v3656, %v3556
    %v3658 = vadd.f32 %v3657, %v3561
    %v3659 = vadd.f32 %v3658, %v3564
    %v3660 = vadd.f32 %v3659, %v3569
    %v3661 = vadd.f32 %v3660, %v3572
    %v3662 = vadd.f32 %v3661, %v3577
    %v3663 = vadd.f32 %v3662, %v3580
    %v3664 = vadd.f32 %v3663, %v3585
    %v3665 = vadd.f32 %v3664, %v3588
    %v3666 = vadd.f32 %v3665, %v3593
    %v3667 = vadd.f32 %v3666, %v3596
    %v3668 = vadd.f32 %v3667, %v3601
    %v3669 = vadd.f32 %v3668, %v3604
    %v3670 = vrot.slane %v3669, 4
    %v3671 = vadd.f32 %v3669, %v3670
    %v3672 = vrot.slane %v3671, 2
    %v3673 = vadd.f32 %v3671, %v3672
    %v3674 = vrot.slane %v3673, 1
    %v3675 = vadd.f32 %v3673, %v3674
    %v3676 = vmul.f32 %v3675, 0.001953125
    %v3677 = vsub.f32 %v3353, %v3676
    %v3678 = vsub.f32 %v3356, %v3676
    %v3679 = vsub.f32 %v3361, %v3676
    %v3680 = vsub.f32 %v3364, %v3676
    %v3681 = vsub.f32 %v3369, %v3676
    %v3682 = vsub.f32 %v3372, %v3676
    %v3683 = vsub.f32 %v3377, %v3676
    %v3684 = vsub.f32 %v3380, %v3676
    %v3685 = vsub.f32 %v3385, %v3676
    %v3686 = vsub.f32 %v3388, %v3676
    %v3687 = vsub.f32 %v3393, %v3676
    %v3688 = vsub.f32 %v3396, %v3676
    %v3689 = vsub.f32 %v3401, %v3676
    %v3690 = vsub.f32 %v3404, %v3676
    %v3691 = vsub.f32 %v3409, %v3676
    %v3692 = vsub.f32 %v3412, %v3676
    %v3693 = vsub.f32 %v3417, %v3676
    %v3694 = vsub.f32 %v3420, %v3676
    %v3695 = vsub.f32 %v3425, %v3676
    %v3696 = vsub.f32 %v3428, %v3676
    %v3697 = vsub.f32 %v3433, %v3676
    %v3698 = vsub.f32 %v3436, %v3676
    %v3699 = vsub.f32 %v3441, %v3676
    %v3700 = vsub.f32 %v3444, %v3676
    %v3701 = vsub.f32 %v3449, %v3676
    %v3702 = vsub.f32 %v3452, %v3676
    %v3703 = vsub.f32 %v3457, %v3676
    %v3704 = vsub.f32 %v3460, %v3676
    %v3705 = vsub.f32 %v3465, %v3676
    %v3706 = vsub.f32 %v3468, %v3676
    %v3707 = vsub.f32 %v3473, %v3676
    %v3708 = vsub.f32 %v3476, %v3676
    %v3709 = vsub.f32 %v3481, %v3676
    %v3710 = vsub.f32 %v3484, %v3676
    %v3711 = vsub.f32 %v3489, %v3676
    %v3712 = vsub.f32 %v3492, %v3676
    %v3713 = vsub.f32 %v3497, %v3676
    %v3714 = vsub.f32 %v3500, %v3676
    %v3715 = vsub.f32 %v3505, %v3676
    %v3716 = vsub.f32 %v3508, %v3676
    %v3717 = vsub.f32 %v3513, %v3676
    %v3718 = vsub.f32 %v3516, %v3676
    %v3719 = vsub.f32 %v3521, %v3676
    %v3720 = vsub.f32 %v3524, %v3676
    %v3721 = vsub.f32 %v3529, %v3676
    %v3722 = vsub.f32 %v3532, %v3676
    %v3723 = vsub.f32 %v3537, %v3676
    %v3724 = vsub.f32 %v3540, %v3676
    %v3725 = vsub.f32 %v3545, %v3676
    %v3726 = vsub.f32 %v3548, %v3676
    %v3727 = vsub.f32 %v3553, %v3676
    %v3728 = vsub.f32 %v3556, %v3676
    %v3729 = vsub.f32 %v3561, %v3676
    %v3730 = vsub.f32 %v3564, %v3676
    %v3731 = vsub.f32 %v3569, %v3676
    %v3732 = vsub.f32 %v3572, %v3676
    %v3733 = vsub.f32 %v3577, %v3676
    %v3734 = vsub.f32 %v3580, %v3676
    %v3735 = vsub.f32 %v3585, %v3676
    %v3736 = vsub.f32 %v3588, %v3676
    %v3737 = vsub.f32 %v3593, %v3676
    %v3738 = vsub.f32 %v3596, %v3676
    %v3739 = vsub.f32 %v3601, %v3676
    %v3740 = vsub.f32 %v3604, %v3676
    %v3741 = vmul.f32 %v3677, %v3677
    %v3742 = vmul.f32 %v3678, %v3678
    %v3743 = vmul.f32 %v3679, %v3679
    %v3744 = vmul.f32 %v3680, %v3680
    %v3745 = vmul.f32 %v3681, %v3681
    %v3746 = vmul.f32 %v3682, %v3682
    %v3747 = vmul.f32 %v3683, %v3683
    %v3748 = vmul.f32 %v3684, %v3684
    %v3749 = vmul.f32 %v3685, %v3685
    %v3750 = vmul.f32 %v3686, %v3686
    %v3751 = vmul.f32 %v3687, %v3687
    %v3752 = vmul.f32 %v3688, %v3688
    %v3753 = vmul.f32 %v3689, %v3689
    %v3754 = vmul.f32 %v3690, %v3690
    %v3755 = vmul.f32 %v3691, %v3691
    %v3756 = vmul.f32 %v3692, %v3692
    %v3757 = vmul.f32 %v3693, %v3693
    %v3758 = vmul.f32 %v3694, %v3694
    %v3759 = vmul.f32 %v3695, %v3695
    %v3760 = vmul.f32 %v3696, %v3696
    %v3761 = vmul.f32 %v3697, %v3697
    %v3762 = vmul.f32 %v3698, %v3698
    %v3763 = vmul.f32 %v3699, %v3699
    %v3764 = vmul.f32 %v3700, %v3700
    %v3765 = vmul.f32 %v3701, %v3701
    %v3766 = vmul.f32 %v3702, %v3702
    %v3767 = vmul.f32 %v3703, %v3703
    %v3768 = vmul.f32 %v3704, %v3704
    %v3769 = vmul.f32 %v3705, %v3705
    %v3770 = vmul.f32 %v3706, %v3706
    %v3771 = vmul.f32 %v3707, %v3707
    %v3772 = vmul.f32 %v3708, %v3708
    %v3773 = vmul.f32 %v3709, %v3709
    %v3774 = vmul.f32 %v3710, %v3710
    %v3775 = vmul.f32 %v3711, %v3711
    %v3776 = vmul.f32 %v3712, %v3712
    %v3777 = vmul.f32 %v3713, %v3713
    %v3778 = vmul.f32 %v3714, %v3714
    %v3779 = vmul.f32 %v3715, %v3715
    %v3780 = vmul.f32 %v3716, %v3716
    %v3781 = vmul.f32 %v3717, %v3717
    %v3782 = vmul.f32 %v3718, %v3718
    %v3783 = vmul.f32 %v3719, %v3719
    %v3784 = vmul.f32 %v3720, %v3720
    %v3785 = vmul.f32 %v3721, %v3721
    %v3786 = vmul.f32 %v3722, %v3722
    %v3787 = vmul.f32 %v3723, %v3723
    %v3788 = vmul.f32 %v3724, %v3724
    %v3789 = vmul.f32 %v3725, %v3725
    %v3790 = vmul.f32 %v3726, %v3726
    %v3791 = vmul.f32 %v3727, %v3727
    %v3792 = vmul.f32 %v3728, %v3728
    %v3793 = vmul.f32 %v3729, %v3729
    %v3794 = vmul.f32 %v3730, %v3730
    %v3795 = vmul.f32 %v3731, %v3731
    %v3796 = vmul.f32 %v3732, %v3732
    %v3797 = vmul.f32 %v3733, %v3733
    %v3798 = vmul.f32 %v3734, %v3734
    %v3799 = vmul.f32 %v3735, %v3735
    %v3800 = vmul.f32 %v3736, %v3736
    %v3801 = vmul.f32 %v3737, %v3737
    %v3802 = vmul.f32 %v3738, %v3738
    %v3803 = vmul.f32 %v3739, %v3739
    %v3804 = vmul.f32 %v3740, %v3740
    %v3805 = vadd.f32 %v3741, %v3742
    %v3806 = vadd.f32 %v3805, %v3743
    %v3807 = vadd.f32 %v3806, %v3744
    %v3808 = vadd.f32 %v3807, %v3745
    %v3809 = vadd.f32 %v3808, %v3746
    %v3810 = vadd.f32 %v3809, %v3747
    %v3811 = vadd.f32 %v3810, %v3748
    %v3812 = vadd.f32 %v3811, %v3749
    %v3813 = vadd.f32 %v3812, %v3750
    %v3814 = vadd.f32 %v3813, %v3751
    %v3815 = vadd.f32 %v3814, %v3752
    %v3816 = vadd.f32 %v3815, %v3753
    %v3817 = vadd.f32 %v3816, %v3754
    %v3818 = vadd.f32 %v3817, %v3755
    %v3819 = vadd.f32 %v3818, %v3756
    %v3820 = vadd.f32 %v3819, %v3757
    %v3821 = vadd.f32 %v3820, %v3758
    %v3822 = vadd.f32 %v3821, %v3759
    %v3823 = vadd.f32 %v3822, %v3760
    %v3824 = vadd.f32 %v3823, %v3761
    %v3825 = vadd.f32 %v3824, %v3762
    %v3826 = vadd.f32 %v3825, %v3763
    %v3827 = vadd.f32 %v3826, %v3764
    %v3828 = vadd.f32 %v3827, %v3765
    %v3829 = vadd.f32 %v3828, %v3766
    %v3830 = vadd.f32 %v3829, %v3767
    %v3831 = vadd.f32 %v3830, %v3768
    %v3832 = vadd.f32 %v3831, %v3769
    %v3833 = vadd.f32 %v3832, %v3770
    %v3834 = vadd.f32 %v3833, %v3771
    %v3835 = vadd.f32 %v3834, %v3772
    %v3836 = vadd.f32 %v3835, %v3773
    %v3837 = vadd.f32 %v3836, %v3774
    %v3838 = vadd.f32 %v3837, %v3775
    %v3839 = vadd.f32 %v3838, %v3776
    %v3840 = vadd.f32 %v3839, %v3777
    %v3841 = vadd.f32 %v3840, %v3778
    %v3842 = vadd.f32 %v3841, %v3779
    %v3843 = vadd.f32 %v3842, %v3780
    %v3844 = vadd.f32 %v3843, %v3781
    %v3845 = vadd.f32 %v3844, %v3782
    %v3846 = vadd.f32 %v3845, %v3783
    %v3847 = vadd.f32 %v3846, %v3784
    %v3848 = vadd.f32 %v3847, %v3785
    %v3849 = vadd.f32 %v3848, %v3786
    %v3850 = vadd.f32 %v3849, %v3787
    %v3851 = vadd.f32 %v3850, %v3788
    %v3852 = vadd.f32 %v3851, %v3789
    %v3853 = vadd.f32 %v3852, %v3790
    %v3854 = vadd.f32 %v3853, %v3791
    %v3855 = vadd.f32 %v3854, %v3792
    %v3856 = vadd.f32 %v3855, %v3793
    %v3857 = vadd.f32 %v3856, %v3794
    %v3858 = vadd.f32 %v3857, %v3795
    %v3859 = vadd.f32 %v3858, %v3796
    %v3860 = vadd.f32 %v3859, %v3797
    %v3861 = vadd.f32 %v3860, %v3798
    %v3862 = vadd.f32 %v3861, %v3799
    %v3863 = vadd.f32 %v3862, %v3800
    %v3864 = vadd.f32 %v3863, %v3801
    %v3865 = vadd.f32 %v3864, %v3802
    %v3866 = vadd.f32 %v3865, %v3803
    %v3867 = vadd.f32 %v3866, %v3804
    %v3868 = vrot.slane %v3867, 4
    %v3869 = vadd.f32 %v3867, %v3868
    %v3870 = vrot.slane %v3869, 2
    %v3871 = vadd.f32 %v3869, %v3870
    %v3872 = vrot.slane %v3871, 1
    %v3873 = vadd.f32 %v3871, %v3872
    %v3874 = vmul.f32 %v3873, 0.001953125
    %v3875 = vld [vmem:[%s2] sm:$0x1]
    %v3876 = vadd.f32 %v3874, 1e-05
    %v3877 = vrsqrt.pop %v3876
    %v3878 = vmul.f32 %v3875, %v3877
    %v3880 = vlaneseq
    %v3881 = vshrl.u32 %v3880, 7
    %v3882 = vsub.s32 0, %v3881
    %v3883 = vrot.slane %v3878, %v3882
    %v3885 = vmul.f32 %v3677, %v3883
    %v3886 = vmul.f32 %v3678, %v3883
    %v3887 = vmul.f32 %v3679, %v3883
    %v3888 = vmul.f32 %v3680, %v3883
    %v3889 = vmul.f32 %v3681, %v3883
    %v3890 = vmul.f32 %v3682, %v3883
    %v3891 = vmul.f32 %v3683, %v3883
    %v3892 = vmul.f32 %v3684, %v3883
    %v3893 = vmul.f32 %v3685, %v3883
    %v3894 = vmul.f32 %v3686, %v3883
    %v3895 = vmul.f32 %v3687, %v3883
    %v3896 = vmul.f32 %v3688, %v3883
    %v3897 = vmul.f32 %v3689, %v3883
    %v3898 = vmul.f32 %v3690, %v3883
    %v3899 = vmul.f32 %v3691, %v3883
    %v3900 = vmul.f32 %v3692, %v3883
    %v3901 = vmul.f32 %v3693, %v3883
    %v3902 = vmul.f32 %v3694, %v3883
    %v3903 = vmul.f32 %v3695, %v3883
    %v3904 = vmul.f32 %v3696, %v3883
    %v3905 = vmul.f32 %v3697, %v3883
    %v3906 = vmul.f32 %v3698, %v3883
    %v3907 = vmul.f32 %v3699, %v3883
    %v3908 = vmul.f32 %v3700, %v3883
    %v3909 = vmul.f32 %v3701, %v3883
    %v3910 = vmul.f32 %v3702, %v3883
    %v3911 = vmul.f32 %v3703, %v3883
    %v3912 = vmul.f32 %v3704, %v3883
    %v3913 = vmul.f32 %v3705, %v3883
    %v3914 = vmul.f32 %v3706, %v3883
    %v3915 = vmul.f32 %v3707, %v3883
    %v3916 = vmul.f32 %v3708, %v3883
    %v3917 = vmul.f32 %v3709, %v3883
    %v3918 = vmul.f32 %v3710, %v3883
    %v3919 = vmul.f32 %v3711, %v3883
    %v3920 = vmul.f32 %v3712, %v3883
    %v3921 = vmul.f32 %v3713, %v3883
    %v3922 = vmul.f32 %v3714, %v3883
    %v3923 = vmul.f32 %v3715, %v3883
    %v3924 = vmul.f32 %v3716, %v3883
    %v3925 = vmul.f32 %v3717, %v3883
    %v3926 = vmul.f32 %v3718, %v3883
    %v3927 = vmul.f32 %v3719, %v3883
    %v3928 = vmul.f32 %v3720, %v3883
    %v3929 = vmul.f32 %v3721, %v3883
    %v3930 = vmul.f32 %v3722, %v3883
    %v3931 = vmul.f32 %v3723, %v3883
    %v3932 = vmul.f32 %v3724, %v3883
    %v3933 = vmul.f32 %v3725, %v3883
    %v3934 = vmul.f32 %v3726, %v3883
    %v3935 = vmul.f32 %v3727, %v3883
    %v3936 = vmul.f32 %v3728, %v3883
    %v3937 = vmul.f32 %v3729, %v3883
    %v3938 = vmul.f32 %v3730, %v3883
    %v3939 = vmul.f32 %v3731, %v3883
    %v3940 = vmul.f32 %v3732, %v3883
    %v3941 = vmul.f32 %v3733, %v3883
    %v3942 = vmul.f32 %v3734, %v3883
    %v3943 = vmul.f32 %v3735, %v3883
    %v3944 = vmul.f32 %v3736, %v3883
    %v3945 = vmul.f32 %v3737, %v3883
    %v3946 = vmul.f32 %v3738, %v3883
    %v3947 = vmul.f32 %v3739, %v3883
    %v3948 = vmul.f32 %v3740, %v3883
    %v3949 = vld [vmem:[%s3] sm:$0x1]
    %v3951 = vlaneseq
    %v3952 = vshrl.u32 %v3951, 7
    %v3953 = vsub.s32 0, %v3952
    %v3954 = vrot.slane %v3949, %v3953
    %v3956 = vadd.f32 %v3885, %v3954
    %v3957 = vadd.f32 %v3886, %v3954
    %v3958 = vadd.f32 %v3887, %v3954
    %v3959 = vadd.f32 %v3888, %v3954
    %v3960 = vadd.f32 %v3889, %v3954
    %v3961 = vadd.f32 %v3890, %v3954
    %v3962 = vadd.f32 %v3891, %v3954
    %v3963 = vadd.f32 %v3892, %v3954
    %v3964 = vadd.f32 %v3893, %v3954
    %v3965 = vadd.f32 %v3894, %v3954
    %v3966 = vadd.f32 %v3895, %v3954
    %v3967 = vadd.f32 %v3896, %v3954
    %v3968 = vadd.f32 %v3897, %v3954
    %v3969 = vadd.f32 %v3898, %v3954
    %v3970 = vadd.f32 %v3899, %v3954
    %v3971 = vadd.f32 %v3900, %v3954
    %v3972 = vadd.f32 %v3901, %v3954
    %v3973 = vadd.f32 %v3902, %v3954
    %v3974 = vadd.f32 %v3903, %v3954
    %v3975 = vadd.f32 %v3904, %v3954
    %v3976 = vadd.f32 %v3905, %v3954
    %v3977 = vadd.f32 %v3906, %v3954
    %v3978 = vadd.f32 %v3907, %v3954
    %v3979 = vadd.f32 %v3908, %v3954
    %v3980 = vadd.f32 %v3909, %v3954
    %v3981 = vadd.f32 %v3910, %v3954
    %v3982 = vadd.f32 %v3911, %v3954
    %v3983 = vadd.f32 %v3912, %v3954
    %v3984 = vadd.f32 %v3913, %v3954
    %v3985 = vadd.f32 %v3914, %v3954
    %v3986 = vadd.f32 %v3915, %v3954
    %v3987 = vadd.f32 %v3916, %v3954
    %v3988 = vadd.f32 %v3917, %v3954
    %v3989 = vadd.f32 %v3918, %v3954
    %v3990 = vadd.f32 %v3919, %v3954
    %v3991 = vadd.f32 %v3920, %v3954
    %v3992 = vadd.f32 %v3921, %v3954
    %v3993 = vadd.f32 %v3922, %v3954
    %v3994 = vadd.f32 %v3923, %v3954
    %v3995 = vadd.f32 %v3924, %v3954
    %v3996 = vadd.f32 %v3925, %v3954
    %v3997 = vadd.f32 %v3926, %v3954
    %v3998 = vadd.f32 %v3927, %v3954
    %v3999 = vadd.f32 %v3928, %v3954
    %v4000 = vadd.f32 %v3929, %v3954
    %v4001 = vadd.f32 %v3930, %v3954
    %v4002 = vadd.f32 %v3931, %v3954
    %v4003 = vadd.f32 %v3932, %v3954
    %v4004 = vadd.f32 %v3933, %v3954
    %v4005 = vadd.f32 %v3934, %v3954
    %v4006 = vadd.f32 %v3935, %v3954
    %v4007 = vadd.f32 %v3936, %v3954
    %v4008 = vadd.f32 %v3937, %v3954
    %v4009 = vadd.f32 %v3938, %v3954
    %v4010 = vadd.f32 %v3939, %v3954
    %v4011 = vadd.f32 %v3940, %v3954
    %v4012 = vadd.f32 %v3941, %v3954
    %v4013 = vadd.f32 %v3942, %v3954
    %v4014 = vadd.f32 %v3943, %v3954
    %v4015 = vadd.f32 %v3944, %v3954
    %v4016 = vadd.f32 %v3945, %v3954
    %v4017 = vadd.f32 %v3946, %v3954
    %v4018 = vadd.f32 %v3947, %v3954
    %v4019 = vadd.f32 %v3948, %v3954
    %v4020 = vmax.f32 %v3956, 0.0
    %v4021 = vmax.f32 %v3957, 0.0
    %v4022 = vmax.f32 %v3958, 0.0
    %v4023 = vmax.f32 %v3959, 0.0
    %v4024 = vmax.f32 %v3960, 0.0
    %v4025 = vmax.f32 %v3961, 0.0
    %v4026 = vmax.f32 %v3962, 0.0
    %v4027 = vmax.f32 %v3963, 0.0
    %v4028 = vmax.f32 %v3964, 0.0
    %v4029 = vmax.f32 %v3965, 0.0
    %v4030 = vmax.f32 %v3966, 0.0
    %v4031 = vmax.f32 %v3967, 0.0
    %v4032 = vmax.f32 %v3968, 0.0
    %v4033 = vmax.f32 %v3969, 0.0
    %v4034 = vmax.f32 %v3970, 0.0
    %v4035 = vmax.f32 %v3971, 0.0
    %v4036 = vmax.f32 %v3972, 0.0
    %v4037 = vmax.f32 %v3973, 0.0
    %v4038 = vmax.f32 %v3974, 0.0
    %v4039 = vmax.f32 %v3975, 0.0
    %v4040 = vmax.f32 %v3976, 0.0
    %v4041 = vmax.f32 %v3977, 0.0
    %v4042 = vmax.f32 %v3978, 0.0
    %v4043 = vmax.f32 %v3979, 0.0
    %v4044 = vmax.f32 %v3980, 0.0
    %v4045 = vmax.f32 %v3981, 0.0
    %v4046 = vmax.f32 %v3982, 0.0
    %v4047 = vmax.f32 %v3983, 0.0
    %v4048 = vmax.f32 %v3984, 0.0
    %v4049 = vmax.f32 %v3985, 0.0
    %v4050 = vmax.f32 %v3986, 0.0
    %v4051 = vmax.f32 %v3987, 0.0
    %v4052 = vmax.f32 %v3988, 0.0
    %v4053 = vmax.f32 %v3989, 0.0
    %v4054 = vmax.f32 %v3990, 0.0
    %v4055 = vmax.f32 %v3991, 0.0
    %v4056 = vmax.f32 %v3992, 0.0
    %v4057 = vmax.f32 %v3993, 0.0
    %v4058 = vmax.f32 %v3994, 0.0
    %v4059 = vmax.f32 %v3995, 0.0
    %v4060 = vmax.f32 %v3996, 0.0
    %v4061 = vmax.f32 %v3997, 0.0
    %v4062 = vmax.f32 %v3998, 0.0
    %v4063 = vmax.f32 %v3999, 0.0
    %v4064 = vmax.f32 %v4000, 0.0
    %v4065 = vmax.f32 %v4001, 0.0
    %v4066 = vmax.f32 %v4002, 0.0
    %v4067 = vmax.f32 %v4003, 0.0
    %v4068 = vmax.f32 %v4004, 0.0
    %v4069 = vmax.f32 %v4005, 0.0
    %v4070 = vmax.f32 %v4006, 0.0
    %v4071 = vmax.f32 %v4007, 0.0
    %v4072 = vmax.f32 %v4008, 0.0
    %v4073 = vmax.f32 %v4009, 0.0
    %v4074 = vmax.f32 %v4010, 0.0
    %v4075 = vmax.f32 %v4011, 0.0
    %v4076 = vmax.f32 %v4012, 0.0
    %v4077 = vmax.f32 %v4013, 0.0
    %v4078 = vmax.f32 %v4014, 0.0
    %v4079 = vmax.f32 %v4015, 0.0
    %v4080 = vmax.f32 %v4016, 0.0
    %v4081 = vmax.f32 %v4017, 0.0
    %v4082 = vmax.f32 %v4018, 0.0
    %v4083 = vmax.f32 %v4019, 0.0
    %4084 = vst [vmem:[#allocation2] sm:$0xff] %v4020
    %4085 = vst [vmem:[#allocation2 + $0x8] sm:$0xff] %v4021
    %4086 = vst [vmem:[#allocation2 + $0x10] sm:$0xff] %v4022
    %4087 = vst [vmem:[#allocation2 + $0x18] sm:$0xff] %v4023
    %4088 = vst [vmem:[#allocation2 + $0x20] sm:$0xff] %v4024
    %4089 = vst [vmem:[#allocation2 + $0x28] sm:$0xff] %v4025
    %4090 = vst [vmem:[#allocation2 + $0x30] sm:$0xff] %v4026
    %4091 = vst [vmem:[#allocation2 + $0x38] sm:$0xff] %v4027
    %4092 = vst [vmem:[#allocation2 + $0x40] sm:$0xff] %v4028
    %4093 = vst [vmem:[#allocation2 + $0x48] sm:$0xff] %v4029
    %4094 = vst [vmem:[#allocation2 + $0x50] sm:$0xff] %v4030
    %4095 = vst [vmem:[#allocation2 + $0x58] sm:$0xff] %v4031
    %4096 = vst [vmem:[#allocation2 + $0x60] sm:$0xff] %v4032
    %4097 = vst [vmem:[#allocation2 + $0x68] sm:$0xff] %v4033
    %4098 = vst [vmem:[#allocation2 + $0x70] sm:$0xff] %v4034
    %4099 = vst [vmem:[#allocation2 + $0x78] sm:$0xff] %v4035
    %4100 = vst [vmem:[#allocation2 + $0x80] sm:$0xff] %v4036
    %4101 = vst [vmem:[#allocation2 + $0x88] sm:$0xff] %v4037
    %4102 = vst [vmem:[#allocation2 + $0x90] sm:$0xff] %v4038
    %4103 = vst [vmem:[#allocation2 + $0x98] sm:$0xff] %v4039
    %4104 = vst [vmem:[#allocation2 + $0xa0] sm:$0xff] %v4040
    %4105 = vst [vmem:[#allocation2 + $0xa8] sm:$0xff] %v4041
    %4106 = vst [vmem:[#allocation2 + $0xb0] sm:$0xff] %v4042
    %4107 = vst [vmem:[#allocation2 + $0xb8] sm:$0xff] %v4043
    %4108 = vst [vmem:[#allocation2 + $0xc0] sm:$0xff] %v4044
    %4109 = vst [vmem:[#allocation2 + $0xc8] sm:$0xff] %v4045
    %4110 = vst [vmem:[#allocation2 + $0xd0] sm:$0xff] %v4046
    %4111 = vst [vmem:[#allocation2 + $0xd8] sm:$0xff] %v4047
    %4112 = vst [vmem:[#allocation2 + $0xe0] sm:$0xff] %v4048
    %4113 = vst [vmem:[#allocation2 + $0xe8] sm:$0xff] %v4049
    %4114 = vst [vmem:[#allocation2 + $0xf0] sm:$0xff] %v4050
    %4115 = vst [vmem:[#allocation2 + $0xf8] sm:$0xff] %v4051
    %4116 = vst [vmem:[#allocation2 + $0x100] sm:$0xff] %v4052
    %4117 = vst [vmem:[#allocation2 + $0x108] sm:$0xff] %v4053
    %4118 = vst [vmem:[#allocation2 + $0x110] sm:$0xff] %v4054
    %4119 = vst [vmem:[#allocation2 + $0x118] sm:$0xff] %v4055
    %4120 = vst [vmem:[#allocation2 + $0x120] sm:$0xff] %v4056
    %4121 = vst [vmem:[#allocation2 + $0x128] sm:$0xff] %v4057
    %4122 = vst [vmem:[#allocation2 + $0x130] sm:$0xff] %v4058
    %4123 = vst [vmem:[#allocation2 + $0x138] sm:$0xff] %v4059
    %4124 = vst [vmem:[#allocation2 + $0x140] sm:$0xff] %v4060
    %4125 = vst [vmem:[#allocation2 + $0x148] sm:$0xff] %v4061
    %4126 = vst [vmem:[#allocation2 + $0x150] sm:$0xff] %v4062
    %4127 = vst [vmem:[#allocation2 + $0x158] sm:$0xff] %v4063
    %4128 = vst [vmem:[#allocation2 + $0x160] sm:$0xff] %v4064
    %4129 = vst [vmem:[#allocation2 + $0x168] sm:$0xff] %v4065
    %4130 = vst [vmem:[#allocation2 + $0x170] sm:$0xff] %v4066
    %4131 = vst [vmem:[#allocation2 + $0x178] sm:$0xff] %v4067
    %4132 = vst [vmem:[#allocation2 + $0x180] sm:$0xff] %v4068
    %4133 = vst [vmem:[#allocation2 + $0x188] sm:$0xff] %v4069
    %4134 = vst [vmem:[#allocation2 + $0x190] sm:$0xff] %v4070
    %4135 = vst [vmem:[#allocation2 + $0x198] sm:$0xff] %v4071
    %4136 = vst [vmem:[#allocation2 + $0x1a0] sm:$0xff] %v4072
    %4137 = vst [vmem:[#allocation2 + $0x1a8] sm:$0xff] %v4073
    %4138 = vst [vmem:[#allocation2 + $0x1b0] sm:$0xff] %v4074
    %4139 = vst [vmem:[#allocation2 + $0x1b8] sm:$0xff] %v4075
    %4140 = vst [vmem:[#allocation2 + $0x1c0] sm:$0xff] %v4076
    %4141 = vst [vmem:[#allocation2 + $0x1c8] sm:$0xff] %v4077
    %4142 = vst [vmem:[#allocation2 + $0x1d0] sm:$0xff] %v4078
    %4143 = vst [vmem:[#allocation2 + $0x1d8] sm:$0xff] %v4079
    %4144 = vst [vmem:[#allocation2 + $0x1e0] sm:$0xff] %v4080
    %4145 = vst [vmem:[#allocation2 + $0x1e8] sm:$0xff] %v4081
    %4146 = vst [vmem:[#allocation2 + $0x1f0] sm:$0xff] %v4082
    %4147 = vst [vmem:[#allocation2 + $0x1f8] sm:$0xff] %v4083
    // Predicated region
    $region18: #{tpu_custom_call.1} parent=1 // pred_check
      _
    $region19: #{tpu_custom_call.1} parent=1 // pred_check_branch
      %4149 = sbr.rel (0) target = $region21
    $region20: #{tpu_custom_call.1} parent=1 // pred_region
      %s4151 = ssub.s32 8192, 8192
      %4152 = vsyncadd [#allocation3], %s4151
      %s4153 = sshll.u32 [#allocation2], 4
      %s4154 = int_to_ptr.vmem [resolvable:$true] %s4153
      %4159 = dma.vmem_to_hbm [thread:$0]  %s4154, 8192, %s4, [#allocation3], 128, 128, 8
    $region21: #{tpu_custom_call.1} parent=1 // pred_fallthru
      _
    // Predicated region
    $region22: #{tpu_custom_call.1} parent=1 // pred_check
      _
    $region23: #{tpu_custom_call.1} parent=1 // pred_check_branch
      %4161 = sbr.rel (0) target = $region25
    $region24: #{tpu_custom_call.1} parent=1 // pred_region
      %4162 = dma.done [#allocation3], 8192
    $region25: #{tpu_custom_call.1} parent=1 // pred_fallthru
      _
    %4163 = vsyncpa [#allocation3], 1

</llo_original>
